<compile_context>
chip_gen: v7x
topology: tpu7x:2x2x1
jax: 0.10.0
libtpu: 0.0.40
codegen_flags: <defaults>
</compile_context>

<pallas_src>
import functools
import math

import jax
import jax.numpy as jnp
import numpy as np
from jax.experimental import pallas as pl
from jax.experimental.pallas import tpu as pltpu

LN_EPS = 1e-12   # DistilBERT LayerNorm epsilon
QA_PAD = 128     # lane-dense padded width for the 2-column qa head
NEG_BIG = -1e9   # finite mask bias (HF-style), avoids -inf arithmetic


# ----------------------------------------------------------------------------
# shared math helpers (used both inside kernels and by the pure-JAX reference)
# ----------------------------------------------------------------------------
def _layernorm(x, g, b):
    mu = jnp.mean(x, axis=-1, keepdims=True)
    var = jnp.mean(jnp.square(x - mu), axis=-1, keepdims=True)
    return (x - mu) * jax.lax.rsqrt(var + LN_EPS) * g + b


def _gelu(x):
    # TODO(synk): HF DistilBERT uses the exact erf GELU; tanh approximation is
    # used since lax.erf is not guaranteed to lower in Mosaic.
    return jax.nn.gelu(x, approximate=True)


def _mm(a, b):
    """bf16-operand matmul with f32 MXU accumulation."""
    return jnp.dot(a.astype(jnp.bfloat16), b.astype(jnp.bfloat16),
                   preferred_element_type=jnp.float32)


def _mm_t(a, b):
    """a @ b.T (contract last dims), bf16 operands, f32 accumulation."""
    return jax.lax.dot_general(a.astype(jnp.bfloat16), b.astype(jnp.bfloat16),
                               (((1,), (1,)), ((), ())),
                               preferred_element_type=jnp.float32)


# ----------------------------------------------------------------------------
# Pallas kernels
# ----------------------------------------------------------------------------
def encoder_kernel(emb_ref, bias_ref, eg_ref, eb_ref,
                   wqkv_ref, bqkv_ref, wo_ref, bo_ref, g1_ref, be1_ref,
                   w1_ref, b1_ref, w2_ref, b2_ref, g2_ref, be2_ref,
                   qaw_ref, qab_ref,
                   logits_ref,
                   h_ref, qkv_ref, ctx_ref,
                   *, n_heads, n_layers, batch_block, seq_len):
    """Fused DistilBERT encoder.  grid = (batch_blocks, layers).

    A (Bb*S, H) hidden state is carried across the 'arbitrary' layer axis in
    VMEM scratch; layer weights (stacked along L) are double-buffered by the
    BlockSpec pipeline, and every weight fetch is amortised over the Bb
    sequences of the current batch block.
    """
    l = pl.program_id(1)
    Bb, S = batch_block, seq_len
    H = h_ref.shape[-1]
    dh = H // n_heads

    # l == 0: embedding LayerNorm seeds the carried hidden state.
    @pl.when(l == 0)
    def _():
        h_ref[...] = _layernorm(emb_ref[...].astype(jnp.float32),
                                eg_ref[...], eb_ref[...])

    x = h_ref[...]                                     # (Bb*S, H) f32
    xb = x.astype(jnp.bfloat16)

    # ---- fused QKV projection: one (Bb*S,H)@(H,3H) MXU pass; 1/sqrt(dh) is
    #      folded into the Q third of wqkv/bqkv at parameter-prep time --------
    qkv_ref[...] = (_mm(xb, wqkv_ref[0]) + bqkv_ref[0]).astype(jnp.bfloat16)

    # ---- attention: per-sequence, per-head softmax(QK^T)V.  Static unroll
    #      keeps all lane offsets static; each head's context is stored
    #      straight into the lane-contiguous ctx scratch, so live ranges stay
    #      per-iteration (no growing SSA accumulation chain).
    for b in range(Bb):
        r0, r1 = b * S, (b + 1) * S
        bias = bias_ref[b]                             # (1, S) f32
        for h in range(n_heads):
            c0, c1 = h * dh, (h + 1) * dh
            q = qkv_ref[r0:r1, c0:c1]                  # (S, dh) bf16 (scaled)
            k = qkv_ref[r0:r1, H + c0:H + c1]          # (S, dh) bf16
            v = qkv_ref[r0:r1, 2 * H + c0:2 * H + c1]  # (S, dh) bf16
            s = _mm_t(q, k) + bias                     # (S, S) f32
            s = s - jnp.max(s, axis=-1, keepdims=True)
            p = jnp.exp(s)
            p = p * pl.reciprocal(jnp.sum(p, axis=-1, keepdims=True),
                                  approx=True)
            ctx_ref[r0:r1, c0:c1] = _mm(p, v)          # (S, dh) f32

    # ---- single fused output projection over all heads ----------------------
    attn = _mm(ctx_ref[...], wo_ref[0]) + bo_ref[0]    # (Bb*S, H) f32
    sa = _layernorm(attn + x, g1_ref[0], be1_ref[0])

    # ---- FFN -----------------------------------------------------------------
    # TODO(synk): tile over the intermediate dim I for very large I to reduce
    # peak VMEM (not needed at DistilBERT-base sizes with bf16 weights).
    h1 = _gelu(_mm(sa, w1_ref[0]) + b1_ref[0])         # (Bb*S, I)
    ffn = _mm(h1, w2_ref[0]) + b2_ref[0]               # (Bb*S, H)
    out = _layernorm(ffn + sa, g2_ref[0], be2_ref[0])
    h_ref[...] = out

    # l == last: fused qa_outputs head, lane-dense padded (Bb*S, 128) output.
    @pl.when(l == n_layers - 1)
    def _():
        logits_ref[...] = (_mm(out, qaw_ref[...])
                           + qab_ref[...]).astype(logits_ref.dtype)


def dce_pair_kernel(s_lg_ref, e_lg_ref, s_pos_ref, e_pos_ref, o_ref):
    """0.5 * (distant_CE(start) + distant_CE(end)) -> (1, 1) scalar."""
    def dce(lg, pos):
        m = jnp.max(lg, axis=-1, keepdims=True)
        lse = jnp.log(jnp.sum(jnp.exp(lg - m), axis=-1, keepdims=True)) + m
        logp = lg - lse
        num = jnp.sum(pos * logp, axis=-1, keepdims=True)
        den = jnp.sum(pos, axis=-1, keepdims=True)
        # TODO(synk): like the PyTorch module, a row with zero positive
        # positions divides by zero (NaN); left unguarded to match semantics.
        return -jnp.mean(num / den)

    loss = 0.5 * (dce(s_lg_ref[...].astype(jnp.float32),
                      s_pos_ref[...].astype(jnp.float32))
                  + dce(e_lg_ref[...].astype(jnp.float32),
                        e_pos_ref[...].astype(jnp.float32)))
    o_ref[...] = jnp.broadcast_to(loss, (1, 1)).astype(o_ref.dtype)


# ----------------------------------------------------------------------------
# VMEM budgeting / batch-block selection
# ----------------------------------------------------------------------------
def _vmem_cap_bytes():
    """Per-generation VMEM budget with headroom for compiler scratch."""
    try:
        phys = pltpu.get_tpu_info().vmem_capacity_bytes
    except Exception:
        phys = 64 << 20
    # ~56 MiB on 64-MiB parts (v7x), up to ~100 MiB on 128-MiB parts (v5e/v6e)
    return int(min(100 << 20, max(32 << 20, phys - (8 << 20))))


def _vmem_estimate(Bb, S, H, I):
    """Rough VMEM bytes for a batch block of Bb sequences (double-buffered
    weight/IO blocks + carried scratch + in-kernel intermediates)."""
    act = Bb * S
    per_layer_w = (H * 3 * H * 2 + 3 * H * 4      # wqkv + bqkv
                   + H * H * 2 + H * 4            # wo + bo
                   + 4 * H * 4                    # two LayerNorms
                   + H * I * 2 + I * 4            # w1 + b1
                   + I * H * 2 + H * 4)           # w2 + b2
    const_w = 2 * H * 4 + H * QA_PAD * 2 + QA_PAD * 4
    io = act * H * 4 + Bb * S * 4 + act * QA_PAD * 4
    scratch = act * H * 4 + act * 3 * H * 2 + act * H * 4
    interm = act * I * 4 + 4 * act * H * 4 + act * 3 * H * 4 + 2 * S * S * 4
    return 2 * (per_layer_w + const_w + io) + scratch + interm + (2 << 20)


def _choose_batch_block(B, S, H, I, cap):
    divs = [d for d in range(1, B + 1) if B % d == 0]
    fits = [d for d in divs if _vmem_estimate(d, S, H, I) <= cap]
    if not fits:
        return 1
    best = max(fits)
    # Prefer >= 2 batch blocks when B allows it (keeps both v7x TensorCores
    # busy) while still amortising weights over B//2 sequences.
    if B >= 4 and best == B:
        smaller = [d for d in fits if d <= B // 2]
        if smaller:
            best = max(smaller)
    return best


# ----------------------------------------------------------------------------
# Pallas wrappers
# ----------------------------------------------------------------------------
def encoder_forward(emb, bias, kp, cfg):
    B, S, H = emb.shape
    I = cfg["intermediate"]
    nh = cfg["n_heads"]
    L = cfg["n_layers"]

    cap = _vmem_cap_bytes()
    Bb = _choose_batch_block(B, S, H, I, cap)
    nb = B // Bb
    vmem_limit = int(min(cap, max(16 << 20, _vmem_estimate(Bb, S, H, I))))

    emb_flat = emb.reshape(B * S, H)

    def cmap(rank):   # grid-invariant blocks (emb LN, qa head)
        return lambda i, l: (0,) * rank

    def lmap(rank):   # layer-stacked blocks (pipelined along L)
        return lambda i, l: (l,) + (0,) * (rank - 1)

    in_specs = [
        pl.BlockSpec((Bb * S, H), lambda i, l: (i, 0)),       # embeddings
        pl.BlockSpec((Bb, 1, S), lambda i, l: (i, 0, 0)),     # attn mask bias
        pl.BlockSpec((1, H), cmap(2)),                        # emb LN gamma
        pl.BlockSpec((1, H), cmap(2)),                        # emb LN beta
        pl.BlockSpec((1, H, 3 * H), lmap(3)),                 # wqkv (bf16)
        pl.BlockSpec((1, 1, 3 * H), lmap(3)),                 # bqkv
        pl.BlockSpec((1, H, H), lmap(3)),                     # wo (bf16)
        pl.BlockSpec((1, 1, H), lmap(3)),                     # bo
        pl.BlockSpec((1, 1, H), lmap(3)),                     # sa LN gamma
        pl.BlockSpec((1, 1, H), lmap(3)),                     # sa LN beta
        pl.BlockSpec((1, H, I), lmap(3)),                     # ffn w1 (bf16)
        pl.BlockSpec((1, 1, I), lmap(3)),                     # ffn b1
        pl.BlockSpec((1, I, H), lmap(3)),                     # ffn w2 (bf16)
        pl.BlockSpec((1, 1, H), lmap(3)),                     # ffn b2
        pl.BlockSpec((1, 1, H), lmap(3)),                     # out LN gamma
        pl.BlockSpec((1, 1, H), lmap(3)),                     # out LN beta
        pl.BlockSpec((H, QA_PAD), cmap(2)),                   # qa_w (padded)
        pl.BlockSpec((1, QA_PAD), cmap(2)),                   # qa_b (padded)
    ]

    return pl.pallas_call(
        functools.partial(encoder_kernel, n_heads=nh, n_layers=L,
                          batch_block=Bb, seq_len=S),
        out_shape=jax.ShapeDtypeStruct((B * S, QA_PAD), jnp.float32),
        grid=(nb, L),
        in_specs=in_specs,
        out_specs=pl.BlockSpec((Bb * S, QA_PAD), lambda i, l: (i, 0)),
        scratch_shapes=[
            pltpu.VMEM((Bb * S, H), jnp.float32),        # carried hidden state
            pltpu.VMEM((Bb * S, 3 * H), jnp.bfloat16),   # per-layer QKV
            pltpu.VMEM((Bb * S, H), jnp.float32),        # assembled attn ctx
        ],
        compiler_params=pltpu.CompilerParams(
            dimension_semantics=("parallel", "arbitrary"),
            vmem_limit_bytes=vmem_limit),
    )(emb_flat, bias, kp["emb_ln_g"], kp["emb_ln_b"],
      kp["wqkv"], kp["bqkv"], kp["wo"], kp["bo"],
      kp["ln1_g"], kp["ln1_b"],
      kp["w1"], kp["b1"], kp["w2"], kp["b2"], kp["ln2_g"], kp["ln2_b"],
      kp["qa_w"], kp["qa_b"])


def distant_cross_entropy_pair(start_logits, end_logits,
                               start_positions, end_positions):
    return pl.pallas_call(
        dce_pair_kernel,
        out_shape=jax.ShapeDtypeStruct((1, 1), jnp.float32),
    )(start_logits.astype(jnp.float32), end_logits.astype(jnp.float32),
      start_positions.astype(jnp.float32),
      end_positions.astype(jnp.float32))[0, 0]


# ----------------------------------------------------------------------------
# model: params + forward
# ----------------------------------------------------------------------------
def init_params(key, cfg):
    std = cfg["initializer_range"]
    H, I = cfg["hidden"], cfg["intermediate"]

    def nrm(k, shape):
        return (std * jax.random.normal(k, shape)).astype(jnp.float32)

    keys = jax.random.split(key, 2 + 6 * cfg["n_layers"] + 1)
    ki = iter(keys)
    params = {
        "word_emb": nrm(next(ki), (cfg["vocab"], H)),
        "pos_emb": nrm(next(ki), (cfg["max_pos"], H)),
        "emb_ln_g": jnp.ones((H,), jnp.float32),
        "emb_ln_b": jnp.zeros((H,), jnp.float32),
        "layers": [],
    }
    for _ in range(cfg["n_layers"]):
        layer = {
            "wq": nrm(next(ki), (H, H)), "bq": jnp.zeros((1, H), jnp.float32),
            "wk": nrm(next(ki), (H, H)), "bk": jnp.zeros((1, H), jnp.float32),
            "wv": nrm(next(ki), (H, H)), "bv": jnp.zeros((1, H), jnp.float32),
            "wo": nrm(next(ki), (H, H)), "bo": jnp.zeros((1, H), jnp.float32),
            "ln1_g": jnp.ones((1, H), jnp.float32),
            "ln1_b": jnp.zeros((1, H), jnp.float32),
            "w1": nrm(next(ki), (H, I)), "b1": jnp.zeros((1, I), jnp.float32),
            "w2": nrm(next(ki), (I, H)), "b2": jnp.zeros((1, H), jnp.float32),
            "ln2_g": jnp.ones((1, H), jnp.float32),
            "ln2_b": jnp.zeros((1, H), jnp.float32),
        }
        params["layers"].append(layer)
    params["qa_w"] = nrm(next(ki), (H, 2))
    params["qa_b"] = jnp.zeros((1, 2), jnp.float32)
    return params


def prepare_kernel_params(params, cfg):
    """One-time stack/concat/cast of canonical f32 params into kernel layout.

    Call ONCE and reuse across forward() calls (hoisted out of the step)."""
    H = cfg["hidden"]
    nh = cfg["n_heads"]
    dh = H // nh
    scale = 1.0 / math.sqrt(dh)
    layers = params["layers"]

    def stack(name):
        return jnp.stack([lyr[name] for lyr in layers], axis=0)

    # Fused QKV weights; 1/sqrt(dh) folded into the Q third at setup time.
    wqkv = jnp.concatenate([stack("wq") * scale, stack("wk"), stack("wv")],
                           axis=-1)                       # (L, H, 3H)
    bqkv = jnp.concatenate([stack("bq") * scale, stack("bk"), stack("bv")],
                           axis=-1)                       # (L, 1, 3H)

    kp = {
        "emb_ln_g": params["emb_ln_g"].reshape(1, H).astype(jnp.float32),
        "emb_ln_b": params["emb_ln_b"].reshape(1, H).astype(jnp.float32),
        "wqkv": wqkv.astype(jnp.bfloat16),
        "bqkv": bqkv.astype(jnp.float32),
        "wo": stack("wo").astype(jnp.bfloat16),
        "bo": stack("bo").astype(jnp.float32),
        "ln1_g": stack("ln1_g").astype(jnp.float32),
        "ln1_b": stack("ln1_b").astype(jnp.float32),
        "w1": stack("w1").astype(jnp.bfloat16),
        "b1": stack("b1").astype(jnp.float32),
        "w2": stack("w2").astype(jnp.bfloat16),
        "b2": stack("b2").astype(jnp.float32),
        "ln2_g": stack("ln2_g").astype(jnp.float32),
        "ln2_b": stack("ln2_b").astype(jnp.float32),
    }
    qa_w = jnp.zeros((H, QA_PAD), jnp.float32).at[:, :2].set(params["qa_w"])
    qa_b = jnp.zeros((1, QA_PAD), jnp.float32).at[:, :2].set(params["qa_b"])
    kp["qa_w"] = qa_w.astype(jnp.bfloat16)
    kp["qa_b"] = qa_b
    return kp


def forward(params, cfg, input_ids, attention_mask,
            start_positions=None, end_positions=None, kernel_params=None):
    B, S = input_ids.shape
    if kernel_params is None:
        kernel_params = prepare_kernel_params(params, cfg)

    # embedding gather + mask bias are plain-JAX glue; the whole encoder
    # (embedding LN + all layers + qa head) is a single pallas_call.
    emb = (params["word_emb"][input_ids]
           + params["pos_emb"][jnp.arange(S)][None, :, :]).astype(jnp.float32)
    bias = jnp.where(attention_mask.astype(jnp.float32) > 0.5, 0.0, NEG_BIG)
    bias = bias.reshape(B, 1, S).astype(jnp.float32)

    padded_logits = encoder_forward(emb, bias, kernel_params, cfg)  # (B*S,128)
    start_logits = padded_logits[:, 0].reshape(B, S)
    end_logits = padded_logits[:, 1].reshape(B, S)

    if start_positions is not None and end_positions is not None:
        return distant_cross_entropy_pair(start_logits, end_logits,
                                          start_positions, end_positions)
    return start_logits, end_logits


# ----------------------------------------------------------------------------
# pure-JAX reference (same math & bf16 operand rounding, no Pallas)
# ----------------------------------------------------------------------------
def forward_ref(params, cfg, input_ids, attention_mask,
                start_positions=None, end_positions=None):
    B, S = input_ids.shape
    H = cfg["hidden"]
    nh = cfg["n_heads"]
    dh = H // nh
    inv = 1.0 / math.sqrt(dh)

    def mm(a, b):
        return jnp.einsum("...k,kn->...n", a.astype(jnp.bfloat16),
                          b.astype(jnp.bfloat16),
                          preferred_element_type=jnp.float32)

    emb = (params["word_emb"][input_ids]
           + params["pos_emb"][jnp.arange(S)][None, :, :]).astype(jnp.float32)
    x = _layernorm(emb, params["emb_ln_g"], params["emb_ln_b"])
    mask = attention_mask.astype(jnp.float32)
    bias = jnp.where(mask > 0.5, 0.0, NEG_BIG)[:, None, :]

    for p in params["layers"]:
        q = (mm(x, p["wq"]) + p["bq"]) * inv
        k = mm(x, p["wk"]) + p["bk"]
        v = mm(x, p["wv"]) + p["bv"]
        heads = []
        for h in range(nh):
            sl = slice(h * dh, (h + 1) * dh)
            qh, kh, vh = q[..., sl], k[..., sl], v[..., sl]
            sc = jnp.einsum("bqd,bkd->bqk", qh.astype(jnp.bfloat16),
                            kh.astype(jnp.bfloat16),
                            preferred_element_type=jnp.float32) + bias
            sc = sc - jnp.max(sc, axis=-1, keepdims=True)
            pr = jnp.exp(sc)
            pr = pr / jnp.sum(pr, axis=-1, keepdims=True)
            heads.append(jnp.einsum("bqk,bkd->bqd", pr.astype(jnp.bfloat16),
                                    vh.astype(jnp.bfloat16),
                                    preferred_element_type=jnp.float32))
        ctx = jnp.concatenate(heads, axis=-1)
        attn = mm(ctx, p["wo"]) + p["bo"]
        sa = _layernorm(attn + x, p["ln1_g"], p["ln1_b"])
        ffn = mm(_gelu(mm(sa, p["w1"]) + p["b1"]), p["w2"]) + p["b2"]
        x = _layernorm(ffn + sa, p["ln2_g"], p["ln2_b"])

    logits = mm(x, params["qa_w"]) + params["qa_b"]
    start_logits, end_logits = logits[..., 0], logits[..., 1]

    def dce(lg, pos):
        pos = pos.astype(jnp.float32)
        logp = jax.nn.log_softmax(lg, axis=-1)
        return -jnp.mean(jnp.sum(pos * logp, -1) / jnp.sum(pos, -1))

    if start_positions is not None and end_positions is not None:
        return (dce(start_logits, start_positions)
                + dce(end_logits, end_positions)) / 2.0
    return start_logits, end_logits


# ----------------------------------------------------------------------------
if __name__ == "__main__":
    cfg = dict(vocab=128, max_pos=64, hidden=64, n_heads=4, n_layers=2,
               intermediate=128, initializer_range=0.02)
    B, S = 2, 16

    key = jax.random.PRNGKey(0)
    kpk, kid = jax.random.split(key)
    params = init_params(kpk, cfg)
    kernel_params = prepare_kernel_params(params, cfg)   # prepared once, reused

    input_ids = jax.random.randint(kid, (B, S), 0, cfg["vocab"], dtype=jnp.int32)
    attention_mask = jnp.ones((B, S), jnp.int32).at[1, S - 5:].set(0)
    start_positions = jnp.zeros((B, S), jnp.int32).at[0, 2].set(1).at[1, 1].set(1)
    end_positions = jnp.zeros((B, S), jnp.int32).at[0, 5].set(1).at[1, 3].set(1)

    # inference branch: (start_logits, end_logits)
    start_logits, end_logits = forward(params, cfg, input_ids, attention_mask,
                                       kernel_params=kernel_params)
    jax.block_until_ready((start_logits, end_logits))

    # training branch: scalar distant-CE loss
    total_loss = forward(params, cfg, input_ids, attention_mask,
                         start_positions, end_positions,
                         kernel_params=kernel_params)
    jax.block_until_ready(total_loss)

    # sanity check vs pure-JAX reference (same bf16 operand rounding)
    ref_s, ref_e = forward_ref(params, cfg, input_ids, attention_mask)
    ref_loss = forward_ref(params, cfg, input_ids, attention_mask,
                           start_positions, end_positions)
    np.testing.assert_allclose(np.asarray(start_logits), np.asarray(ref_s),
                               rtol=1e-2, atol=1e-2)
    np.testing.assert_allclose(np.asarray(end_logits), np.asarray(ref_e),
                               rtol=1e-2, atol=1e-2)
    np.testing.assert_allclose(float(total_loss), float(ref_loss),
                               rtol=1e-2, atol=1e-2)

    print("KERNEL_OK")
</pallas_src>

<mosaic_0001>
module attributes {stable_mosaic.version = 11 : i64} {
  func.func @encoder_kernel(%arg0: i32, %arg1: i32, %arg2: memref<32x64xf32, #tpu.memory_space<vmem>>, %arg3: memref<2x1x16xf32, #tpu.memory_space<vmem>>, %arg4: memref<1x64xf32, #tpu.memory_space<vmem>>, %arg5: memref<1x64xf32, #tpu.memory_space<vmem>>, %arg6: memref<1x64x192xbf16, #tpu.memory_space<vmem>>, %arg7: memref<1x1x192xf32, #tpu.memory_space<vmem>>, %arg8: memref<1x64x64xbf16, #tpu.memory_space<vmem>>, %arg9: memref<1x1x64xf32, #tpu.memory_space<vmem>>, %arg10: memref<1x1x64xf32, #tpu.memory_space<vmem>>, %arg11: memref<1x1x64xf32, #tpu.memory_space<vmem>>, %arg12: memref<1x64x128xbf16, #tpu.memory_space<vmem>>, %arg13: memref<1x1x128xf32, #tpu.memory_space<vmem>>, %arg14: memref<1x128x64xbf16, #tpu.memory_space<vmem>>, %arg15: memref<1x1x64xf32, #tpu.memory_space<vmem>>, %arg16: memref<1x1x64xf32, #tpu.memory_space<vmem>>, %arg17: memref<1x1x64xf32, #tpu.memory_space<vmem>>, %arg18: memref<64x128xbf16, #tpu.memory_space<vmem>>, %arg19: memref<1x128xf32, #tpu.memory_space<vmem>>, %arg20: memref<32x128xf32, #tpu.memory_space<vmem>>, %arg21: memref<32x64xf32, #tpu.memory_space<vmem>>, %arg22: memref<32x192xbf16, #tpu.memory_space<vmem>>, %arg23: memref<32x64xf32, #tpu.memory_space<vmem>>) attributes {dimension_semantics = [#tpu.dimension_semantics<parallel>, #tpu.dimension_semantics<arbitrary>], iteration_bounds = array<i64: 1, 2>, scalar_prefetch = 0 : i64, scratch_operands = 3 : i64, tpu.core_type = #tpu.core_type<tc>, window_params = [{transform_indices = @transform_0, window_bounds = array<i64: 32, 64>}, {transform_indices = @transform_1, window_bounds = array<i64: 2, 1, 16>}, {pipeline_mode = #tpu.pipeline_mode<synchronous>, transform_indices = @transform_2, window_bounds = array<i64: 1, 64>}, {pipeline_mode = #tpu.pipeline_mode<synchronous>, transform_indices = @transform_3, window_bounds = array<i64: 1, 64>}, {transform_indices = @transform_4, window_bounds = array<i64: 1, 64, 192>}, {transform_indices = @transform_5, window_bounds = array<i64: 1, 1, 192>}, {transform_indices = @transform_6, window_bounds = array<i64: 1, 64, 64>}, {transform_indices = @transform_7, window_bounds = array<i64: 1, 1, 64>}, {transform_indices = @transform_8, window_bounds = array<i64: 1, 1, 64>}, {transform_indices = @transform_9, window_bounds = array<i64: 1, 1, 64>}, {transform_indices = @transform_10, window_bounds = array<i64: 1, 64, 128>}, {transform_indices = @transform_11, window_bounds = array<i64: 1, 1, 128>}, {transform_indices = @transform_12, window_bounds = array<i64: 1, 128, 64>}, {transform_indices = @transform_13, window_bounds = array<i64: 1, 1, 64>}, {transform_indices = @transform_14, window_bounds = array<i64: 1, 1, 64>}, {transform_indices = @transform_15, window_bounds = array<i64: 1, 1, 64>}, {pipeline_mode = #tpu.pipeline_mode<synchronous>, transform_indices = @transform_16, window_bounds = array<i64: 64, 128>}, {pipeline_mode = #tpu.pipeline_mode<synchronous>, transform_indices = @transform_17, window_bounds = array<i64: 1, 128>}, {transform_indices = @transform_18, window_bounds = array<i64: 32, 128>}]} {
    %c0_i32 = arith.constant 0 : i32
    %0 = arith.cmpi eq, %arg1, %c0_i32 : i32
    %1 = arith.extui %0 : i1 to i32
    %c0_i32_0 = arith.constant 0 : i32
    %2 = arith.cmpi ne, %1, %c0_i32_0 : i32
    scf.if %2 {
      %c0_152 = arith.constant 0 : index
      %c0_153 = arith.constant 0 : index
      %266 = vector.load %arg2[%c0_152, %c0_153] : memref<32x64xf32, #tpu.memory_space<vmem>>, vector<32x64xf32>
      %c0_154 = arith.constant 0 : index
      %c0_155 = arith.constant 0 : index
      %267 = vector.load %arg4[%c0_154, %c0_155] : memref<1x64xf32, #tpu.memory_space<vmem>>, vector<1x64xf32>
      %c0_156 = arith.constant 0 : index
      %c0_157 = arith.constant 0 : index
      %268 = vector.load %arg5[%c0_156, %c0_157] : memref<1x64xf32, #tpu.memory_space<vmem>>, vector<1x64xf32>
      %cst_158 = arith.constant dense<0.000000e+00> : vector<32xf32>
      %269 = vector.multi_reduction <add>, %266, %cst_158 [1] : vector<32x64xf32> to vector<32xf32>
      %270 = vector.shape_cast %269 : vector<32xf32> to vector<32x1xf32>
      %cst_159 = arith.constant 6.400000e+01 : f32
      %271 = vector.broadcast %cst_159 : f32 to vector<32x1xf32>
      %272 = arith.divf %270, %271 : vector<32x1xf32>
      %273 = vector.broadcast %272 : vector<32x1xf32> to vector<32x64xf32>
      %274 = arith.subf %266, %273 : vector<32x64xf32>
      %275 = arith.mulf %274, %274 : vector<32x64xf32>
      %cst_160 = arith.constant dense<0.000000e+00> : vector<32xf32>
      %276 = vector.multi_reduction <add>, %275, %cst_160 [1] : vector<32x64xf32> to vector<32xf32>
      %277 = vector.shape_cast %276 : vector<32xf32> to vector<32x1xf32>
      %cst_161 = arith.constant 6.400000e+01 : f32
      %278 = vector.broadcast %cst_161 : f32 to vector<32x1xf32>
      %279 = arith.divf %277, %278 : vector<32x1xf32>
      %280 = vector.broadcast %272 : vector<32x1xf32> to vector<32x64xf32>
      %281 = arith.subf %266, %280 : vector<32x64xf32>
      %cst_162 = arith.constant 9.99999996E-13 : f32
      %282 = vector.broadcast %cst_162 : f32 to vector<32x1xf32>
      %283 = arith.addf %279, %282 : vector<32x1xf32>
      %284 = math.rsqrt %283 : vector<32x1xf32>
      %285 = vector.broadcast %284 : vector<32x1xf32> to vector<32x64xf32>
      %286 = arith.mulf %281, %285 : vector<32x64xf32>
      %287 = vector.broadcast %267 : vector<1x64xf32> to vector<32x64xf32>
      %288 = arith.mulf %286, %287 : vector<32x64xf32>
      %289 = vector.broadcast %268 : vector<1x64xf32> to vector<32x64xf32>
      %290 = arith.addf %288, %289 : vector<32x64xf32>
      %c0_163 = arith.constant 0 : index
      %c0_164 = arith.constant 0 : index
      %291 = vector.load %arg21[%c0_163, %c0_164] : memref<32x64xf32, #tpu.memory_space<vmem>>, vector<32x64xf32>
      tpu.vector_store %arg21[%c0_163, %c0_164], %290 {strides = array<i32>} : memref<32x64xf32, #tpu.memory_space<vmem>>, vector<32x64xf32>,
    } else {
    }
    %c0 = arith.constant 0 : index
    %c0_1 = arith.constant 0 : index
    %3 = vector.load %arg21[%c0, %c0_1] : memref<32x64xf32, #tpu.memory_space<vmem>>, vector<32x64xf32>
    %4 = arith.truncf %3 : vector<32x64xf32> to vector<32x64xbf16>
    %c0_2 = arith.constant 0 : index
    %c0_3 = arith.constant 0 : index
    %c0_4 = arith.constant 0 : index
    %5 = vector.load %arg6[%c0_2, %c0_3, %c0_4] : memref<1x64x192xbf16, #tpu.memory_space<vmem>>, vector<1x64x192xbf16>
    %6 = vector.shape_cast %5 : vector<1x64x192xbf16> to vector<64x192xbf16>
    %cst = arith.constant dense<0.000000e+00> : vector<32x192xf32>
    %7 = tpu.matmul %4, %6, %cst {dimension_numbers = #tpu.dot_dimension_numbers<[1], [0], [0], [1], [0, 0, 1, 1], [], []>} : vector<32x64xbf16>, vector<64x192xbf16>, vector<32x192xf32> -> vector<32x192xf32>
    %c0_5 = arith.constant 0 : index
    %c0_6 = arith.constant 0 : index
    %c0_7 = arith.constant 0 : index
    %8 = vector.load %arg7[%c0_5, %c0_6, %c0_7] : memref<1x1x192xf32, #tpu.memory_space<vmem>>, vector<1x1x192xf32>
    %9 = vector.shape_cast %8 : vector<1x1x192xf32> to vector<1x192xf32>
    %10 = vector.broadcast %9 : vector<1x192xf32> to vector<32x192xf32>
    %11 = arith.addf %7, %10 : vector<32x192xf32>
    %12 = arith.truncf %11 : vector<32x192xf32> to vector<32x192xbf16>
    %c0_8 = arith.constant 0 : index
    %c0_9 = arith.constant 0 : index
    %13 = vector.load %arg22[%c0_8, %c0_9] : memref<32x192xbf16, #tpu.memory_space<vmem>>, vector<32x192xbf16>
    tpu.vector_store %arg22[%c0_8, %c0_9], %12 {strides = array<i32>} : memref<32x192xbf16, #tpu.memory_space<vmem>>, vector<32x192xbf16>,
    %c0_10 = arith.constant 0 : index
    %c0_11 = arith.constant 0 : index
    %c0_12 = arith.constant 0 : index
    %14 = vector.load %arg3[%c0_10, %c0_11, %c0_12] : memref<2x1x16xf32, #tpu.memory_space<vmem>>, vector<1x1x16xf32>
    %15 = vector.shape_cast %14 : vector<1x1x16xf32> to vector<1x16xf32>
    %c0_13 = arith.constant 0 : index
    %c0_14 = arith.constant 0 : index
    %16 = vector.load %arg22[%c0_13, %c0_14] : memref<32x192xbf16, #tpu.memory_space<vmem>>, vector<16x16xbf16>
    %c0_15 = arith.constant 0 : index
    %c64 = arith.constant 64 : index
    %17 = vector.load %arg22[%c0_15, %c64] : memref<32x192xbf16, #tpu.memory_space<vmem>>, vector<16x16xbf16>
    %c0_16 = arith.constant 0 : index
    %c128 = arith.constant 128 : index
    %18 = vector.load %arg22[%c0_16, %c128] : memref<32x192xbf16, #tpu.memory_space<vmem>>, vector<16x16xbf16>
    %cst_17 = arith.constant dense<0.000000e+00> : vector<16x16xf32>
    %19 = tpu.matmul %16, %17, %cst_17 {dimension_numbers = #tpu.dot_dimension_numbers<[1], [1], [0], [0], [0, 0, 1, 0], [], []>} : vector<16x16xbf16>, vector<16x16xbf16>, vector<16x16xf32> -> vector<16x16xf32>
    %20 = vector.broadcast %15 : vector<1x16xf32> to vector<16x16xf32>
    %21 = arith.addf %19, %20 : vector<16x16xf32>
    %cst_18 = arith.constant dense<0xFF800000> : vector<16xf32>
    %22 = vector.multi_reduction <maximumf>, %21, %cst_18 [1] : vector<16x16xf32> to vector<16xf32>
    %23 = vector.shape_cast %22 : vector<16xf32> to vector<16x1xf32>
    %24 = vector.broadcast %23 : vector<16x1xf32> to vector<16x16xf32>
    %25 = arith.subf %21, %24 : vector<16x16xf32>
    %26 = math.exp %25 : vector<16x16xf32>
    %cst_19 = arith.constant dense<0.000000e+00> : vector<16xf32>
    %27 = vector.multi_reduction <add>, %26, %cst_19 [1] : vector<16x16xf32> to vector<16xf32>
    %28 = vector.shape_cast %27 : vector<16xf32> to vector<16x1xf32>
    %29 = tpu.reciprocal %28 {approx = true} : vector<16x1xf32> -> vector<16x1xf32>
    %30 = vector.broadcast %29 : vector<16x1xf32> to vector<16x16xf32>
    %31 = arith.mulf %26, %30 : vector<16x16xf32>
    %32 = arith.truncf %31 : vector<16x16xf32> to vector<16x16xbf16>
    %cst_20 = arith.constant dense<0.000000e+00> : vector<16x16xf32>
    %33 = tpu.matmul %32, %18, %cst_20 {dimension_numbers = #tpu.dot_dimension_numbers<[1], [0], [0], [1], [0, 0, 1, 1], [], []>} : vector<16x16xbf16>, vector<16x16xbf16>, vector<16x16xf32> -> vector<16x16xf32>
    %c0_21 = arith.constant 0 : index
    %c0_22 = arith.constant 0 : index
    %34 = vector.load %arg23[%c0_21, %c0_22] : memref<32x64xf32, #tpu.memory_space<vmem>>, vector<16x16xf32>
    tpu.vector_store %arg23[%c0_21, %c0_22], %33 {strides = array<i32>} : memref<32x64xf32, #tpu.memory_space<vmem>>, vector<16x16xf32>,
    %c0_23 = arith.constant 0 : index
    %c16 = arith.constant 16 : index
    %35 = vector.load %arg22[%c0_23, %c16] : memref<32x192xbf16, #tpu.memory_space<vmem>>, vector<16x16xbf16>
    %c0_24 = arith.constant 0 : index
    %c80 = arith.constant 80 : index
    %36 = vector.load %arg22[%c0_24, %c80] : memref<32x192xbf16, #tpu.memory_space<vmem>>, vector<16x16xbf16>
    %c0_25 = arith.constant 0 : index
    %c144 = arith.constant 144 : index
    %37 = vector.load %arg22[%c0_25, %c144] : memref<32x192xbf16, #tpu.memory_space<vmem>>, vector<16x16xbf16>
    %cst_26 = arith.constant dense<0.000000e+00> : vector<16x16xf32>
    %38 = tpu.matmul %35, %36, %cst_26 {dimension_numbers = #tpu.dot_dimension_numbers<[1], [1], [0], [0], [0, 0, 1, 0], [], []>} : vector<16x16xbf16>, vector<16x16xbf16>, vector<16x16xf32> -> vector<16x16xf32>
    %39 = vector.broadcast %15 : vector<1x16xf32> to vector<16x16xf32>
    %40 = arith.addf %38, %39 : vector<16x16xf32>
    %cst_27 = arith.constant dense<0xFF800000> : vector<16xf32>
    %41 = vector.multi_reduction <maximumf>, %40, %cst_27 [1] : vector<16x16xf32> to vector<16xf32>
    %42 = vector.shape_cast %41 : vector<16xf32> to vector<16x1xf32>
    %43 = vector.broadcast %42 : vector<16x1xf32> to vector<16x16xf32>
    %44 = arith.subf %40, %43 : vector<16x16xf32>
    %45 = math.exp %44 : vector<16x16xf32>
    %cst_28 = arith.constant dense<0.000000e+00> : vector<16xf32>
    %46 = vector.multi_reduction <add>, %45, %cst_28 [1] : vector<16x16xf32> to vector<16xf32>
    %47 = vector.shape_cast %46 : vector<16xf32> to vector<16x1xf32>
    %48 = tpu.reciprocal %47 {approx = true} : vector<16x1xf32> -> vector<16x1xf32>
    %49 = vector.broadcast %48 : vector<16x1xf32> to vector<16x16xf32>
    %50 = arith.mulf %45, %49 : vector<16x16xf32>
    %51 = arith.truncf %50 : vector<16x16xf32> to vector<16x16xbf16>
    %cst_29 = arith.constant dense<0.000000e+00> : vector<16x16xf32>
    %52 = tpu.matmul %51, %37, %cst_29 {dimension_numbers = #tpu.dot_dimension_numbers<[1], [0], [0], [1], [0, 0, 1, 1], [], []>} : vector<16x16xbf16>, vector<16x16xbf16>, vector<16x16xf32> -> vector<16x16xf32>
    %c0_30 = arith.constant 0 : index
    %c16_31 = arith.constant 16 : index
    %53 = vector.load %arg23[%c0_30, %c16_31] : memref<32x64xf32, #tpu.memory_space<vmem>>, vector<16x16xf32>
    tpu.vector_store %arg23[%c0_30, %c16_31], %52 {strides = array<i32>} : memref<32x64xf32, #tpu.memory_space<vmem>>, vector<16x16xf32>,
    %c0_32 = arith.constant 0 : index
    %c32 = arith.constant 32 : index
    %54 = vector.load %arg22[%c0_32, %c32] : memref<32x192xbf16, #tpu.memory_space<vmem>>, vector<16x16xbf16>
    %c0_33 = arith.constant 0 : index
    %c96 = arith.constant 96 : index
    %55 = vector.load %arg22[%c0_33, %c96] : memref<32x192xbf16, #tpu.memory_space<vmem>>, vector<16x16xbf16>
    %c0_34 = arith.constant 0 : index
    %c160 = arith.constant 160 : index
    %56 = vector.load %arg22[%c0_34, %c160] : memref<32x192xbf16, #tpu.memory_space<vmem>>, vector<16x16xbf16>
    %cst_35 = arith.constant dense<0.000000e+00> : vector<16x16xf32>
    %57 = tpu.matmul %54, %55, %cst_35 {dimension_numbers = #tpu.dot_dimension_numbers<[1], [1], [0], [0], [0, 0, 1, 0], [], []>} : vector<16x16xbf16>, vector<16x16xbf16>, vector<16x16xf32> -> vector<16x16xf32>
    %58 = vector.broadcast %15 : vector<1x16xf32> to vector<16x16xf32>
    %59 = arith.addf %57, %58 : vector<16x16xf32>
    %cst_36 = arith.constant dense<0xFF800000> : vector<16xf32>
    %60 = vector.multi_reduction <maximumf>, %59, %cst_36 [1] : vector<16x16xf32> to vector<16xf32>
    %61 = vector.shape_cast %60 : vector<16xf32> to vector<16x1xf32>
    %62 = vector.broadcast %61 : vector<16x1xf32> to vector<16x16xf32>
    %63 = arith.subf %59, %62 : vector<16x16xf32>
    %64 = math.exp %63 : vector<16x16xf32>
    %cst_37 = arith.constant dense<0.000000e+00> : vector<16xf32>
    %65 = vector.multi_reduction <add>, %64, %cst_37 [1] : vector<16x16xf32> to vector<16xf32>
    %66 = vector.shape_cast %65 : vector<16xf32> to vector<16x1xf32>
    %67 = tpu.reciprocal %66 {approx = true} : vector<16x1xf32> -> vector<16x1xf32>
    %68 = vector.broadcast %67 : vector<16x1xf32> to vector<16x16xf32>
    %69 = arith.mulf %64, %68 : vector<16x16xf32>
    %70 = arith.truncf %69 : vector<16x16xf32> to vector<16x16xbf16>
    %cst_38 = arith.constant dense<0.000000e+00> : vector<16x16xf32>
    %71 = tpu.matmul %70, %56, %cst_38 {dimension_numbers = #tpu.dot_dimension_numbers<[1], [0], [0], [1], [0, 0, 1, 1], [], []>} : vector<16x16xbf16>, vector<16x16xbf16>, vector<16x16xf32> -> vector<16x16xf32>
    %c0_39 = arith.constant 0 : index
    %c32_40 = arith.constant 32 : index
    %72 = vector.load %arg23[%c0_39, %c32_40] : memref<32x64xf32, #tpu.memory_space<vmem>>, vector<16x16xf32>
    tpu.vector_store %arg23[%c0_39, %c32_40], %71 {strides = array<i32>} : memref<32x64xf32, #tpu.memory_space<vmem>>, vector<16x16xf32>,
    %c0_41 = arith.constant 0 : index
    %c48 = arith.constant 48 : index
    %73 = vector.load %arg22[%c0_41, %c48] : memref<32x192xbf16, #tpu.memory_space<vmem>>, vector<16x16xbf16>
    %c0_42 = arith.constant 0 : index
    %c112 = arith.constant 112 : index
    %74 = vector.load %arg22[%c0_42, %c112] : memref<32x192xbf16, #tpu.memory_space<vmem>>, vector<16x16xbf16>
    %c0_43 = arith.constant 0 : index
    %c176 = arith.constant 176 : index
    %75 = vector.load %arg22[%c0_43, %c176] : memref<32x192xbf16, #tpu.memory_space<vmem>>, vector<16x16xbf16>
    %cst_44 = arith.constant dense<0.000000e+00> : vector<16x16xf32>
    %76 = tpu.matmul %73, %74, %cst_44 {dimension_numbers = #tpu.dot_dimension_numbers<[1], [1], [0], [0], [0, 0, 1, 0], [], []>} : vector<16x16xbf16>, vector<16x16xbf16>, vector<16x16xf32> -> vector<16x16xf32>
    %77 = vector.broadcast %15 : vector<1x16xf32> to vector<16x16xf32>
    %78 = arith.addf %76, %77 : vector<16x16xf32>
    %cst_45 = arith.constant dense<0xFF800000> : vector<16xf32>
    %79 = vector.multi_reduction <maximumf>, %78, %cst_45 [1] : vector<16x16xf32> to vector<16xf32>
    %80 = vector.shape_cast %79 : vector<16xf32> to vector<16x1xf32>
    %81 = vector.broadcast %80 : vector<16x1xf32> to vector<16x16xf32>
    %82 = arith.subf %78, %81 : vector<16x16xf32>
    %83 = math.exp %82 : vector<16x16xf32>
    %cst_46 = arith.constant dense<0.000000e+00> : vector<16xf32>
    %84 = vector.multi_reduction <add>, %83, %cst_46 [1] : vector<16x16xf32> to vector<16xf32>
    %85 = vector.shape_cast %84 : vector<16xf32> to vector<16x1xf32>
    %86 = tpu.reciprocal %85 {approx = true} : vector<16x1xf32> -> vector<16x1xf32>
    %87 = vector.broadcast %86 : vector<16x1xf32> to vector<16x16xf32>
    %88 = arith.mulf %83, %87 : vector<16x16xf32>
    %89 = arith.truncf %88 : vector<16x16xf32> to vector<16x16xbf16>
    %cst_47 = arith.constant dense<0.000000e+00> : vector<16x16xf32>
    %90 = tpu.matmul %89, %75, %cst_47 {dimension_numbers = #tpu.dot_dimension_numbers<[1], [0], [0], [1], [0, 0, 1, 1], [], []>} : vector<16x16xbf16>, vector<16x16xbf16>, vector<16x16xf32> -> vector<16x16xf32>
    %c0_48 = arith.constant 0 : index
    %c48_49 = arith.constant 48 : index
    %91 = vector.load %arg23[%c0_48, %c48_49] : memref<32x64xf32, #tpu.memory_space<vmem>>, vector<16x16xf32>
    tpu.vector_store %arg23[%c0_48, %c48_49], %90 {strides = array<i32>} : memref<32x64xf32, #tpu.memory_space<vmem>>, vector<16x16xf32>,
    %c1 = arith.constant 1 : index
    %c0_50 = arith.constant 0 : index
    %c0_51 = arith.constant 0 : index
    %92 = vector.load %arg3[%c1, %c0_50, %c0_51] : memref<2x1x16xf32, #tpu.memory_space<vmem>>, vector<1x1x16xf32>
    %93 = vector.shape_cast %92 : vector<1x1x16xf32> to vector<1x16xf32>
    %c16_52 = arith.constant 16 : index
    %c0_53 = arith.constant 0 : index
    %94 = vector.load %arg22[%c16_52, %c0_53] : memref<32x192xbf16, #tpu.memory_space<vmem>>, vector<16x16xbf16>
    %c16_54 = arith.constant 16 : index
    %c64_55 = arith.constant 64 : index
    %95 = vector.load %arg22[%c16_54, %c64_55] : memref<32x192xbf16, #tpu.memory_space<vmem>>, vector<16x16xbf16>
    %c16_56 = arith.constant 16 : index
    %c128_57 = arith.constant 128 : index
    %96 = vector.load %arg22[%c16_56, %c128_57] : memref<32x192xbf16, #tpu.memory_space<vmem>>, vector<16x16xbf16>
    %cst_58 = arith.constant dense<0.000000e+00> : vector<16x16xf32>
    %97 = tpu.matmul %94, %95, %cst_58 {dimension_numbers = #tpu.dot_dimension_numbers<[1], [1], [0], [0], [0, 0, 1, 0], [], []>} : vector<16x16xbf16>, vector<16x16xbf16>, vector<16x16xf32> -> vector<16x16xf32>
    %98 = vector.broadcast %93 : vector<1x16xf32> to vector<16x16xf32>
    %99 = arith.addf %97, %98 : vector<16x16xf32>
    %cst_59 = arith.constant dense<0xFF800000> : vector<16xf32>
    %100 = vector.multi_reduction <maximumf>, %99, %cst_59 [1] : vector<16x16xf32> to vector<16xf32>
    %101 = vector.shape_cast %100 : vector<16xf32> to vector<16x1xf32>
    %102 = vector.broadcast %101 : vector<16x1xf32> to vector<16x16xf32>
    %103 = arith.subf %99, %102 : vector<16x16xf32>
    %104 = math.exp %103 : vector<16x16xf32>
    %cst_60 = arith.constant dense<0.000000e+00> : vector<16xf32>
    %105 = vector.multi_reduction <add>, %104, %cst_60 [1] : vector<16x16xf32> to vector<16xf32>
    %106 = vector.shape_cast %105 : vector<16xf32> to vector<16x1xf32>
    %107 = tpu.reciprocal %106 {approx = true} : vector<16x1xf32> -> vector<16x1xf32>
    %108 = vector.broadcast %107 : vector<16x1xf32> to vector<16x16xf32>
    %109 = arith.mulf %104, %108 : vector<16x16xf32>
    %110 = arith.truncf %109 : vector<16x16xf32> to vector<16x16xbf16>
    %cst_61 = arith.constant dense<0.000000e+00> : vector<16x16xf32>
    %111 = tpu.matmul %110, %96, %cst_61 {dimension_numbers = #tpu.dot_dimension_numbers<[1], [0], [0], [1], [0, 0, 1, 1], [], []>} : vector<16x16xbf16>, vector<16x16xbf16>, vector<16x16xf32> -> vector<16x16xf32>
    %c16_62 = arith.constant 16 : index
    %c0_63 = arith.constant 0 : index
    %112 = vector.load %arg23[%c16_62, %c0_63] : memref<32x64xf32, #tpu.memory_space<vmem>>, vector<16x16xf32>
    tpu.vector_store %arg23[%c16_62, %c0_63], %111 {strides = array<i32>} : memref<32x64xf32, #tpu.memory_space<vmem>>, vector<16x16xf32>,
    %c16_64 = arith.constant 16 : index
    %c16_65 = arith.constant 16 : index
    %113 = vector.load %arg22[%c16_64, %c16_65] : memref<32x192xbf16, #tpu.memory_space<vmem>>, vector<16x16xbf16>
    %c16_66 = arith.constant 16 : index
    %c80_67 = arith.constant 80 : index
    %114 = vector.load %arg22[%c16_66, %c80_67] : memref<32x192xbf16, #tpu.memory_space<vmem>>, vector<16x16xbf16>
    %c16_68 = arith.constant 16 : index
    %c144_69 = arith.constant 144 : index
    %115 = vector.load %arg22[%c16_68, %c144_69] : memref<32x192xbf16, #tpu.memory_space<vmem>>, vector<16x16xbf16>
    %cst_70 = arith.constant dense<0.000000e+00> : vector<16x16xf32>
    %116 = tpu.matmul %113, %114, %cst_70 {dimension_numbers = #tpu.dot_dimension_numbers<[1], [1], [0], [0], [0, 0, 1, 0], [], []>} : vector<16x16xbf16>, vector<16x16xbf16>, vector<16x16xf32> -> vector<16x16xf32>
    %117 = vector.broadcast %93 : vector<1x16xf32> to vector<16x16xf32>
    %118 = arith.addf %116, %117 : vector<16x16xf32>
    %cst_71 = arith.constant dense<0xFF800000> : vector<16xf32>
    %119 = vector.multi_reduction <maximumf>, %118, %cst_71 [1] : vector<16x16xf32> to vector<16xf32>
    %120 = vector.shape_cast %119 : vector<16xf32> to vector<16x1xf32>
    %121 = vector.broadcast %120 : vector<16x1xf32> to vector<16x16xf32>
    %122 = arith.subf %118, %121 : vector<16x16xf32>
    %123 = math.exp %122 : vector<16x16xf32>
    %cst_72 = arith.constant dense<0.000000e+00> : vector<16xf32>
    %124 = vector.multi_reduction <add>, %123, %cst_72 [1] : vector<16x16xf32> to vector<16xf32>
    %125 = vector.shape_cast %124 : vector<16xf32> to vector<16x1xf32>
    %126 = tpu.reciprocal %125 {approx = true} : vector<16x1xf32> -> vector<16x1xf32>
    %127 = vector.broadcast %126 : vector<16x1xf32> to vector<16x16xf32>
    %128 = arith.mulf %123, %127 : vector<16x16xf32>
    %129 = arith.truncf %128 : vector<16x16xf32> to vector<16x16xbf16>
    %cst_73 = arith.constant dense<0.000000e+00> : vector<16x16xf32>
    %130 = tpu.matmul %129, %115, %cst_73 {dimension_numbers = #tpu.dot_dimension_numbers<[1], [0], [0], [1], [0, 0, 1, 1], [], []>} : vector<16x16xbf16>, vector<16x16xbf16>, vector<16x16xf32> -> vector<16x16xf32>
    %c16_74 = arith.constant 16 : index
    %c16_75 = arith.constant 16 : index
    %131 = vector.load %arg23[%c16_74, %c16_75] : memref<32x64xf32, #tpu.memory_space<vmem>>, vector<16x16xf32>
    tpu.vector_store %arg23[%c16_74, %c16_75], %130 {strides = array<i32>} : memref<32x64xf32, #tpu.memory_space<vmem>>, vector<16x16xf32>,
    %c16_76 = arith.constant 16 : index
    %c32_77 = arith.constant 32 : index
    %132 = vector.load %arg22[%c16_76, %c32_77] : memref<32x192xbf16, #tpu.memory_space<vmem>>, vector<16x16xbf16>
    %c16_78 = arith.constant 16 : index
    %c96_79 = arith.constant 96 : index
    %133 = vector.load %arg22[%c16_78, %c96_79] : memref<32x192xbf16, #tpu.memory_space<vmem>>, vector<16x16xbf16>
    %c16_80 = arith.constant 16 : index
    %c160_81 = arith.constant 160 : index
    %134 = vector.load %arg22[%c16_80, %c160_81] : memref<32x192xbf16, #tpu.memory_space<vmem>>, vector<16x16xbf16>
    %cst_82 = arith.constant dense<0.000000e+00> : vector<16x16xf32>
    %135 = tpu.matmul %132, %133, %cst_82 {dimension_numbers = #tpu.dot_dimension_numbers<[1], [1], [0], [0], [0, 0, 1, 0], [], []>} : vector<16x16xbf16>, vector<16x16xbf16>, vector<16x16xf32> -> vector<16x16xf32>
    %136 = vector.broadcast %93 : vector<1x16xf32> to vector<16x16xf32>
    %137 = arith.addf %135, %136 : vector<16x16xf32>
    %cst_83 = arith.constant dense<0xFF800000> : vector<16xf32>
    %138 = vector.multi_reduction <maximumf>, %137, %cst_83 [1] : vector<16x16xf32> to vector<16xf32>
    %139 = vector.shape_cast %138 : vector<16xf32> to vector<16x1xf32>
    %140 = vector.broadcast %139 : vector<16x1xf32> to vector<16x16xf32>
    %141 = arith.subf %137, %140 : vector<16x16xf32>
    %142 = math.exp %141 : vector<16x16xf32>
    %cst_84 = arith.constant dense<0.000000e+00> : vector<16xf32>
    %143 = vector.multi_reduction <add>, %142, %cst_84 [1] : vector<16x16xf32> to vector<16xf32>
    %144 = vector.shape_cast %143 : vector<16xf32> to vector<16x1xf32>
    %145 = tpu.reciprocal %144 {approx = true} : vector<16x1xf32> -> vector<16x1xf32>
    %146 = vector.broadcast %145 : vector<16x1xf32> to vector<16x16xf32>
    %147 = arith.mulf %142, %146 : vector<16x16xf32>
    %148 = arith.truncf %147 : vector<16x16xf32> to vector<16x16xbf16>
    %cst_85 = arith.constant dense<0.000000e+00> : vector<16x16xf32>
    %149 = tpu.matmul %148, %134, %cst_85 {dimension_numbers = #tpu.dot_dimension_numbers<[1], [0], [0], [1], [0, 0, 1, 1], [], []>} : vector<16x16xbf16>, vector<16x16xbf16>, vector<16x16xf32> -> vector<16x16xf32>
    %c16_86 = arith.constant 16 : index
    %c32_87 = arith.constant 32 : index
    %150 = vector.load %arg23[%c16_86, %c32_87] : memref<32x64xf32, #tpu.memory_space<vmem>>, vector<16x16xf32>
    tpu.vector_store %arg23[%c16_86, %c32_87], %149 {strides = array<i32>} : memref<32x64xf32, #tpu.memory_space<vmem>>, vector<16x16xf32>,
    %c16_88 = arith.constant 16 : index
    %c48_89 = arith.constant 48 : index
    %151 = vector.load %arg22[%c16_88, %c48_89] : memref<32x192xbf16, #tpu.memory_space<vmem>>, vector<16x16xbf16>
    %c16_90 = arith.constant 16 : index
    %c112_91 = arith.constant 112 : index
    %152 = vector.load %arg22[%c16_90, %c112_91] : memref<32x192xbf16, #tpu.memory_space<vmem>>, vector<16x16xbf16>
    %c16_92 = arith.constant 16 : index
    %c176_93 = arith.constant 176 : index
    %153 = vector.load %arg22[%c16_92, %c176_93] : memref<32x192xbf16, #tpu.memory_space<vmem>>, vector<16x16xbf16>
    %cst_94 = arith.constant dense<0.000000e+00> : vector<16x16xf32>
    %154 = tpu.matmul %151, %152, %cst_94 {dimension_numbers = #tpu.dot_dimension_numbers<[1], [1], [0], [0], [0, 0, 1, 0], [], []>} : vector<16x16xbf16>, vector<16x16xbf16>, vector<16x16xf32> -> vector<16x16xf32>
    %155 = vector.broadcast %93 : vector<1x16xf32> to vector<16x16xf32>
    %156 = arith.addf %154, %155 : vector<16x16xf32>
    %cst_95 = arith.constant dense<0xFF800000> : vector<16xf32>
    %157 = vector.multi_reduction <maximumf>, %156, %cst_95 [1] : vector<16x16xf32> to vector<16xf32>
    %158 = vector.shape_cast %157 : vector<16xf32> to vector<16x1xf32>
    %159 = vector.broadcast %158 : vector<16x1xf32> to vector<16x16xf32>
    %160 = arith.subf %156, %159 : vector<16x16xf32>
    %161 = math.exp %160 : vector<16x16xf32>
    %cst_96 = arith.constant dense<0.000000e+00> : vector<16xf32>
    %162 = vector.multi_reduction <add>, %161, %cst_96 [1] : vector<16x16xf32> to vector<16xf32>
    %163 = vector.shape_cast %162 : vector<16xf32> to vector<16x1xf32>
    %164 = tpu.reciprocal %163 {approx = true} : vector<16x1xf32> -> vector<16x1xf32>
    %165 = vector.broadcast %164 : vector<16x1xf32> to vector<16x16xf32>
    %166 = arith.mulf %161, %165 : vector<16x16xf32>
    %167 = arith.truncf %166 : vector<16x16xf32> to vector<16x16xbf16>
    %cst_97 = arith.constant dense<0.000000e+00> : vector<16x16xf32>
    %168 = tpu.matmul %167, %153, %cst_97 {dimension_numbers = #tpu.dot_dimension_numbers<[1], [0], [0], [1], [0, 0, 1, 1], [], []>} : vector<16x16xbf16>, vector<16x16xbf16>, vector<16x16xf32> -> vector<16x16xf32>
    %c16_98 = arith.constant 16 : index
    %c48_99 = arith.constant 48 : index
    %169 = vector.load %arg23[%c16_98, %c48_99] : memref<32x64xf32, #tpu.memory_space<vmem>>, vector<16x16xf32>
    tpu.vector_store %arg23[%c16_98, %c48_99], %168 {strides = array<i32>} : memref<32x64xf32, #tpu.memory_space<vmem>>, vector<16x16xf32>,
    %c0_100 = arith.constant 0 : index
    %c0_101 = arith.constant 0 : index
    %170 = vector.load %arg23[%c0_100, %c0_101] : memref<32x64xf32, #tpu.memory_space<vmem>>, vector<32x64xf32>
    %c0_102 = arith.constant 0 : index
    %c0_103 = arith.constant 0 : index
    %c0_104 = arith.constant 0 : index
    %171 = vector.load %arg8[%c0_102, %c0_103, %c0_104] : memref<1x64x64xbf16, #tpu.memory_space<vmem>>, vector<1x64x64xbf16>
    %172 = vector.shape_cast %171 : vector<1x64x64xbf16> to vector<64x64xbf16>
    %173 = arith.truncf %170 : vector<32x64xf32> to vector<32x64xbf16>
    %cst_105 = arith.constant dense<0.000000e+00> : vector<32x64xf32>
    %174 = tpu.matmul %173, %172, %cst_105 {dimension_numbers = #tpu.dot_dimension_numbers<[1], [0], [0], [1], [0, 0, 1, 1], [], []>} : vector<32x64xbf16>, vector<64x64xbf16>, vector<32x64xf32> -> vector<32x64xf32>
    %c0_106 = arith.constant 0 : index
    %c0_107 = arith.constant 0 : index
    %c0_108 = arith.constant 0 : index
    %175 = vector.load %arg9[%c0_106, %c0_107, %c0_108] : memref<1x1x64xf32, #tpu.memory_space<vmem>>, vector<1x1x64xf32>
    %176 = vector.shape_cast %175 : vector<1x1x64xf32> to vector<1x64xf32>
    %177 = vector.broadcast %176 : vector<1x64xf32> to vector<32x64xf32>
    %178 = arith.addf %174, %177 : vector<32x64xf32>
    %179 = arith.addf %178, %3 : vector<32x64xf32>
    %c0_109 = arith.constant 0 : index
    %c0_110 = arith.constant 0 : index
    %c0_111 = arith.constant 0 : index
    %180 = vector.load %arg10[%c0_109, %c0_110, %c0_111] : memref<1x1x64xf32, #tpu.memory_space<vmem>>, vector<1x1x64xf32>
    %181 = vector.shape_cast %180 : vector<1x1x64xf32> to vector<1x64xf32>
    %c0_112 = arith.constant 0 : index
    %c0_113 = arith.constant 0 : index
    %c0_114 = arith.constant 0 : index
    %182 = vector.load %arg11[%c0_112, %c0_113, %c0_114] : memref<1x1x64xf32, #tpu.memory_space<vmem>>, vector<1x1x64xf32>
    %183 = vector.shape_cast %182 : vector<1x1x64xf32> to vector<1x64xf32>
    %cst_115 = arith.constant dense<0.000000e+00> : vector<32xf32>
    %184 = vector.multi_reduction <add>, %179, %cst_115 [1] : vector<32x64xf32> to vector<32xf32>
    %185 = vector.shape_cast %184 : vector<32xf32> to vector<32x1xf32>
    %cst_116 = arith.constant 6.400000e+01 : f32
    %186 = vector.broadcast %cst_116 : f32 to vector<32x1xf32>
    %187 = arith.divf %185, %186 : vector<32x1xf32>
    %188 = vector.broadcast %187 : vector<32x1xf32> to vector<32x64xf32>
    %189 = arith.subf %179, %188 : vector<32x64xf32>
    %190 = arith.mulf %189, %189 : vector<32x64xf32>
    %cst_117 = arith.constant dense<0.000000e+00> : vector<32xf32>
    %191 = vector.multi_reduction <add>, %190, %cst_117 [1] : vector<32x64xf32> to vector<32xf32>
    %192 = vector.shape_cast %191 : vector<32xf32> to vector<32x1xf32>
    %cst_118 = arith.constant 6.400000e+01 : f32
    %193 = vector.broadcast %cst_118 : f32 to vector<32x1xf32>
    %194 = arith.divf %192, %193 : vector<32x1xf32>
    %195 = vector.broadcast %187 : vector<32x1xf32> to vector<32x64xf32>
    %196 = arith.subf %179, %195 : vector<32x64xf32>
    %cst_119 = arith.constant 9.99999996E-13 : f32
    %197 = vector.broadcast %cst_119 : f32 to vector<32x1xf32>
    %198 = arith.addf %194, %197 : vector<32x1xf32>
    %199 = math.rsqrt %198 : vector<32x1xf32>
    %200 = vector.broadcast %199 : vector<32x1xf32> to vector<32x64xf32>
    %201 = arith.mulf %196, %200 : vector<32x64xf32>
    %202 = vector.broadcast %181 : vector<1x64xf32> to vector<32x64xf32>
    %203 = arith.mulf %201, %202 : vector<32x64xf32>
    %204 = vector.broadcast %183 : vector<1x64xf32> to vector<32x64xf32>
    %205 = arith.addf %203, %204 : vector<32x64xf32>
    %c0_120 = arith.constant 0 : index
    %c0_121 = arith.constant 0 : index
    %c0_122 = arith.constant 0 : index
    %206 = vector.load %arg12[%c0_120, %c0_121, %c0_122] : memref<1x64x128xbf16, #tpu.memory_space<vmem>>, vector<1x64x128xbf16>
    %207 = vector.shape_cast %206 : vector<1x64x128xbf16> to vector<64x128xbf16>
    %208 = arith.truncf %205 : vector<32x64xf32> to vector<32x64xbf16>
    %cst_123 = arith.constant dense<0.000000e+00> : vector<32x128xf32>
    %209 = tpu.matmul %208, %207, %cst_123 {dimension_numbers = #tpu.dot_dimension_numbers<[1], [0], [0], [1], [0, 0, 1, 1], [], []>} : vector<32x64xbf16>, vector<64x128xbf16>, vector<32x128xf32> -> vector<32x128xf32>
    %c0_124 = arith.constant 0 : index
    %c0_125 = arith.constant 0 : index
    %c0_126 = arith.constant 0 : index
    %210 = vector.load %arg13[%c0_124, %c0_125, %c0_126] : memref<1x1x128xf32, #tpu.memory_space<vmem>>, vector<1x1x128xf32>
    %211 = vector.shape_cast %210 : vector<1x1x128xf32> to vector<1x128xf32>
    %212 = vector.broadcast %211 : vector<1x128xf32> to vector<32x128xf32>
    %213 = arith.addf %209, %212 : vector<32x128xf32>
    %214 = arith.mulf %213, %213 : vector<32x128xf32>
    %215 = arith.mulf %213, %214 : vector<32x128xf32>
    %cst_127 = arith.constant 4.471500e-02 : f32
    %216 = vector.broadcast %cst_127 : f32 to vector<32x128xf32>
    %217 = arith.mulf %216, %215 : vector<32x128xf32>
    %218 = arith.addf %213, %217 : vector<32x128xf32>
    %cst_128 = arith.constant 0.797884583 : f32
    %219 = vector.broadcast %cst_128 : f32 to vector<32x128xf32>
    %220 = arith.mulf %219, %218 : vector<32x128xf32>
    %221 = math.tanh %220 : vector<32x128xf32>
    %cst_129 = arith.constant 1.000000e+00 : f32
    %222 = vector.broadcast %cst_129 : f32 to vector<32x128xf32>
    %223 = arith.addf %222, %221 : vector<32x128xf32>
    %cst_130 = arith.constant 5.000000e-01 : f32
    %224 = vector.broadcast %cst_130 : f32 to vector<32x128xf32>
    %225 = arith.mulf %224, %223 : vector<32x128xf32>
    %226 = arith.mulf %213, %225 : vector<32x128xf32>
    %c0_131 = arith.constant 0 : index
    %c0_132 = arith.constant 0 : index
    %c0_133 = arith.constant 0 : index
    %227 = vector.load %arg14[%c0_131, %c0_132, %c0_133] : memref<1x128x64xbf16, #tpu.memory_space<vmem>>, vector<1x128x64xbf16>
    %228 = vector.shape_cast %227 : vector<1x128x64xbf16> to vector<128x64xbf16>
    %229 = arith.truncf %226 : vector<32x128xf32> to vector<32x128xbf16>
    %cst_134 = arith.constant dense<0.000000e+00> : vector<32x64xf32>
    %230 = tpu.matmul %229, %228, %cst_134 {dimension_numbers = #tpu.dot_dimension_numbers<[1], [0], [0], [1], [0, 0, 1, 1], [], []>} : vector<32x128xbf16>, vector<128x64xbf16>, vector<32x64xf32> -> vector<32x64xf32>
    %c0_135 = arith.constant 0 : index
    %c0_136 = arith.constant 0 : index
    %c0_137 = arith.constant 0 : index
    %231 = vector.load %arg15[%c0_135, %c0_136, %c0_137] : memref<1x1x64xf32, #tpu.memory_space<vmem>>, vector<1x1x64xf32>
    %232 = vector.shape_cast %231 : vector<1x1x64xf32> to vector<1x64xf32>
    %233 = vector.broadcast %232 : vector<1x64xf32> to vector<32x64xf32>
    %234 = arith.addf %230, %233 : vector<32x64xf32>
    %235 = arith.addf %234, %205 : vector<32x64xf32>
    %c0_138 = arith.constant 0 : index
    %c0_139 = arith.constant 0 : index
    %c0_140 = arith.constant 0 : index
    %236 = vector.load %arg16[%c0_138, %c0_139, %c0_140] : memref<1x1x64xf32, #tpu.memory_space<vmem>>, vector<1x1x64xf32>
    %237 = vector.shape_cast %236 : vector<1x1x64xf32> to vector<1x64xf32>
    %c0_141 = arith.constant 0 : index
    %c0_142 = arith.constant 0 : index
    %c0_143 = arith.constant 0 : index
    %238 = vector.load %arg17[%c0_141, %c0_142, %c0_143] : memref<1x1x64xf32, #tpu.memory_space<vmem>>, vector<1x1x64xf32>
    %239 = vector.shape_cast %238 : vector<1x1x64xf32> to vector<1x64xf32>
    %cst_144 = arith.constant dense<0.000000e+00> : vector<32xf32>
    %240 = vector.multi_reduction <add>, %235, %cst_144 [1] : vector<32x64xf32> to vector<32xf32>
    %241 = vector.shape_cast %240 : vector<32xf32> to vector<32x1xf32>
    %cst_145 = arith.constant 6.400000e+01 : f32
    %242 = vector.broadcast %cst_145 : f32 to vector<32x1xf32>
    %243 = arith.divf %241, %242 : vector<32x1xf32>
    %244 = vector.broadcast %243 : vector<32x1xf32> to vector<32x64xf32>
    %245 = arith.subf %235, %244 : vector<32x64xf32>
    %246 = arith.mulf %245, %245 : vector<32x64xf32>
    %cst_146 = arith.constant dense<0.000000e+00> : vector<32xf32>
    %247 = vector.multi_reduction <add>, %246, %cst_146 [1] : vector<32x64xf32> to vector<32xf32>
    %248 = vector.shape_cast %247 : vector<32xf32> to vector<32x1xf32>
    %cst_147 = arith.constant 6.400000e+01 : f32
    %249 = vector.broadcast %cst_147 : f32 to vector<32x1xf32>
    %250 = arith.divf %248, %249 : vector<32x1xf32>
    %251 = vector.broadcast %243 : vector<32x1xf32> to vector<32x64xf32>
    %252 = arith.subf %235, %251 : vector<32x64xf32>
    %cst_148 = arith.constant 9.99999996E-13 : f32
    %253 = vector.broadcast %cst_148 : f32 to vector<32x1xf32>
    %254 = arith.addf %250, %253 : vector<32x1xf32>
    %255 = math.rsqrt %254 : vector<32x1xf32>
    %256 = vector.broadcast %255 : vector<32x1xf32> to vector<32x64xf32>
    %257 = arith.mulf %252, %256 : vector<32x64xf32>
    %258 = vector.broadcast %237 : vector<1x64xf32> to vector<32x64xf32>
    %259 = arith.mulf %257, %258 : vector<32x64xf32>
    %260 = vector.broadcast %239 : vector<1x64xf32> to vector<32x64xf32>
    %261 = arith.addf %259, %260 : vector<32x64xf32>
    %c0_149 = arith.constant 0 : index
    %c0_150 = arith.constant 0 : index
    %262 = vector.load %arg21[%c0_149, %c0_150] : memref<32x64xf32, #tpu.memory_space<vmem>>, vector<32x64xf32>
    tpu.vector_store %arg21[%c0_149, %c0_150], %261 {strides = array<i32>} : memref<32x64xf32, #tpu.memory_space<vmem>>, vector<32x64xf32>,
    %c1_i32 = arith.constant 1 : i32
    %263 = arith.cmpi eq, %arg1, %c1_i32 : i32
    %264 = arith.extui %263 : i1 to i32
    %c0_i32_151 = arith.constant 0 : i32
    %265 = arith.cmpi ne, %264, %c0_i32_151 : i32
    scf.if %265 {
      %c0_152 = arith.constant 0 : index
      %c0_153 = arith.constant 0 : index
      %266 = vector.load %arg18[%c0_152, %c0_153] : memref<64x128xbf16, #tpu.memory_space<vmem>>, vector<64x128xbf16>
      %267 = arith.truncf %261 : vector<32x64xf32> to vector<32x64xbf16>
      %cst_154 = arith.constant dense<0.000000e+00> : vector<32x128xf32>
      %268 = tpu.matmul %267, %266, %cst_154 {dimension_numbers = #tpu.dot_dimension_numbers<[1], [0], [0], [1], [0, 0, 1, 1], [], []>} : vector<32x64xbf16>, vector<64x128xbf16>, vector<32x128xf32> -> vector<32x128xf32>
      %c0_155 = arith.constant 0 : index
      %c0_156 = arith.constant 0 : index
      %269 = vector.load %arg19[%c0_155, %c0_156] : memref<1x128xf32, #tpu.memory_space<vmem>>, vector<1x128xf32>
      %270 = vector.broadcast %269 : vector<1x128xf32> to vector<32x128xf32>
      %271 = arith.addf %268, %270 : vector<32x128xf32>
      %c0_157 = arith.constant 0 : index
      %c0_158 = arith.constant 0 : index
      %272 = vector.load %arg20[%c0_157, %c0_158] : memref<32x128xf32, #tpu.memory_space<vmem>>, vector<32x128xf32>
      tpu.vector_store %arg20[%c0_157, %c0_158], %271 {strides = array<i32>} : memref<32x128xf32, #tpu.memory_space<vmem>>, vector<32x128xf32>,
    } else {
    }
    return
  }
  func.func @transform_0(%arg0: i32, %arg1: i32) -> (i32, i32) {
    %c0_i32 = arith.constant 0 : i32
    %c0_i32_0 = arith.constant 0 : i32
    return %arg0, %c0_i32 : i32, i32
  }
  func.func @transform_1(%arg0: i32, %arg1: i32) -> (i32, i32, i32) {
    %c0_i32 = arith.constant 0 : i32
    %c0_i32_0 = arith.constant 0 : i32
    %c0_i32_1 = arith.constant 0 : i32
    return %arg0, %c0_i32, %c0_i32_0 : i32, i32, i32
  }
  func.func @transform_2(%arg0: i32, %arg1: i32) -> (i32, i32) {
    %c0_i32 = arith.constant 0 : i32
    %c0_i32_0 = arith.constant 0 : i32
    %c0_i32_1 = arith.constant 0 : i32
    return %c0_i32, %c0_i32_0 : i32, i32
  }
  func.func @transform_3(%arg0: i32, %arg1: i32) -> (i32, i32) {
    %c0_i32 = arith.constant 0 : i32
    %c0_i32_0 = arith.constant 0 : i32
    %c0_i32_1 = arith.constant 0 : i32
    return %c0_i32, %c0_i32_0 : i32, i32
  }
  func.func @transform_4(%arg0: i32, %arg1: i32) -> (i32, i32, i32) {
    %c0_i32 = arith.constant 0 : i32
    %c0_i32_0 = arith.constant 0 : i32
    %c0_i32_1 = arith.constant 0 : i32
    return %arg1, %c0_i32, %c0_i32_0 : i32, i32, i32
  }
  func.func @transform_5(%arg0: i32, %arg1: i32) -> (i32, i32, i32) {
    %c0_i32 = arith.constant 0 : i32
    %c0_i32_0 = arith.constant 0 : i32
    %c0_i32_1 = arith.constant 0 : i32
    return %arg1, %c0_i32, %c0_i32_0 : i32, i32, i32
  }
  func.func @transform_6(%arg0: i32, %arg1: i32) -> (i32, i32, i32) {
    %c0_i32 = arith.constant 0 : i32
    %c0_i32_0 = arith.constant 0 : i32
    %c0_i32_1 = arith.constant 0 : i32
    return %arg1, %c0_i32, %c0_i32_0 : i32, i32, i32
  }
  func.func @transform_7(%arg0: i32, %arg1: i32) -> (i32, i32, i32) {
    %c0_i32 = arith.constant 0 : i32
    %c0_i32_0 = arith.constant 0 : i32
    %c0_i32_1 = arith.constant 0 : i32
    return %arg1, %c0_i32, %c0_i32_0 : i32, i32, i32
  }
  func.func @transform_8(%arg0: i32, %arg1: i32) -> (i32, i32, i32) {
    %c0_i32 = arith.constant 0 : i32
    %c0_i32_0 = arith.constant 0 : i32
    %c0_i32_1 = arith.constant 0 : i32
    return %arg1, %c0_i32, %c0_i32_0 : i32, i32, i32
  }
  func.func @transform_9(%arg0: i32, %arg1: i32) -> (i32, i32, i32) {
    %c0_i32 = arith.constant 0 : i32
    %c0_i32_0 = arith.constant 0 : i32
    %c0_i32_1 = arith.constant 0 : i32
    return %arg1, %c0_i32, %c0_i32_0 : i32, i32, i32
  }
  func.func @transform_10(%arg0: i32, %arg1: i32) -> (i32, i32, i32) {
    %c0_i32 = arith.constant 0 : i32
    %c0_i32_0 = arith.constant 0 : i32
    %c0_i32_1 = arith.constant 0 : i32
    return %arg1, %c0_i32, %c0_i32_0 : i32, i32, i32
  }
  func.func @transform_11(%arg0: i32, %arg1: i32) -> (i32, i32, i32) {
    %c0_i32 = arith.constant 0 : i32
    %c0_i32_0 = arith.constant 0 : i32
    %c0_i32_1 = arith.constant 0 : i32
    return %arg1, %c0_i32, %c0_i32_0 : i32, i32, i32
  }
  func.func @transform_12(%arg0: i32, %arg1: i32) -> (i32, i32, i32) {
    %c0_i32 = arith.constant 0 : i32
    %c0_i32_0 = arith.constant 0 : i32
    %c0_i32_1 = arith.constant 0 : i32
    return %arg1, %c0_i32, %c0_i32_0 : i32, i32, i32
  }
  func.func @transform_13(%arg0: i32, %arg1: i32) -> (i32, i32, i32) {
    %c0_i32 = arith.constant 0 : i32
    %c0_i32_0 = arith.constant 0 : i32
    %c0_i32_1 = arith.constant 0 : i32
    return %arg1, %c0_i32, %c0_i32_0 : i32, i32, i32
  }
  func.func @transform_14(%arg0: i32, %arg1: i32) -> (i32, i32, i32) {
    %c0_i32 = arith.constant 0 : i32
    %c0_i32_0 = arith.constant 0 : i32
    %c0_i32_1 = arith.constant 0 : i32
    return %arg1, %c0_i32, %c0_i32_0 : i32, i32, i32
  }
  func.func @transform_15(%arg0: i32, %arg1: i32) -> (i32, i32, i32) {
    %c0_i32 = arith.constant 0 : i32
    %c0_i32_0 = arith.constant 0 : i32
    %c0_i32_1 = arith.constant 0 : i32
    return %arg1, %c0_i32, %c0_i32_0 : i32, i32, i32
  }
  func.func @transform_16(%arg0: i32, %arg1: i32) -> (i32, i32) {
    %c0_i32 = arith.constant 0 : i32
    %c0_i32_0 = arith.constant 0 : i32
    %c0_i32_1 = arith.constant 0 : i32
    return %c0_i32, %c0_i32_0 : i32, i32
  }
  func.func @transform_17(%arg0: i32, %arg1: i32) -> (i32, i32) {
    %c0_i32 = arith.constant 0 : i32
    %c0_i32_0 = arith.constant 0 : i32
    %c0_i32_1 = arith.constant 0 : i32
    return %c0_i32, %c0_i32_0 : i32, i32
  }
  func.func @transform_18(%arg0: i32, %arg1: i32) -> (i32, i32) {
    %c0_i32 = arith.constant 0 : i32
    %c0_i32_0 = arith.constant 0 : i32
    return %arg0, %c0_i32 : i32, i32
  }
}

</mosaic_0001>

<llo_original>
// kernel: tpu_custom_call.1
$region0: #{tpu_custom_call.1}
  #allocation0 [shape = 'u32[]', space=smem, size = 0x4, offset = 0x4, fixed_abs, tag = 'smem constant byte address 0x4 - core index']
  #allocation1 [shape = 'u32[144,128]{1,0:T(1,128)}', space=vmem, size = 0x12000, scoped, tag = 'internal scratch']
  #allocation2 [shape = 'f32[32,64]{1,0:T(8,128)}', space=vmem, size = 0x4000, scoped, tag = 'scratch operand']
  #allocation3 [shape = 'bf16[32,192]{1,0:T(16,128)(2,1)}', space=vmem, size = 0x4000, scoped, tag = 'scratch operand']
  #allocation4 [shape = 'f32[32,64]{1,0:T(8,128)}', space=vmem, size = 0x4000, scoped, tag = 'scratch operand']
  %s0 = inlined_call_operand.hbm [shape: f32[32,64], index: 0, kind: input, shape index: {}]
  %s1 = inlined_call_operand.vmem [shape: f32[2,1,16], index: 1, kind: input, shape index: {}]
  %s2 = inlined_call_operand.hbm [shape: f32[1,64], index: 2, kind: input, shape index: {}]
  %s3 = inlined_call_operand.hbm [shape: f32[1,64], index: 3, kind: input, shape index: {}]
  %s4 = inlined_call_operand.vmem [shape: bf16[2,64,192], index: 4, kind: input, shape index: {}]
  %s5 = inlined_call_operand.hbm [shape: f32[2,1,192], index: 5, kind: input, shape index: {}]
  %s6 = inlined_call_operand.vmem [shape: bf16[2,64,64], index: 6, kind: input, shape index: {}]
  %s7 = inlined_call_operand.hbm [shape: f32[2,1,64], index: 7, kind: input, shape index: {}]
  %s8 = inlined_call_operand.hbm [shape: f32[2,1,64], index: 8, kind: input, shape index: {}]
  %s9 = inlined_call_operand.hbm [shape: f32[2,1,64], index: 9, kind: input, shape index: {}]
  %s10 = inlined_call_operand.hbm [shape: bf16[2,64,128], index: 10, kind: input, shape index: {}]
  %s11 = inlined_call_operand.vmem [shape: f32[2,1,128], index: 11, kind: input, shape index: {}]
  %s12 = inlined_call_operand.vmem [shape: bf16[2,128,64], index: 12, kind: input, shape index: {}]
  %s13 = inlined_call_operand.vmem [shape: f32[2,1,64], index: 13, kind: input, shape index: {}]
  %s14 = inlined_call_operand.vmem [shape: f32[2,1,64], index: 14, kind: input, shape index: {}]
  %s15 = inlined_call_operand.vmem [shape: f32[2,1,64], index: 15, kind: input, shape index: {}]
  %s16 = inlined_call_operand.vmem [shape: bf16[64,128], index: 16, kind: input, shape index: {}]
  %s17 = inlined_call_operand.vmem [shape: f32[1,128], index: 17, kind: input, shape index: {}]
  %s18 = inlined_call_operand.hbm [shape: f32[32,128], index: 18, kind: output, shape index: {}]
  %s19 = sld [smem:[#allocation0]]
  $region145: #{tpu_custom_call.1} parent=0
    _
  %s21 = ssub.s32 1, %s19
  %s22 = scalar_select 0, %s21, %s19
  $region1: #{tpu_custom_call.1} parent=0
    #allocation5 [shape = 'u8[16384]{0}', space=vmem, size = 0x4000, scoped, tag = 'input window, operand 0, single buffered']
    #allocation6 [shape = 's32[2]{0}', space=sflag, size = 0x8, scoped, tag = 'scoped memory for tpu_custom_call.1']
    #allocation7 [shape = 's32[2]{0}', space=sflag, size = 0x8, scoped, tag = 'scoped memory for tpu_custom_call.1']
    #allocation8 [shape = 'u8[512]{0}', space=vmem, size = 0x400, scoped, tag = 'input window, operand 2, single buffered']
    #allocation9 [shape = 's32[1]{0}', space=sflag, size = 0x4, scoped, tag = 'scoped memory for tpu_custom_call.1']
    #allocation10 [shape = 'u8[512]{0}', space=vmem, size = 0x400, scoped, tag = 'input window, operand 3, single buffered']
    #allocation11 [shape = 'u8[2048]{0}', space=vmem, size = 0x800, scoped, tag = 'input window, operand 5']
    #allocation12 [shape = 's32[2]{0}', space=sflag, size = 0x8, scoped, tag = 'scoped memory for tpu_custom_call.1']
    #allocation13 [shape = 'u8[1024]{0}', space=vmem, size = 0x400, scoped, tag = 'input window, operand 7']
    #allocation14 [shape = 'u8[1024]{0}', space=vmem, size = 0x400, scoped, tag = 'input window, operand 8']
    #allocation15 [shape = 's32[2]{0}', space=sflag, size = 0x8, scoped, tag = 'scoped memory for tpu_custom_call.1']
    #allocation16 [shape = 'u8[1024]{0}', space=vmem, size = 0x400, scoped, tag = 'input window, operand 9']
    #allocation17 [shape = 'u8[32768]{0}', space=vmem, size = 0x8000, scoped, tag = 'input window, operand 10']
    #allocation18 [shape = 's32[2]{0}', space=sflag, size = 0x8, scoped, tag = 'scoped memory for tpu_custom_call.1']
    #allocation19 [shape = 'u8[16384]{0}', space=vmem, size = 0x4000, scoped, tag = 'output window, operand 0, single buffered']
    %23 = vsyncpa [#allocation6], 0
    %24 = vsyncpa [#allocation9], 0
    %25 = vsyncpa [#allocation12], 0
    %s26 = scalar_lea.sflag [#allocation12], 1
    %27 = vsyncpa %s26, 0
    %28 = vsyncpa [#allocation15], 0
    %s29 = scalar_lea.sflag [#allocation15], 1
    %30 = vsyncpa %s29, 0
    %31 = vsyncpa [#allocation18], 0
    %s32 = scalar_lea.sflag [#allocation18], 1
    %33 = vsyncpa %s32, 0
    %34 = vsyncpa [#allocation7], 0
    loop: start=0, step=1, limit=4
    $region2: #{tpu_custom_call.1} parent=1 // loop_pre_header
      _
    $region3: #{tpu_custom_call.1} parent=1 // loop_header
      %s36 = sphi 0, %s40
      %p37 = scmp.ge.s32.totalorder %s36, 4
      %s43 = sphi 0, %s55
      %s44 = sphi 0, %s51
      %s45 = sphi 0, %s43
      %s46 = sphi 0, %s44
      %s47 = sphi 0, %s45
      %s48 = sphi 0, %s46
      %s58 = sphi 0, %s60
      %s61 = sphi 0, %s58
      %s62 = sphi 0, %s61
      %s78 = sphi 0, %s62
      %s84 = sphi 0, %s86
      %s87 = sphi 0, %s84
      %s88 = sphi 0, %s87
      %s104 = sphi 0, %s88
      %s108 = sphi 0, %s108
      %s110 = sphi 0, %s108
      %s111 = sphi 0, %s110
      %s125 = sphi 0, %s111
      %s129 = sphi 0, %s129
      %s131 = sphi 0, %s129
      %s132 = sphi 0, %s131
      %s146 = sphi 0, %s132
      %s152 = sphi 0, %s154
      %s155 = sphi 0, %s152
      %s156 = sphi 0, %s155
      %s172 = sphi 0, %s156
      %s178 = sphi 0, %s180
      %s181 = sphi 0, %s178
      %s182 = sphi 0, %s181
      %s198 = sphi 0, %s182
      %s204 = sphi 0, %s206
      %s207 = sphi 0, %s204
      %s208 = sphi 0, %s207
      %s224 = sphi 0, %s208
      %s230 = sphi 0, %s232
      %s233 = sphi 0, %s230
      %s234 = sphi 0, %s233
      %s250 = sphi 0, %s234
      %s256 = sphi 0, %s258
      %s259 = sphi 0, %s256
      %s260 = sphi 0, %s259
      %s276 = sphi 0, %s260
      %s282 = sphi 0, %s284
      %s285 = sphi 0, %s282
      %s286 = sphi 0, %s285
      %s302 = sphi 0, %s286
      %s308 = sphi 0, %s310
      %s311 = sphi 0, %s308
      %s312 = sphi 0, %s311
      %s328 = sphi 0, %s312
      %s334 = sphi 0, %s336
      %s337 = sphi 0, %s334
      %s338 = sphi 0, %s337
      %s354 = sphi 0, %s338
      %s360 = sphi 0, %s362
      %s363 = sphi 0, %s360
      %s364 = sphi 0, %s363
      %s380 = sphi 0, %s364
      %s386 = sphi 0, %s388
      %s389 = sphi 0, %s386
      %s390 = sphi 0, %s389
      %s406 = sphi 0, %s390
      %s412 = sphi 0, %s414
      %s415 = sphi 0, %s412
      %s416 = sphi 0, %s415
      %s432 = sphi 0, %s416
      %s438 = sphi 0, %s440
      %s441 = sphi 0, %s438
      %s442 = sphi 0, %s441
      %s458 = sphi 0, %s442
      %s462 = sphi 0, %s462
      %s464 = sphi 0, %s462
      %s465 = sphi 0, %s464
      %s479 = sphi 0, %s465
      %s483 = sphi 0, %s483
      %s485 = sphi 0, %s483
      %s486 = sphi 0, %s485
      %s500 = sphi 0, %s486
      %s506 = sphi 0, %s508
      %s509 = sphi 0, %s506
      %s510 = sphi 0, %s509
      %s526 = sphi 0, %s510
    $region4: #{tpu_custom_call.1} parent=1 // loop_header_branch
      %39 = sbr.rel (%p37) target = $region8
    $region5: #{tpu_custom_call.1} parent=1 // loop_body
      %s41 = ssub.s32 %s36, 1
      %s42 = ssub.s32 %s36, 2
      %s49 = sadd.s32 1, %s44
      %p50 = scmp.ge.s32.totalorder %s49, 2
      %s51 = scalar_select %p50, 0, %s49
      %s52 = sadd.s32 1, %s43
      %s53 = scalar_select %p50, %s52, %s43
      %p54 = scmp.ge.s32.totalorder %s53, 1
      %s55 = scalar_select %p54, 0, %s53
      %s56 = ssub.s32 %s43, %s55
      %p57 = scmp.eq.s32.totalorder %s56, 0
      %s59 = sadd.s32 %s58, 1
      %s60 = scalar_select %p57, %s58, %s59
      %p63 = pneg %p57
      %p64 = scmp.eq.s32.totalorder %s36, 1
      %p65 = por %p63, %p64
      %p66 = scmp.ne.s32.totalorder %s58, %s61
      %p67 = scmp.eq.s32.totalorder %s36, 0
      %p68 = por %p66, %p67
      %p69 = scmp.ne.s32.totalorder %s58, %s61
      %p70 = scmp.eq.s32.totalorder %s41, 1
      %p71 = por %p69, %p70
      %p72 = scmp.ne.s32.totalorder %s61, %s62
      %p73 = scmp.eq.s32.totalorder %s41, 0
      %p74 = por %p72, %p73
      %p75 = scmp.ne.s32.totalorder %s61, %s62
      %p76 = scmp.eq.s32.totalorder %s42, 1
      %p77 = por %p75, %p76
      %p79 = scmp.ne.s32.totalorder %s62, %s78
      %p80 = scmp.eq.s32.totalorder %s42, 0
      %p81 = por %p79, %p80
      %s82 = ssub.s32 %s43, %s55
      %p83 = scmp.eq.s32.totalorder %s82, 0
      %s85 = sadd.s32 %s84, 1
      %s86 = scalar_select %p83, %s84, %s85
      %p89 = pneg %p83
      %p90 = scmp.eq.s32.totalorder %s36, 1
      %p91 = por %p89, %p90
      %p92 = scmp.ne.s32.totalorder %s84, %s87
      %p93 = scmp.eq.s32.totalorder %s36, 0
      %p94 = por %p92, %p93
      %p95 = scmp.ne.s32.totalorder %s84, %s87
      %p96 = scmp.eq.s32.totalorder %s41, 1
      %p97 = por %p95, %p96
      %p98 = scmp.ne.s32.totalorder %s87, %s88
      %p99 = scmp.eq.s32.totalorder %s41, 0
      %p100 = por %p98, %p99
      %p101 = scmp.ne.s32.totalorder %s87, %s88
      %p102 = scmp.eq.s32.totalorder %s42, 1
      %p103 = por %p101, %p102
      %p105 = scmp.ne.s32.totalorder %s88, %s104
      %p106 = scmp.eq.s32.totalorder %s42, 0
      %p107 = por %p105, %p106
      %s109 = sadd.s32 %s108, 1
      %p112 = scmp.eq.s32.totalorder %s36, 1
      %p113 = scmp.ne.s32.totalorder %s108, %s110
      %p114 = scmp.eq.s32.totalorder %s36, 0
      %p115 = por %p113, %p114
      %p116 = scmp.ne.s32.totalorder %s108, %s110
      %p117 = scmp.eq.s32.totalorder %s41, 1
      %p118 = por %p116, %p117
      %p119 = scmp.ne.s32.totalorder %s110, %s111
      %p120 = scmp.eq.s32.totalorder %s41, 0
      %p121 = por %p119, %p120
      %p122 = scmp.ne.s32.totalorder %s110, %s111
      %p123 = scmp.eq.s32.totalorder %s42, 1
      %p124 = por %p122, %p123
      %p126 = scmp.ne.s32.totalorder %s111, %s125
      %p127 = scmp.eq.s32.totalorder %s42, 0
      %p128 = por %p126, %p127
      %s130 = sadd.s32 %s129, 1
      %p133 = scmp.eq.s32.totalorder %s36, 1
      %p134 = scmp.ne.s32.totalorder %s129, %s131
      %p135 = scmp.eq.s32.totalorder %s36, 0
      %p136 = por %p134, %p135
      %p137 = scmp.ne.s32.totalorder %s129, %s131
      %p138 = scmp.eq.s32.totalorder %s41, 1
      %p139 = por %p137, %p138
      %p140 = scmp.ne.s32.totalorder %s131, %s132
      %p141 = scmp.eq.s32.totalorder %s41, 0
      %p142 = por %p140, %p141
      %p143 = scmp.ne.s32.totalorder %s131, %s132
      %p144 = scmp.eq.s32.totalorder %s42, 1
      %p145 = por %p143, %p144
      %p147 = scmp.ne.s32.totalorder %s132, %s146
      %p148 = scmp.eq.s32.totalorder %s42, 0
      %p149 = por %p147, %p148
      %s150 = ssub.s32 %s44, %s51
      %p151 = scmp.eq.s32.totalorder %s150, 0
      %s153 = sadd.s32 %s152, 1
      %s154 = scalar_select %p151, %s152, %s153
      %p157 = pneg %p151
      %p158 = scmp.eq.s32.totalorder %s36, 1
      %p159 = por %p157, %p158
      %p160 = scmp.ne.s32.totalorder %s152, %s155
      %p161 = scmp.eq.s32.totalorder %s36, 0
      %p162 = por %p160, %p161
      %p163 = scmp.ne.s32.totalorder %s152, %s155
      %p164 = scmp.eq.s32.totalorder %s41, 1
      %p165 = por %p163, %p164
      %p166 = scmp.ne.s32.totalorder %s155, %s156
      %p167 = scmp.eq.s32.totalorder %s41, 0
      %p168 = por %p166, %p167
      %p169 = scmp.ne.s32.totalorder %s155, %s156
      %p170 = scmp.eq.s32.totalorder %s42, 1
      %p171 = por %p169, %p170
      %p173 = scmp.ne.s32.totalorder %s156, %s172
      %p174 = scmp.eq.s32.totalorder %s42, 0
      %p175 = por %p173, %p174
      %s176 = ssub.s32 %s44, %s51
      %p177 = scmp.eq.s32.totalorder %s176, 0
      %s179 = sadd.s32 %s178, 1
      %s180 = scalar_select %p177, %s178, %s179
      %p183 = pneg %p177
      %p184 = scmp.eq.s32.totalorder %s36, 1
      %p185 = por %p183, %p184
      %p186 = scmp.ne.s32.totalorder %s178, %s181
      %p187 = scmp.eq.s32.totalorder %s36, 0
      %p188 = por %p186, %p187
      %p189 = scmp.ne.s32.totalorder %s178, %s181
      %p190 = scmp.eq.s32.totalorder %s41, 1
      %p191 = por %p189, %p190
      %p192 = scmp.ne.s32.totalorder %s181, %s182
      %p193 = scmp.eq.s32.totalorder %s41, 0
      %p194 = por %p192, %p193
      %p195 = scmp.ne.s32.totalorder %s181, %s182
      %p196 = scmp.eq.s32.totalorder %s42, 1
      %p197 = por %p195, %p196
      %p199 = scmp.ne.s32.totalorder %s182, %s198
      %p200 = scmp.eq.s32.totalorder %s42, 0
      %p201 = por %p199, %p200
      %s202 = ssub.s32 %s44, %s51
      %p203 = scmp.eq.s32.totalorder %s202, 0
      %s205 = sadd.s32 %s204, 1
      %s206 = scalar_select %p203, %s204, %s205
      %p209 = pneg %p203
      %p210 = scmp.eq.s32.totalorder %s36, 1
      %p211 = por %p209, %p210
      %p212 = scmp.ne.s32.totalorder %s204, %s207
      %p213 = scmp.eq.s32.totalorder %s36, 0
      %p214 = por %p212, %p213
      %p215 = scmp.ne.s32.totalorder %s204, %s207
      %p216 = scmp.eq.s32.totalorder %s41, 1
      %p217 = por %p215, %p216
      %p218 = scmp.ne.s32.totalorder %s207, %s208
      %p219 = scmp.eq.s32.totalorder %s41, 0
      %p220 = por %p218, %p219
      %p221 = scmp.ne.s32.totalorder %s207, %s208
      %p222 = scmp.eq.s32.totalorder %s42, 1
      %p223 = por %p221, %p222
      %p225 = scmp.ne.s32.totalorder %s208, %s224
      %p226 = scmp.eq.s32.totalorder %s42, 0
      %p227 = por %p225, %p226
      %s228 = ssub.s32 %s44, %s51
      %p229 = scmp.eq.s32.totalorder %s228, 0
      %s231 = sadd.s32 %s230, 1
      %s232 = scalar_select %p229, %s230, %s231
      %p235 = pneg %p229
      %p236 = scmp.eq.s32.totalorder %s36, 1
      %p237 = por %p235, %p236
      %p238 = scmp.ne.s32.totalorder %s230, %s233
      %p239 = scmp.eq.s32.totalorder %s36, 0
      %p240 = por %p238, %p239
      %p241 = scmp.ne.s32.totalorder %s230, %s233
      %p242 = scmp.eq.s32.totalorder %s41, 1
      %p243 = por %p241, %p242
      %p244 = scmp.ne.s32.totalorder %s233, %s234
      %p245 = scmp.eq.s32.totalorder %s41, 0
      %p246 = por %p244, %p245
      %p247 = scmp.ne.s32.totalorder %s233, %s234
      %p248 = scmp.eq.s32.totalorder %s42, 1
      %p249 = por %p247, %p248
      %p251 = scmp.ne.s32.totalorder %s234, %s250
      %p252 = scmp.eq.s32.totalorder %s42, 0
      %p253 = por %p251, %p252
      %s254 = ssub.s32 %s44, %s51
      %p255 = scmp.eq.s32.totalorder %s254, 0
      %s257 = sadd.s32 %s256, 1
      %s258 = scalar_select %p255, %s256, %s257
      %p261 = pneg %p255
      %p262 = scmp.eq.s32.totalorder %s36, 1
      %p263 = por %p261, %p262
      %p264 = scmp.ne.s32.totalorder %s256, %s259
      %p265 = scmp.eq.s32.totalorder %s36, 0
      %p266 = por %p264, %p265
      %p267 = scmp.ne.s32.totalorder %s256, %s259
      %p268 = scmp.eq.s32.totalorder %s41, 1
      %p269 = por %p267, %p268
      %p270 = scmp.ne.s32.totalorder %s259, %s260
      %p271 = scmp.eq.s32.totalorder %s41, 0
      %p272 = por %p270, %p271
      %p273 = scmp.ne.s32.totalorder %s259, %s260
      %p274 = scmp.eq.s32.totalorder %s42, 1
      %p275 = por %p273, %p274
      %p277 = scmp.ne.s32.totalorder %s260, %s276
      %p278 = scmp.eq.s32.totalorder %s42, 0
      %p279 = por %p277, %p278
      %s280 = ssub.s32 %s44, %s51
      %p281 = scmp.eq.s32.totalorder %s280, 0
      %s283 = sadd.s32 %s282, 1
      %s284 = scalar_select %p281, %s282, %s283
      %p287 = pneg %p281
      %p288 = scmp.eq.s32.totalorder %s36, 1
      %p289 = por %p287, %p288
      %p290 = scmp.ne.s32.totalorder %s282, %s285
      %p291 = scmp.eq.s32.totalorder %s36, 0
      %p292 = por %p290, %p291
      %p293 = scmp.ne.s32.totalorder %s282, %s285
      %p294 = scmp.eq.s32.totalorder %s41, 1
      %p295 = por %p293, %p294
      %p296 = scmp.ne.s32.totalorder %s285, %s286
      %p297 = scmp.eq.s32.totalorder %s41, 0
      %p298 = por %p296, %p297
      %p299 = scmp.ne.s32.totalorder %s285, %s286
      %p300 = scmp.eq.s32.totalorder %s42, 1
      %p301 = por %p299, %p300
      %p303 = scmp.ne.s32.totalorder %s286, %s302
      %p304 = scmp.eq.s32.totalorder %s42, 0
      %p305 = por %p303, %p304
      %s306 = ssub.s32 %s44, %s51
      %p307 = scmp.eq.s32.totalorder %s306, 0
      %s309 = sadd.s32 %s308, 1
      %s310 = scalar_select %p307, %s308, %s309
      %p313 = pneg %p307
      %p314 = scmp.eq.s32.totalorder %s36, 1
      %p315 = por %p313, %p314
      %p316 = scmp.ne.s32.totalorder %s308, %s311
      %p317 = scmp.eq.s32.totalorder %s36, 0
      %p318 = por %p316, %p317
      %p319 = scmp.ne.s32.totalorder %s308, %s311
      %p320 = scmp.eq.s32.totalorder %s41, 1
      %p321 = por %p319, %p320
      %p322 = scmp.ne.s32.totalorder %s311, %s312
      %p323 = scmp.eq.s32.totalorder %s41, 0
      %p324 = por %p322, %p323
      %p325 = scmp.ne.s32.totalorder %s311, %s312
      %p326 = scmp.eq.s32.totalorder %s42, 1
      %p327 = por %p325, %p326
      %p329 = scmp.ne.s32.totalorder %s312, %s328
      %p330 = scmp.eq.s32.totalorder %s42, 0
      %p331 = por %p329, %p330
      %s332 = ssub.s32 %s44, %s51
      %p333 = scmp.eq.s32.totalorder %s332, 0
      %s335 = sadd.s32 %s334, 1
      %s336 = scalar_select %p333, %s334, %s335
      %p339 = pneg %p333
      %p340 = scmp.eq.s32.totalorder %s36, 1
      %p341 = por %p339, %p340
      %p342 = scmp.ne.s32.totalorder %s334, %s337
      %p343 = scmp.eq.s32.totalorder %s36, 0
      %p344 = por %p342, %p343
      %p345 = scmp.ne.s32.totalorder %s334, %s337
      %p346 = scmp.eq.s32.totalorder %s41, 1
      %p347 = por %p345, %p346
      %p348 = scmp.ne.s32.totalorder %s337, %s338
      %p349 = scmp.eq.s32.totalorder %s41, 0
      %p350 = por %p348, %p349
      %p351 = scmp.ne.s32.totalorder %s337, %s338
      %p352 = scmp.eq.s32.totalorder %s42, 1
      %p353 = por %p351, %p352
      %p355 = scmp.ne.s32.totalorder %s338, %s354
      %p356 = scmp.eq.s32.totalorder %s42, 0
      %p357 = por %p355, %p356
      %s358 = ssub.s32 %s44, %s51
      %p359 = scmp.eq.s32.totalorder %s358, 0
      %s361 = sadd.s32 %s360, 1
      %s362 = scalar_select %p359, %s360, %s361
      %p365 = pneg %p359
      %p366 = scmp.eq.s32.totalorder %s36, 1
      %p367 = por %p365, %p366
      %p368 = scmp.ne.s32.totalorder %s360, %s363
      %p369 = scmp.eq.s32.totalorder %s36, 0
      %p370 = por %p368, %p369
      %p371 = scmp.ne.s32.totalorder %s360, %s363
      %p372 = scmp.eq.s32.totalorder %s41, 1
      %p373 = por %p371, %p372
      %p374 = scmp.ne.s32.totalorder %s363, %s364
      %p375 = scmp.eq.s32.totalorder %s41, 0
      %p376 = por %p374, %p375
      %p377 = scmp.ne.s32.totalorder %s363, %s364
      %p378 = scmp.eq.s32.totalorder %s42, 1
      %p379 = por %p377, %p378
      %p381 = scmp.ne.s32.totalorder %s364, %s380
      %p382 = scmp.eq.s32.totalorder %s42, 0
      %p383 = por %p381, %p382
      %s384 = ssub.s32 %s44, %s51
      %p385 = scmp.eq.s32.totalorder %s384, 0
      %s387 = sadd.s32 %s386, 1
      %s388 = scalar_select %p385, %s386, %s387
      %p391 = pneg %p385
      %p392 = scmp.eq.s32.totalorder %s36, 1
      %p393 = por %p391, %p392
      %p394 = scmp.ne.s32.totalorder %s386, %s389
      %p395 = scmp.eq.s32.totalorder %s36, 0
      %p396 = por %p394, %p395
      %p397 = scmp.ne.s32.totalorder %s386, %s389
      %p398 = scmp.eq.s32.totalorder %s41, 1
      %p399 = por %p397, %p398
      %p400 = scmp.ne.s32.totalorder %s389, %s390
      %p401 = scmp.eq.s32.totalorder %s41, 0
      %p402 = por %p400, %p401
      %p403 = scmp.ne.s32.totalorder %s389, %s390
      %p404 = scmp.eq.s32.totalorder %s42, 1
      %p405 = por %p403, %p404
      %p407 = scmp.ne.s32.totalorder %s390, %s406
      %p408 = scmp.eq.s32.totalorder %s42, 0
      %p409 = por %p407, %p408
      %s410 = ssub.s32 %s44, %s51
      %p411 = scmp.eq.s32.totalorder %s410, 0
      %s413 = sadd.s32 %s412, 1
      %s414 = scalar_select %p411, %s412, %s413
      %p417 = pneg %p411
      %p418 = scmp.eq.s32.totalorder %s36, 1
      %p419 = por %p417, %p418
      %p420 = scmp.ne.s32.totalorder %s412, %s415
      %p421 = scmp.eq.s32.totalorder %s36, 0
      %p422 = por %p420, %p421
      %p423 = scmp.ne.s32.totalorder %s412, %s415
      %p424 = scmp.eq.s32.totalorder %s41, 1
      %p425 = por %p423, %p424
      %p426 = scmp.ne.s32.totalorder %s415, %s416
      %p427 = scmp.eq.s32.totalorder %s41, 0
      %p428 = por %p426, %p427
      %p429 = scmp.ne.s32.totalorder %s415, %s416
      %p430 = scmp.eq.s32.totalorder %s42, 1
      %p431 = por %p429, %p430
      %p433 = scmp.ne.s32.totalorder %s416, %s432
      %p434 = scmp.eq.s32.totalorder %s42, 0
      %p435 = por %p433, %p434
      %s436 = ssub.s32 %s44, %s51
      %p437 = scmp.eq.s32.totalorder %s436, 0
      %s439 = sadd.s32 %s438, 1
      %s440 = scalar_select %p437, %s438, %s439
      %p443 = pneg %p437
      %p444 = scmp.eq.s32.totalorder %s36, 1
      %p445 = por %p443, %p444
      %p446 = scmp.ne.s32.totalorder %s438, %s441
      %p447 = scmp.eq.s32.totalorder %s36, 0
      %p448 = por %p446, %p447
      %p449 = scmp.ne.s32.totalorder %s438, %s441
      %p450 = scmp.eq.s32.totalorder %s41, 1
      %p451 = por %p449, %p450
      %p452 = scmp.ne.s32.totalorder %s441, %s442
      %p453 = scmp.eq.s32.totalorder %s41, 0
      %p454 = por %p452, %p453
      %p455 = scmp.ne.s32.totalorder %s441, %s442
      %p456 = scmp.eq.s32.totalorder %s42, 1
      %p457 = por %p455, %p456
      %p459 = scmp.ne.s32.totalorder %s442, %s458
      %p460 = scmp.eq.s32.totalorder %s42, 0
      %p461 = por %p459, %p460
      %s463 = sadd.s32 %s462, 1
      %p466 = scmp.eq.s32.totalorder %s36, 1
      %p467 = scmp.ne.s32.totalorder %s462, %s464
      %p468 = scmp.eq.s32.totalorder %s36, 0
      %p469 = por %p467, %p468
      %p470 = scmp.ne.s32.totalorder %s462, %s464
      %p471 = scmp.eq.s32.totalorder %s41, 1
      %p472 = por %p470, %p471
      %p473 = scmp.ne.s32.totalorder %s464, %s465
      %p474 = scmp.eq.s32.totalorder %s41, 0
      %p475 = por %p473, %p474
      %p476 = scmp.ne.s32.totalorder %s464, %s465
      %p477 = scmp.eq.s32.totalorder %s42, 1
      %p478 = por %p476, %p477
      %p480 = scmp.ne.s32.totalorder %s465, %s479
      %p481 = scmp.eq.s32.totalorder %s42, 0
      %p482 = por %p480, %p481
      %s484 = sadd.s32 %s483, 1
      %p487 = scmp.eq.s32.totalorder %s36, 1
      %p488 = scmp.ne.s32.totalorder %s483, %s485
      %p489 = scmp.eq.s32.totalorder %s36, 0
      %p490 = por %p488, %p489
      %p491 = scmp.ne.s32.totalorder %s483, %s485
      %p492 = scmp.eq.s32.totalorder %s41, 1
      %p493 = por %p491, %p492
      %p494 = scmp.ne.s32.totalorder %s485, %s486
      %p495 = scmp.eq.s32.totalorder %s41, 0
      %p496 = por %p494, %p495
      %p497 = scmp.ne.s32.totalorder %s485, %s486
      %p498 = scmp.eq.s32.totalorder %s42, 1
      %p499 = por %p497, %p498
      %p501 = scmp.ne.s32.totalorder %s486, %s500
      %p502 = scmp.eq.s32.totalorder %s42, 0
      %p503 = por %p501, %p502
      %s504 = ssub.s32 %s43, %s55
      %p505 = scmp.eq.s32.totalorder %s504, 0
      %s507 = sadd.s32 %s506, 1
      %s508 = scalar_select %p505, %s506, %s507
      %p511 = pneg %p505
      %p512 = scmp.eq.s32.totalorder %s36, 1
      %p513 = por %p511, %p512
      %p514 = scmp.ne.s32.totalorder %s506, %s509
      %p515 = scmp.eq.s32.totalorder %s36, 0
      %p516 = por %p514, %p515
      %p517 = scmp.ne.s32.totalorder %s506, %s509
      %p518 = scmp.eq.s32.totalorder %s41, 1
      %p519 = por %p517, %p518
      %p520 = scmp.ne.s32.totalorder %s509, %s510
      %p521 = scmp.eq.s32.totalorder %s41, 0
      %p522 = por %p520, %p521
      %p523 = scmp.ne.s32.totalorder %s509, %s510
      %p524 = scmp.eq.s32.totalorder %s42, 1
      %p525 = por %p523, %p524
      %p527 = scmp.ne.s32.totalorder %s510, %s526
      %p528 = scmp.eq.s32.totalorder %s42, 0
      %p529 = por %p527, %p528
      %p530 = scmp.le.s32.totalorder 1, %s36
      %p531 = scmp.lt.s32.totalorder %s36, 3
      %p532 = pnand %p530, %p531
      %p533 = pneg %p532
      // Predicated region
      $region9: #{tpu_custom_call.1} parent=5 // pred_check
        _
      $region10: #{tpu_custom_call.1} parent=5 // pred_check_branch
        %535 = sbr.rel (%p532) target = $region12
      $region11: #{tpu_custom_call.1} parent=5 // pred_region
        %s536 = ssub.s32 %s36, 1
        // Predicated region
        $region13: #{tpu_custom_call.1} parent=11 // pred_check
          %p537 = pneg %p74
        $region14: #{tpu_custom_call.1} parent=11 // pred_check_branch
          %539 = sbr.rel (%p537) target = $region16
        $region15: #{tpu_custom_call.1} parent=11 // pred_region
          %s540 = smul.u32 4, %s45
          %s542 = ssub.s32 512, 512
          %543 = vsyncadd [#allocation6], %s542
          %s544 = smul.addr %s540, 128
          %s545 = scalar_lea.hbm %s0, %s544
          %s546 = sshll.u32 [#allocation5], 4
          %s547 = int_to_ptr.vmem [resolvable:$true] %s546
          %552 = dma.hbm_to_vmem [thread:$0]  %s545, 512, %s547, [#allocation6], 128, 128, 8
        $region16: #{tpu_custom_call.1} parent=11 // pred_fallthru
          _
        // Predicated region
        $region17: #{tpu_custom_call.1} parent=11 // pred_check
          %p553 = pneg %p100
        $region18: #{tpu_custom_call.1} parent=11 // pred_check_branch
          %555 = sbr.rel (%p553) target = $region20
        $region19: #{tpu_custom_call.1} parent=11 // pred_region
          %s556 = smul.u32 2, %s45
          %p557 = scmp.lt.s32.totalorder %s556, 1
          %s558 = scalar_select %p557, %s556, 1
          %s559 = scalar_lea.vmem %s1, %s558
          %s560 = smul.u32 2, %s45
        $region20: #{tpu_custom_call.1} parent=11 // pred_fallthru
          _
        // Predicated region
        $region21: #{tpu_custom_call.1} parent=11 // pred_check
          %p561 = pneg %p121
        $region22: #{tpu_custom_call.1} parent=11 // pred_check_branch
          %563 = sbr.rel (%p561) target = $region24
        $region23: #{tpu_custom_call.1} parent=11 // pred_region
          %s565 = ssub.s32 16, 16
          %566 = vsyncadd [#allocation9], %s565
          %s568 = sshll.u32 [#allocation8], 4
          %s569 = int_to_ptr.vmem [resolvable:$true] %s568
          %571 = dma.hbm_to_vmem [thread:$0]  %s2, 16, %s569, [#allocation9]
        $region24: #{tpu_custom_call.1} parent=11 // pred_fallthru
          _
        // Predicated region
        $region25: #{tpu_custom_call.1} parent=11 // pred_check
          %p572 = pneg %p142
        $region26: #{tpu_custom_call.1} parent=11 // pred_check_branch
          %574 = sbr.rel (%p572) target = $region28
        $region27: #{tpu_custom_call.1} parent=11 // pred_region
          %s576 = ssub.s32 16, 16
          %577 = vsyncadd [#allocation9], %s576
          %s579 = sshll.u32 [#allocation10], 4
          %s580 = int_to_ptr.vmem [resolvable:$true] %s579
          %582 = dma.hbm_to_vmem [thread:$0]  %s3, 16, %s580, [#allocation9]
        $region28: #{tpu_custom_call.1} parent=11 // pred_fallthru
          _
        // Predicated region
        $region29: #{tpu_custom_call.1} parent=11 // pred_check
          %p583 = pneg %p475
        $region30: #{tpu_custom_call.1} parent=11 // pred_check_branch
          %585 = sbr.rel (%p583) target = $region32
        $region31: #{tpu_custom_call.1} parent=11 // pred_region
          _
        $region32: #{tpu_custom_call.1} parent=11 // pred_fallthru
          _
        // Predicated region
        $region33: #{tpu_custom_call.1} parent=11 // pred_check
          %p586 = pneg %p496
        $region34: #{tpu_custom_call.1} parent=11 // pred_check_branch
          %588 = sbr.rel (%p586) target = $region36
        $region35: #{tpu_custom_call.1} parent=11 // pred_region
          _
        $region36: #{tpu_custom_call.1} parent=11 // pred_fallthru
          _
      $region12: #{tpu_custom_call.1} parent=5 // pred_fallthru
        _
      %p589 = scmp.lt.s32.totalorder %s36, 2
      // Predicated region
      $region37: #{tpu_custom_call.1} parent=5 // pred_check
        %p590 = pneg %p589
      $region38: #{tpu_custom_call.1} parent=5 // pred_check_branch
        %592 = sbr.rel (%p590) target = $region40
      $region39: #{tpu_custom_call.1} parent=5 // pred_region
        // Predicated region
        $region41: #{tpu_custom_call.1} parent=39 // pred_check
          %p593 = pneg %p162
        $region42: #{tpu_custom_call.1} parent=39 // pred_check_branch
          %595 = sbr.rel (%p593) target = $region44
        $region43: #{tpu_custom_call.1} parent=39 // pred_region
          %p596 = scmp.lt.s32.totalorder %s44, 1
          %s597 = scalar_select %p596, %s44, 1
          %s598 = smul.addr %s597, 16
          %s599 = smul.addr %s598, 4
          %s600 = scalar_lea.vmem %s4, %s599
        $region44: #{tpu_custom_call.1} parent=39 // pred_fallthru
          _
        // Predicated region
        $region45: #{tpu_custom_call.1} parent=39 // pred_check
          %p601 = pneg %p188
        $region46: #{tpu_custom_call.1} parent=39 // pred_check_branch
          %603 = sbr.rel (%p601) target = $region48
        $region47: #{tpu_custom_call.1} parent=39 // pred_region
          %s604 = sand.u32 %s36, 1
          %s605 = scalar_lea.sflag [#allocation12], %s604
          %s606 = sand.u32 %s178, 1
          %s607 = smul.addr %s606, 2
          %s608 = scalar_lea.vmem [#allocation11], %s607
          %s610 = ssub.s32 32, 32
          %611 = vsyncadd %s605, %s610
          %s612 = smul.addr %s44, 2
          %s613 = smul.addr %s612, 16
          %s614 = scalar_lea.hbm %s5, %s613
          %s616 = sshll.u32 %s608, 4
          %s617 = int_to_ptr.vmem [resolvable:$true] %s616
          %619 = dma.hbm_to_vmem [thread:$0]  %s614, 32, %s617, %s605
        $region48: #{tpu_custom_call.1} parent=39 // pred_fallthru
          _
        // Predicated region
        $region49: #{tpu_custom_call.1} parent=39 // pred_check
          %p620 = pneg %p214
        $region50: #{tpu_custom_call.1} parent=39 // pred_check_branch
          %622 = sbr.rel (%p620) target = $region52
        $region51: #{tpu_custom_call.1} parent=39 // pred_region
          %p623 = scmp.lt.s32.totalorder %s44, 1
          %s624 = scalar_select %p623, %s44, 1
          %s625 = smul.addr %s624, 8
          %s626 = smul.addr %s625, 4
          %s627 = scalar_lea.vmem %s6, %s626
        $region52: #{tpu_custom_call.1} parent=39 // pred_fallthru
          _
        // Predicated region
        $region53: #{tpu_custom_call.1} parent=39 // pred_check
          %p628 = pneg %p240
        $region54: #{tpu_custom_call.1} parent=39 // pred_check_branch
          %630 = sbr.rel (%p628) target = $region56
        $region55: #{tpu_custom_call.1} parent=39 // pred_region
          %s631 = sand.u32 %s36, 1
          %s632 = scalar_lea.sflag [#allocation12], %s631
          %s633 = sand.u32 %s230, 1
          %s634 = scalar_lea.vmem [#allocation13], %s633
          %s636 = ssub.s32 16, 16
          %637 = vsyncadd %s632, %s636
          %s638 = smul.addr %s44, 16
          %s639 = scalar_lea.hbm %s7, %s638
          %s641 = sshll.u32 %s634, 4
          %s642 = int_to_ptr.vmem [resolvable:$true] %s641
          %644 = dma.hbm_to_vmem [thread:$0]  %s639, 16, %s642, %s632
        $region56: #{tpu_custom_call.1} parent=39 // pred_fallthru
          _
        // Predicated region
        $region57: #{tpu_custom_call.1} parent=39 // pred_check
          %p645 = pneg %p266
        $region58: #{tpu_custom_call.1} parent=39 // pred_check_branch
          %647 = sbr.rel (%p645) target = $region60
        $region59: #{tpu_custom_call.1} parent=39 // pred_region
          %s648 = sand.u32 %s36, 1
          %s649 = scalar_lea.sflag [#allocation15], %s648
          %s650 = sand.u32 %s256, 1
          %s651 = scalar_lea.vmem [#allocation14], %s650
          %s653 = ssub.s32 16, 16
          %654 = vsyncadd %s649, %s653
          %s655 = smul.addr %s44, 16
          %s656 = scalar_lea.hbm %s8, %s655
          %s658 = sshll.u32 %s651, 4
          %s659 = int_to_ptr.vmem [resolvable:$true] %s658
          %661 = dma.hbm_to_vmem [thread:$0]  %s656, 16, %s659, %s649
        $region60: #{tpu_custom_call.1} parent=39 // pred_fallthru
          _
        // Predicated region
        $region61: #{tpu_custom_call.1} parent=39 // pred_check
          %p662 = pneg %p292
        $region62: #{tpu_custom_call.1} parent=39 // pred_check_branch
          %664 = sbr.rel (%p662) target = $region64
        $region63: #{tpu_custom_call.1} parent=39 // pred_region
          %s665 = sand.u32 %s36, 1
          %s666 = scalar_lea.sflag [#allocation15], %s665
          %s667 = sand.u32 %s282, 1
          %s668 = scalar_lea.vmem [#allocation16], %s667
          %s670 = ssub.s32 16, 16
          %671 = vsyncadd %s666, %s670
          %s672 = smul.addr %s44, 16
          %s673 = scalar_lea.hbm %s9, %s672
          %s675 = sshll.u32 %s668, 4
          %s676 = int_to_ptr.vmem [resolvable:$true] %s675
          %678 = dma.hbm_to_vmem [thread:$0]  %s673, 16, %s676, %s666
        $region64: #{tpu_custom_call.1} parent=39 // pred_fallthru
          _
        // Predicated region
        $region65: #{tpu_custom_call.1} parent=39 // pred_check
          %p679 = pneg %p318
        $region66: #{tpu_custom_call.1} parent=39 // pred_check_branch
          %681 = sbr.rel (%p679) target = $region68
        $region67: #{tpu_custom_call.1} parent=39 // pred_region
          %s682 = sand.u32 %s308, 1
          %s683 = scalar_lea.sflag [#allocation18], %s682
          %s684 = sand.u32 %s308, 1
          %s685 = smul.addr %s684, 32
          %s686 = scalar_lea.vmem [#allocation17], %s685
          %s688 = ssub.s32 512, 512
          %689 = vsyncadd %s683, %s688
          %s690 = smul.addr %s44, 8
          %s691 = smul.addr %s690, 64
          %s692 = scalar_lea.hbm %s10, %s691
          %s693 = sshll.u32 %s686, 4
          %s694 = int_to_ptr.vmem [resolvable:$true] %s693
          %699 = dma.hbm_to_vmem [thread:$0]  %s692, 512, %s694, %s683, 64, 64, 4
        $region68: #{tpu_custom_call.1} parent=39 // pred_fallthru
          _
        // Predicated region
        $region69: #{tpu_custom_call.1} parent=39 // pred_check
          %p700 = pneg %p344
        $region70: #{tpu_custom_call.1} parent=39 // pred_check_branch
          %702 = sbr.rel (%p700) target = $region72
        $region71: #{tpu_custom_call.1} parent=39 // pred_region
          %p703 = scmp.lt.s32.totalorder %s44, 1
          %s704 = scalar_select %p703, %s44, 1
          %s705 = scalar_lea.vmem %s11, %s704
        $region72: #{tpu_custom_call.1} parent=39 // pred_fallthru
          _
        // Predicated region
        $region73: #{tpu_custom_call.1} parent=39 // pred_check
          %p706 = pneg %p370
        $region74: #{tpu_custom_call.1} parent=39 // pred_check_branch
          %708 = sbr.rel (%p706) target = $region76
        $region75: #{tpu_custom_call.1} parent=39 // pred_region
          %p709 = scmp.lt.s32.totalorder %s44, 1
          %s710 = scalar_select %p709, %s44, 1
          %s711 = smul.addr %s710, 16
          %s712 = smul.addr %s711, 4
          %s713 = scalar_lea.vmem %s12, %s712
        $region76: #{tpu_custom_call.1} parent=39 // pred_fallthru
          _
        // Predicated region
        $region77: #{tpu_custom_call.1} parent=39 // pred_check
          %p714 = pneg %p396
        $region78: #{tpu_custom_call.1} parent=39 // pred_check_branch
          %716 = sbr.rel (%p714) target = $region80
        $region79: #{tpu_custom_call.1} parent=39 // pred_region
          %p717 = scmp.lt.s32.totalorder %s44, 1
          %s718 = scalar_select %p717, %s44, 1
          %s719 = scalar_lea.vmem %s13, %s718
        $region80: #{tpu_custom_call.1} parent=39 // pred_fallthru
          _
        // Predicated region
        $region81: #{tpu_custom_call.1} parent=39 // pred_check
          %p720 = pneg %p422
        $region82: #{tpu_custom_call.1} parent=39 // pred_check_branch
          %722 = sbr.rel (%p720) target = $region84
        $region83: #{tpu_custom_call.1} parent=39 // pred_region
          %p723 = scmp.lt.s32.totalorder %s44, 1
          %s724 = scalar_select %p723, %s44, 1
          %s725 = scalar_lea.vmem %s14, %s724
        $region84: #{tpu_custom_call.1} parent=39 // pred_fallthru
          _
        // Predicated region
        $region85: #{tpu_custom_call.1} parent=39 // pred_check
          %p726 = pneg %p448
        $region86: #{tpu_custom_call.1} parent=39 // pred_check_branch
          %728 = sbr.rel (%p726) target = $region88
        $region87: #{tpu_custom_call.1} parent=39 // pred_region
          %p729 = scmp.lt.s32.totalorder %s44, 1
          %s730 = scalar_select %p729, %s44, 1
          %s731 = scalar_lea.vmem %s15, %s730
        $region88: #{tpu_custom_call.1} parent=39 // pred_fallthru
          _
      $region40: #{tpu_custom_call.1} parent=5 // pred_fallthru
        _
      %p732 = scmp.le.s32.totalorder 1, %s36
      %p733 = scmp.lt.s32.totalorder %s36, 3
      %p734 = pnand %p732, %p733
      %p735 = pneg %p734
      // Predicated region
      $region89: #{tpu_custom_call.1} parent=5 // pred_check
        _
      $region90: #{tpu_custom_call.1} parent=5 // pred_check_branch
        %737 = sbr.rel (%p734) target = $region92
      $region91: #{tpu_custom_call.1} parent=5 // pred_region
        %s738 = ssub.s32 %s36, 1
        // Predicated region
        $region93: #{tpu_custom_call.1} parent=91 // pred_check
          %p739 = pneg %p74
        $region94: #{tpu_custom_call.1} parent=91 // pred_check_branch
          %741 = sbr.rel (%p739) target = $region96
        $region95: #{tpu_custom_call.1} parent=91 // pred_region
          %742 = dma.done [#allocation6], 512
        $region96: #{tpu_custom_call.1} parent=91 // pred_fallthru
          _
        // Predicated region
        $region97: #{tpu_custom_call.1} parent=91 // pred_check
          %p743 = pneg %p121
        $region98: #{tpu_custom_call.1} parent=91 // pred_check_branch
          %745 = sbr.rel (%p743) target = $region100
        $region99: #{tpu_custom_call.1} parent=91 // pred_region
          %746 = dma.done [#allocation9], 16
        $region100: #{tpu_custom_call.1} parent=91 // pred_fallthru
          _
        // Predicated region
        $region101: #{tpu_custom_call.1} parent=91 // pred_check
          %p747 = pneg %p142
        $region102: #{tpu_custom_call.1} parent=91 // pred_check_branch
          %749 = sbr.rel (%p747) target = $region104
        $region103: #{tpu_custom_call.1} parent=91 // pred_region
          %750 = dma.done [#allocation9], 16
        $region104: #{tpu_custom_call.1} parent=91 // pred_fallthru
          _
        %s751 = sand.u32 %s41, 1
        %s752 = scalar_lea.sflag [#allocation12], %s751
        %s753 = sand.u32 %s181, 1
        %s754 = smul.addr %s753, 2
        %s755 = scalar_lea.vmem [#allocation11], %s754
        // Predicated region
        $region105: #{tpu_custom_call.1} parent=91 // pred_check
          %p756 = pneg %p194
        $region106: #{tpu_custom_call.1} parent=91 // pred_check_branch
          %758 = sbr.rel (%p756) target = $region108
        $region107: #{tpu_custom_call.1} parent=91 // pred_region
          %759 = dma.done %s752, 32
        $region108: #{tpu_custom_call.1} parent=91 // pred_fallthru
          _
        %s760 = sand.u32 %s41, 1
        %s761 = scalar_lea.sflag [#allocation12], %s760
        %s762 = sand.u32 %s233, 1
        %s763 = scalar_lea.vmem [#allocation13], %s762
        // Predicated region
        $region109: #{tpu_custom_call.1} parent=91 // pred_check
          %p764 = pneg %p246
        $region110: #{tpu_custom_call.1} parent=91 // pred_check_branch
          %766 = sbr.rel (%p764) target = $region112
        $region111: #{tpu_custom_call.1} parent=91 // pred_region
          %767 = dma.done %s761, 16
        $region112: #{tpu_custom_call.1} parent=91 // pred_fallthru
          _
        %s768 = sand.u32 %s41, 1
        %s769 = scalar_lea.sflag [#allocation15], %s768
        %s770 = sand.u32 %s259, 1
        %s771 = scalar_lea.vmem [#allocation14], %s770
        // Predicated region
        $region113: #{tpu_custom_call.1} parent=91 // pred_check
          %p772 = pneg %p272
        $region114: #{tpu_custom_call.1} parent=91 // pred_check_branch
          %774 = sbr.rel (%p772) target = $region116
        $region115: #{tpu_custom_call.1} parent=91 // pred_region
          %775 = dma.done %s769, 16
        $region116: #{tpu_custom_call.1} parent=91 // pred_fallthru
          _
        %s776 = sand.u32 %s41, 1
        %s777 = scalar_lea.sflag [#allocation15], %s776
        %s778 = sand.u32 %s285, 1
        %s779 = scalar_lea.vmem [#allocation16], %s778
        // Predicated region
        $region117: #{tpu_custom_call.1} parent=91 // pred_check
          %p780 = pneg %p298
        $region118: #{tpu_custom_call.1} parent=91 // pred_check_branch
          %782 = sbr.rel (%p780) target = $region120
        $region119: #{tpu_custom_call.1} parent=91 // pred_region
          %783 = dma.done %s777, 16
        $region120: #{tpu_custom_call.1} parent=91 // pred_fallthru
          _
        %s784 = sand.u32 %s311, 1
        %s785 = scalar_lea.sflag [#allocation18], %s784
        %s786 = sand.u32 %s311, 1
        %s787 = smul.addr %s786, 32
        %s788 = scalar_lea.vmem [#allocation17], %s787
        // Predicated region
        $region121: #{tpu_custom_call.1} parent=91 // pred_check
          %p789 = pneg %p324
        $region122: #{tpu_custom_call.1} parent=91 // pred_check_branch
          %791 = sbr.rel (%p789) target = $region124
        $region123: #{tpu_custom_call.1} parent=91 // pred_region
          %792 = dma.done %s785, 512
        $region124: #{tpu_custom_call.1} parent=91 // pred_fallthru
          _
        %p793 = pneg %p74
        %p794 = pneg %p71
        %s795 = smul.u32 2, %s45
        %p796 = scmp.lt.s32.totalorder %s795, 1
        %s797 = scalar_select %p796, %s795, 1
        %s798 = scalar_lea.vmem %s1, %s797
        %p799 = pneg %p100
        %p800 = pneg %p97
        %p801 = pneg %p121
        %p802 = pneg %p118
        %p803 = pneg %p142
        %p804 = pneg %p139
        %p805 = scmp.lt.s32.totalorder %s46, 1
        %s806 = scalar_select %p805, %s46, 1
        %s807 = smul.addr %s806, 16
        %s808 = smul.addr %s807, 4
        %s809 = scalar_lea.vmem %s4, %s808
        %p810 = pneg %p168
        %p811 = pneg %p165
        %s812 = sand.u32 %s41, 1
        %s813 = scalar_lea.sflag [#allocation12], %s812
        %s814 = sand.u32 %s181, 1
        %s815 = smul.addr %s814, 2
        %s816 = scalar_lea.vmem [#allocation11], %s815
        %p817 = pneg %p194
        %p818 = pneg %p191
        %p819 = scmp.lt.s32.totalorder %s46, 1
        %s820 = scalar_select %p819, %s46, 1
        %s821 = smul.addr %s820, 8
        %s822 = smul.addr %s821, 4
        %s823 = scalar_lea.vmem %s6, %s822
        %p824 = pneg %p220
        %p825 = pneg %p217
        %s826 = sand.u32 %s41, 1
        %s827 = scalar_lea.sflag [#allocation12], %s826
        %s828 = sand.u32 %s233, 1
        %s829 = scalar_lea.vmem [#allocation13], %s828
        %p830 = pneg %p246
        %p831 = pneg %p243
        %s832 = sand.u32 %s41, 1
        %s833 = scalar_lea.sflag [#allocation15], %s832
        %s834 = sand.u32 %s259, 1
        %s835 = scalar_lea.vmem [#allocation14], %s834
        %p836 = pneg %p272
        %p837 = pneg %p269
        %s838 = sand.u32 %s41, 1
        %s839 = scalar_lea.sflag [#allocation15], %s838
        %s840 = sand.u32 %s285, 1
        %s841 = scalar_lea.vmem [#allocation16], %s840
        %p842 = pneg %p298
        %p843 = pneg %p295
        %s844 = sand.u32 %s311, 1
        %s845 = scalar_lea.sflag [#allocation18], %s844
        %s846 = sand.u32 %s311, 1
        %s847 = smul.addr %s846, 32
        %s848 = scalar_lea.vmem [#allocation17], %s847
        %p849 = pneg %p324
        %p850 = pneg %p321
        %p851 = scmp.lt.s32.totalorder %s46, 1
        %s852 = scalar_select %p851, %s46, 1
        %s853 = scalar_lea.vmem %s11, %s852
        %p854 = pneg %p350
        %p855 = pneg %p347
        %p856 = scmp.lt.s32.totalorder %s46, 1
        %s857 = scalar_select %p856, %s46, 1
        %s858 = smul.addr %s857, 16
        %s859 = smul.addr %s858, 4
        %s860 = scalar_lea.vmem %s12, %s859
        %p861 = pneg %p376
        %p862 = pneg %p373
        %p863 = scmp.lt.s32.totalorder %s46, 1
        %s864 = scalar_select %p863, %s46, 1
        %s865 = scalar_lea.vmem %s13, %s864
        %p866 = pneg %p402
        %p867 = pneg %p399
        %p868 = scmp.lt.s32.totalorder %s46, 1
        %s869 = scalar_select %p868, %s46, 1
        %s870 = scalar_lea.vmem %s14, %s869
        %p871 = pneg %p428
        %p872 = pneg %p425
        %p873 = scmp.lt.s32.totalorder %s46, 1
        %s874 = scalar_select %p873, %s46, 1
        %s875 = scalar_lea.vmem %s15, %s874
        %p876 = pneg %p454
        %p877 = pneg %p451
        %p878 = pneg %p475
        %p879 = pneg %p472
        %p880 = pneg %p496
        %p881 = pneg %p493
        %p882 = pneg %p522
        %p883 = pneg %p519
        %s884 = smul.u32 4, %s45
        %s885 = smul.u32 2, %s45
        %p886 = scmp.lt.s32.totalorder %s885, 1
        %s887 = scalar_select %p886, %s885, 1
        %s888 = scalar_lea.vmem %s1, %s887
        %s889 = smul.u32 2, %s45
        %p890 = scmp.lt.s32.totalorder %s46, 1
        %s891 = scalar_select %p890, %s46, 1
        %s892 = smul.addr %s891, 16
        %s893 = smul.addr %s892, 4
        %s894 = scalar_lea.vmem %s4, %s893
        %p895 = scmp.lt.s32.totalorder %s46, 1
        %s896 = scalar_select %p895, %s46, 1
        %s897 = smul.addr %s896, 8
        %s898 = smul.addr %s897, 4
        %s899 = scalar_lea.vmem %s6, %s898
        %p900 = scmp.lt.s32.totalorder %s46, 1
        %s901 = scalar_select %p900, %s46, 1
        %s902 = scalar_lea.vmem %s11, %s901
        %p903 = scmp.lt.s32.totalorder %s46, 1
        %s904 = scalar_select %p903, %s46, 1
        %s905 = smul.addr %s904, 16
        %s906 = smul.addr %s905, 4
        %s907 = scalar_lea.vmem %s12, %s906
        %p908 = scmp.lt.s32.totalorder %s46, 1
        %s909 = scalar_select %p908, %s46, 1
        %s910 = scalar_lea.vmem %s13, %s909
        %p911 = scmp.lt.s32.totalorder %s46, 1
        %s912 = scalar_select %p911, %s46, 1
        %s913 = scalar_lea.vmem %s14, %s912
        %p914 = scmp.lt.s32.totalorder %s46, 1
        %s915 = scalar_select %p914, %s46, 1
        %s916 = scalar_lea.vmem %s15, %s915
        %s917 = smul.u32 4, %s45
        %p919 = scmp.eq.s32.totalorder %s46, 0
        // Predicated region
        $region125: #{tpu_custom_call.1} parent=91 // pred_check
          %p920 = pneg %p919
        $region126: #{tpu_custom_call.1} parent=91 // pred_check_branch
          %922 = sbr.rel (%p920) target = $region128
        $region127: #{tpu_custom_call.1} parent=91 // pred_region
          %v923 = vld [vmem:[#allocation5] sm:$0xff]
          %v924 = vld [vmem:[#allocation5 + $0x8] sm:$0xff]
          %v925 = vld [vmem:[#allocation5 + $0x10] sm:$0xff]
          %v926 = vld [vmem:[#allocation5 + $0x18] sm:$0xff]
          %v927 = vld [vmem:[#allocation8] sm:$0x1]
          %v928 = vld [vmem:[#allocation10] sm:$0x1]
          %vm929 = vcmask 523264
          %v930 = vsel %vm929, %v923, 0.0
          %931 = vadd.xlane.f32.xlu0 %v930
          %v932 = vpop.xlane.xlu0 %931
          %v933 = vsel %vm929, %v924, 0.0
          %934 = vadd.xlane.f32.xlu0 %v933
          %v935 = vpop.xlane.xlu0 %934
          %v936 = vsel %vm929, %v925, 0.0
          %937 = vadd.xlane.f32.xlu0 %v936
          %v938 = vpop.xlane.xlu0 %937
          %v939 = vsel %vm929, %v926, 0.0
          %940 = vadd.xlane.f32.xlu0 %v939
          %v941 = vpop.xlane.xlu0 %940
          %v942 = vrcp.pop 64.0
          %v943 = vmul.f32 %v932, %v942
          %v944 = vmul.f32 %v935, %v942
          %v945 = vmul.f32 %v938, %v942
          %v946 = vmul.f32 %v941, %v942
          %v947 = vsub.f32 %v923, %v943
          %v948 = vsub.f32 %v924, %v944
          %v949 = vsub.f32 %v925, %v945
          %v950 = vsub.f32 %v926, %v946
          %v951 = vmul.f32 %v947, %v947
          %v952 = vmul.f32 %v948, %v948
          %v953 = vmul.f32 %v949, %v949
          %v954 = vmul.f32 %v950, %v950
          %v955 = vsel %vm929, %v951, 0.0
          %956 = vadd.xlane.f32.xlu0 %v955
          %v957 = vpop.xlane.xlu0 %956
          %v958 = vsel %vm929, %v952, 0.0
          %959 = vadd.xlane.f32.xlu0 %v958
          %v960 = vpop.xlane.xlu0 %959
          %v961 = vsel %vm929, %v953, 0.0
          %962 = vadd.xlane.f32.xlu0 %v961
          %v963 = vpop.xlane.xlu0 %962
          %v964 = vsel %vm929, %v954, 0.0
          %965 = vadd.xlane.f32.xlu0 %v964
          %v966 = vpop.xlane.xlu0 %965
          %v967 = vmul.f32 %v957, %v942
          %v968 = vmul.f32 %v960, %v942
          %v969 = vmul.f32 %v963, %v942
          %v970 = vmul.f32 %v966, %v942
          %v971 = vadd.f32 %v967, 1e-12
          %v972 = vadd.f32 %v968, 1e-12
          %v973 = vadd.f32 %v969, 1e-12
          %v974 = vadd.f32 %v970, 1e-12
          %v975 = vrsqrt.pop %v971
          %v976 = vrsqrt.pop %v972
          %v977 = vrsqrt.pop %v973
          %v978 = vrsqrt.pop %v974
          %v979 = vmul.f32 %v947, %v975
          %v980 = vmul.f32 %v948, %v976
          %v981 = vmul.f32 %v949, %v977
          %v982 = vmul.f32 %v950, %v978
          %v984 = vlaneseq
          %v985 = vshrl.u32 %v984, 7
          %v986 = vsub.s32 0, %v985
          %v987 = vrot.slane %v927, %v986
          %v989 = vmul.f32 %v979, %v987
          %v990 = vmul.f32 %v980, %v987
          %v991 = vmul.f32 %v981, %v987
          %v992 = vmul.f32 %v982, %v987
          %v994 = vlaneseq
          %v995 = vshrl.u32 %v994, 7
          %v996 = vsub.s32 0, %v995
          %v997 = vrot.slane %v928, %v996
          %v999 = vadd.f32 %v989, %v997
          %v1000 = vadd.f32 %v990, %v997
          %v1001 = vadd.f32 %v991, %v997
          %v1002 = vadd.f32 %v992, %v997
          %1003 = vst.msk [vmem:[#allocation2] sm:$0xff] %vm929, %v999
          %1004 = vst.msk [vmem:[#allocation2 + $0x8] sm:$0xff] %vm929, %v1000
          %1005 = vst.msk [vmem:[#allocation2 + $0x10] sm:$0xff] %vm929, %v1001
          %1006 = vst.msk [vmem:[#allocation2 + $0x18] sm:$0xff] %vm929, %v1002
        $region128: #{tpu_custom_call.1} parent=91 // pred_fallthru
          _
        %v1007 = vld [vmem:[#allocation2] sm:$0xff]
        %v1008 = vld [vmem:[#allocation2 + $0x8] sm:$0xff]
        %v1009 = vld [vmem:[#allocation2 + $0x10] sm:$0xff]
        %v1010 = vld [vmem:[#allocation2 + $0x18] sm:$0xff]
        %v1011 = vpack.c.bf16 %v1008, %v1007
        %v1012 = vpack.c.bf16 %v1010, %v1009
        %v1013 = vld [vmem:[%s894] sm:$0xff]
        %v1014 = vld [vmem:[%s894 + $0x8] sm:$0xff]
        %v1015 = vld [vmem:[%s894 + $0x10] sm:$0xff]
        %v1016 = vld [vmem:[%s894 + $0x18] sm:$0xff]
        %v1017 = vld [vmem:[%s894 + $0x20] sm:$0xff]
        %v1018 = vld [vmem:[%s894 + $0x28] sm:$0xff]
        %v1019 = vld [vmem:[%s894 + $0x30] sm:$0xff]
        %v1020 = vld [vmem:[%s894 + $0x38] sm:$0xff]
        %v1021 = vld [vmem:[%s755] sm:$0x3]
        %v1023 = vlaneseq
        %v1024 = vshrl.u32 %v1023, 7
        %v1025 = vsub.s32 0, %v1024
        %v1026 = vrot.slane %v1021, %v1025
        %v1027 = vlaneseq
        %v1028 = vshrl.u32 %v1027, 7
        %v1029 = vsub.s32 1, %v1028
        %v1030 = vrot.slane %v1021, %v1029
        %v1041 = vunpack.c.l.b16 %v1013
        %v1042 = vunpack.c.h.b16 %v1013
        %v1043 = vunpack.c.l.b16 %v1014
        %v1044 = vunpack.c.h.b16 %v1014
        %v1045 = vunpack.c.l.b16 %v1015
        %v1046 = vunpack.c.h.b16 %v1015
        %v1047 = vunpack.c.l.b16 %v1016
        %v1048 = vunpack.c.h.b16 %v1016
        %v1049 = vunpack.c.l.b16 %v1017
        %v1050 = vunpack.c.h.b16 %v1017
        %v1051 = vunpack.c.l.b16 %v1018
        %v1052 = vunpack.c.h.b16 %v1018
        %v1053 = vunpack.c.l.b16 %v1019
        %v1054 = vunpack.c.h.b16 %v1019
        %v1055 = vunpack.c.l.b16 %v1020
        %v1056 = vunpack.c.h.b16 %v1020
        %v1057 = vpack.c.b16 %v1043, %v1041
        %v1058 = vpack.c.b16 %v1044, %v1042
        %v1059 = vpack.c.b16 %v1047, %v1045
        %v1060 = vpack.c.b16 %v1048, %v1046
        %v1061 = vpack.c.b16 %v1051, %v1049
        %v1062 = vpack.c.b16 %v1052, %v1050
        %v1063 = vpack.c.b16 %v1055, %v1053
        %v1064 = vpack.c.b16 %v1056, %v1054
        %vm1073 = vcmask 523264
        %v1075 = vsel %vm1073, %v1011, 0
        %v1078 = vsel %vm1073, %v1012, 0
        %1080 = vmatprep.subr.bf16.mxu0 %v1058
        %1081 = vmatpush1.bf16.msra.mxu0 %v1057
        %1082 = vmatprep.subr.bf16.mxu0 %v1060
        %1083 = vmatpush1.bf16.msra.mxu0 %v1059
        %1084 = vmatprep.subr.bf16.mxu0 %v1062
        %1085 = vmatpush1.bf16.msra.mxu0 %v1061
        %1086 = vmatprep.subr.bf16.mxu0 %v1064
        %1087 = vmatpush1.bf16.msra.mxu0 %v1063
        %1088 = vmatprep.subr.bf16.mxu0 0
        %1089 = vmatpush1.bf16.msra.mxu0 0
        %1090 = vmatprep.subr.bf16.mxu0 0
        %1091 = vmatpush1.bf16.msra.mxu0 0
        %1092 = vmatprep.subr.bf16.mxu0 0
        %1093 = vmatpush1.bf16.msra.mxu0 0
        %1094 = vmatprep.subr.bf16.mxu0 0
        %1095 = vmatpush1.bf16.msra.mxu0 0
        %1096 = vmatprep.subr.bf16.mxu0 0
        %1097 = vmatpush1.bf16.msra.mxu0 0
        %1098 = vmatprep.subr.bf16.mxu0 0
        %1099 = vmatpush1.bf16.msra.mxu0 0
        %1100 = vmatprep.subr.bf16.mxu0 0
        %1101 = vmatpush1.bf16.msra.mxu0 0
        %1102 = vmatprep.subr.bf16.mxu0 0
        %1103 = vmatpush1.bf16.msra.mxu0 0
        %1104 = vmatprep.subr.bf16.mxu0 0
        %1105 = vmatpush1.bf16.msra.mxu0 0
        %1106 = vmatprep.subr.bf16.mxu0 0
        %1107 = vmatpush1.bf16.msra.mxu0 0
        %1108 = vmatprep.subr.bf16.mxu0 0
        %1109 = vmatpush1.bf16.msra.mxu0 0
        %1110 = vmatprep.subr.bf16.mxu0 0
        %1111 = vmatpush1.bf16.msra.mxu0 0
        %1112 = vmatprep.mubr.bf16.mxu0 0
        %1113 = vmatmul.mubr.bf16.gmra.mrb[0].mxu0 %v1075
        %v1114 = vpop.f32.mrb[0].mxu0
        %v1115 = vadd.f32 %v1026, %v1114
        %v1116 = vpop.f32.mrb[0].mxu0
        %v1117 = vadd.f32 %v1030, %v1116
        %v1118 = vpop.f32.mrb[0].mxu0
        %v1119 = vadd.f32 %v1026, %v1118
        %v1120 = vpop.f32.mrb[0].mxu0
        %v1121 = vadd.f32 %v1030, %v1120
        %1122 = vmatprep.mubr.bf16.mxu0 0
        %1123 = vmatmul.mubr.bf16.gmra.mrb[0].mxu0 %v1078
        %v1124 = vpop.f32.mrb[0].mxu0
        %v1125 = vadd.f32 %v1026, %v1124
        %v1126 = vpop.f32.mrb[0].mxu0
        %v1127 = vadd.f32 %v1030, %v1126
        %v1128 = vpop.f32.mrb[0].mxu0
        %v1129 = vadd.f32 %v1026, %v1128
        %v1130 = vpop.f32.mrb[0].mxu0
        %v1131 = vadd.f32 %v1030, %v1130
        %1132 = vdwg.mxu0
        %v1133 = vpack.c.bf16 %v1119, %v1115
        %v1134 = vpack.c.bf16 %v1121, %v1117
        %v1135 = vpack.c.bf16 %v1129, %v1125
        %v1136 = vpack.c.bf16 %v1131, %v1127
        %1137 = vst [vmem:[#allocation3] sm:$0xff] %v1133
        %1138 = vst.msk [vmem:[#allocation3 + $0x8] sm:$0xff] %vm1073, %v1134
        %1139 = vst [vmem:[#allocation3 + $0x10] sm:$0xff] %v1135
        %1140 = vst.msk [vmem:[#allocation3 + $0x18] sm:$0xff] %vm1073, %v1136
        %v1141 = vld [vmem:[%s888] sm:$0x1]
        %v1142 = vld [vmem:[#allocation3] sm:$0xff]
        %v1143 = vld [vmem:[#allocation3 + $0x8] sm:$0xff]
        %v1145 = vlaneseq
        %v1146 = vshrl.u32 %v1145, 7
        %v1147 = vsub.s32 0, %v1146
        %v1148 = vrot.slane %v1141, %v1147
        %1151 = vrot.lane.b32.xlu0 %v1142, 64
        %v1152 = vpop.permute.xlu0 %1151
        %vm1153 = vcmask 130048
        %v1155 = vsel %vm1153, %v1142, 0
        %v1158 = vsel %vm1153, %v1152, 0
        %1160 = vmatprep.subr.bf16.mxu0 0
        %1161 = vmatpush1.bf16.xpose.msra.mxu0 %v1158
        %1162 = vmatprep.subr.bf16.mxu0 0
        %1163 = vmatpush1.bf16.xpose.msra.mxu0 0
        %1164 = vmatprep.subr.bf16.mxu0 0
        %1165 = vmatpush1.bf16.xpose.msra.mxu0 0
        %1166 = vmatprep.subr.bf16.mxu0 0
        %1167 = vmatpush1.bf16.xpose.msra.mxu0 0
        %1168 = vmatprep.subr.bf16.mxu0 0
        %1169 = vmatpush1.bf16.xpose.msra.mxu0 0
        %1170 = vmatprep.subr.bf16.mxu0 0
        %1171 = vmatpush1.bf16.xpose.msra.mxu0 0
        %1172 = vmatprep.subr.bf16.mxu0 0
        %1173 = vmatpush1.bf16.xpose.msra.mxu0 0
        %1174 = vmatprep.subr.bf16.mxu0 0
        %1175 = vmatpush1.bf16.xpose.msra.mxu0 0
        %1176 = vmatprep.subr.bf16.mxu0 0
        %1177 = vmatpush1.bf16.xpose.msra.mxu0 0
        %1178 = vmatprep.subr.bf16.mxu0 0
        %1179 = vmatpush1.bf16.xpose.msra.mxu0 0
        %1180 = vmatprep.subr.bf16.mxu0 0
        %1181 = vmatpush1.bf16.xpose.msra.mxu0 0
        %1182 = vmatprep.subr.bf16.mxu0 0
        %1183 = vmatpush1.bf16.xpose.msra.mxu0 0
        %1184 = vmatprep.subr.bf16.mxu0 0
        %1185 = vmatpush1.bf16.xpose.msra.mxu0 0
        %1186 = vmatprep.subr.bf16.mxu0 0
        %1187 = vmatpush1.bf16.xpose.msra.mxu0 0
        %1188 = vmatprep.subr.bf16.mxu0 0
        %1189 = vmatpush1.bf16.xpose.msra.mxu0 0
        %1190 = vmatprep.subr.bf16.mxu0 0
        %1191 = vmatpush1.bf16.xpose.msra.mxu0 0
        %1192 = vmatprep.mubr.bf16.mxu0 0
        %1193 = vmatmul.mubr.bf16.gmra.mrb[0].mxu0 %v1155
        %v1194 = vpop.f32.mrb[0].mxu0
        %v1195 = vadd.f32 %v1148, %v1194
        %v1196 = vpop.f32.mrb[0].mxu0
        %v1197 = vpop.f32.mrb[0].mxu0
        %v1198 = vadd.f32 %v1148, %v1197
        %v1199 = vpop.f32.mrb[0].mxu0
        %1200 = vdwg.mxu0
        %v1201 = vsel %vm1153, %v1195, -inf
        %1202 = vmax.xlane.f32.xlu0 %v1201
        %v1203 = vpop.xlane.xlu0 %1202
        %v1204 = vsel %vm1153, %v1198, -inf
        %1205 = vmax.xlane.f32.xlu0 %v1204
        %v1206 = vpop.xlane.xlu0 %1205
        %v1207 = vsub.f32 %v1195, %v1203
        %v1208 = vsub.f32 %v1198, %v1206
        %v1209 = vmul.f32 %v1207, 1.442695
        %v1210 = vpow.pop %v1209
        %v1211 = vmul.f32 %v1208, 1.442695
        %v1212 = vpow.pop %v1211
        %v1213 = vsel %vm1153, %v1210, 0.0
        %1214 = vadd.xlane.f32.xlu0 %v1213
        %v1215 = vpop.xlane.xlu0 %1214
        %v1216 = vsel %vm1153, %v1212, 0.0
        %1217 = vadd.xlane.f32.xlu0 %v1216
        %v1218 = vpop.xlane.xlu0 %1217
        %v1219 = vrcp.pop %v1215
        %v1220 = vrcp.pop %v1218
        %v1221 = vmul.f32 %v1210, %v1219
        %v1222 = vmul.f32 %v1212, %v1220
        %v1223 = vpack.c.bf16 %v1222, %v1221
        %v1225 = vsel %vm1153, %v1223, 0
        %1227 = vmatprep.subr.bf16.mxu0 0
        %1228 = vmatpush1.bf16.msra.mxu0 %v1143
        %1229 = vmatprep.subr.bf16.mxu0 0
        %1230 = vmatpush1.bf16.msra.mxu0 0
        %1231 = vmatprep.subr.bf16.mxu0 0
        %1232 = vmatpush1.bf16.msra.mxu0 0
        %1233 = vmatprep.subr.bf16.mxu0 0
        %1234 = vmatpush1.bf16.msra.mxu0 0
        %1235 = vmatprep.subr.bf16.mxu0 0
        %1236 = vmatpush1.bf16.msra.mxu0 0
        %1237 = vmatprep.subr.bf16.mxu0 0
        %1238 = vmatpush1.bf16.msra.mxu0 0
        %1239 = vmatprep.subr.bf16.mxu0 0
        %1240 = vmatpush1.bf16.msra.mxu0 0
        %1241 = vmatprep.subr.bf16.mxu0 0
        %1242 = vmatpush1.bf16.msra.mxu0 0
        %1243 = vmatprep.subr.bf16.mxu0 0
        %1244 = vmatpush1.bf16.msra.mxu0 0
        %1245 = vmatprep.subr.bf16.mxu0 0
        %1246 = vmatpush1.bf16.msra.mxu0 0
        %1247 = vmatprep.subr.bf16.mxu0 0
        %1248 = vmatpush1.bf16.msra.mxu0 0
        %1249 = vmatprep.subr.bf16.mxu0 0
        %1250 = vmatpush1.bf16.msra.mxu0 0
        %1251 = vmatprep.subr.bf16.mxu0 0
        %1252 = vmatpush1.bf16.msra.mxu0 0
        %1253 = vmatprep.subr.bf16.mxu0 0
        %1254 = vmatpush1.bf16.msra.mxu0 0
        %1255 = vmatprep.subr.bf16.mxu0 0
        %1256 = vmatpush1.bf16.msra.mxu0 0
        %1257 = vmatprep.subr.bf16.mxu0 0
        %1258 = vmatpush1.bf16.msra.mxu0 0
        %1259 = vmatprep.mubr.bf16.mxu0 0
        %1260 = vmatmul.mubr.bf16.gmra.mrb[0].mxu0 %v1225
        %v1261 = vpop.f32.mrb[0].mxu0
        %v1262 = vadd.f32 0.0, %v1261
        %v1263 = vpop.f32.mrb[0].mxu0
        %v1264 = vpop.f32.mrb[0].mxu0
        %v1265 = vadd.f32 0.0, %v1264
        %v1266 = vpop.f32.mrb[0].mxu0
        %1267 = vdwg.mxu0
        %1268 = vst.msk [vmem:[#allocation4] sm:$0xff] %vm1153, %v1262
        %1269 = vst.msk [vmem:[#allocation4 + $0x8] sm:$0xff] %vm1153, %v1265
        %v1270 = vld [vmem:[#allocation3] sm:$0xff]
        %v1271 = vld [vmem:[#allocation3 + $0x8] sm:$0xff]
        %1273 = vrot.lane.b32.xlu0 %v1270, 112
        %v1274 = vpop.permute.xlu0 %1273
        %1275 = vrot.lane.b32.xlu0 %v1270, 48
        %v1276 = vpop.permute.xlu0 %1275
        %v1278 = vsel %vm1153, %v1274, 0
        %v1281 = vsel %vm1153, %v1276, 0
        %1283 = vmatprep.subr.bf16.mxu0 0
        %1284 = vmatpush1.bf16.xpose.msra.mxu0 %v1281
        %1285 = vmatprep.subr.bf16.mxu0 0
        %1286 = vmatpush1.bf16.xpose.msra.mxu0 0
        %1287 = vmatprep.subr.bf16.mxu0 0
        %1288 = vmatpush1.bf16.xpose.msra.mxu0 0
        %1289 = vmatprep.subr.bf16.mxu0 0
        %1290 = vmatpush1.bf16.xpose.msra.mxu0 0
        %1291 = vmatprep.subr.bf16.mxu0 0
        %1292 = vmatpush1.bf16.xpose.msra.mxu0 0
        %1293 = vmatprep.subr.bf16.mxu0 0
        %1294 = vmatpush1.bf16.xpose.msra.mxu0 0
        %1295 = vmatprep.subr.bf16.mxu0 0
        %1296 = vmatpush1.bf16.xpose.msra.mxu0 0
        %1297 = vmatprep.subr.bf16.mxu0 0
        %1298 = vmatpush1.bf16.xpose.msra.mxu0 0
        %1299 = vmatprep.subr.bf16.mxu0 0
        %1300 = vmatpush1.bf16.xpose.msra.mxu0 0
        %1301 = vmatprep.subr.bf16.mxu0 0
        %1302 = vmatpush1.bf16.xpose.msra.mxu0 0
        %1303 = vmatprep.subr.bf16.mxu0 0
        %1304 = vmatpush1.bf16.xpose.msra.mxu0 0
        %1305 = vmatprep.subr.bf16.mxu0 0
        %1306 = vmatpush1.bf16.xpose.msra.mxu0 0
        %1307 = vmatprep.subr.bf16.mxu0 0
        %1308 = vmatpush1.bf16.xpose.msra.mxu0 0
        %1309 = vmatprep.subr.bf16.mxu0 0
        %1310 = vmatpush1.bf16.xpose.msra.mxu0 0
        %1311 = vmatprep.subr.bf16.mxu0 0
        %1312 = vmatpush1.bf16.xpose.msra.mxu0 0
        %1313 = vmatprep.subr.bf16.mxu0 0
        %1314 = vmatpush1.bf16.xpose.msra.mxu0 0
        %1315 = vmatprep.mubr.bf16.mxu0 0
        %1316 = vmatmul.mubr.bf16.gmra.mrb[0].mxu0 %v1278
        %v1317 = vpop.f32.mrb[0].mxu0
        %v1318 = vadd.f32 %v1148, %v1317
        %v1319 = vpop.f32.mrb[0].mxu0
        %v1320 = vpop.f32.mrb[0].mxu0
        %v1321 = vadd.f32 %v1148, %v1320
        %v1322 = vpop.f32.mrb[0].mxu0
        %1323 = vdwg.mxu0
        %v1324 = vsel %vm1153, %v1318, -inf
        %1325 = vmax.xlane.f32.xlu0 %v1324
        %v1326 = vpop.xlane.xlu0 %1325
        %v1327 = vsel %vm1153, %v1321, -inf
        %1328 = vmax.xlane.f32.xlu0 %v1327
        %v1329 = vpop.xlane.xlu0 %1328
        %v1330 = vsub.f32 %v1318, %v1326
        %v1331 = vsub.f32 %v1321, %v1329
        %v1332 = vmul.f32 %v1330, 1.442695
        %v1333 = vpow.pop %v1332
        %v1334 = vmul.f32 %v1331, 1.442695
        %v1335 = vpow.pop %v1334
        %v1336 = vsel %vm1153, %v1333, 0.0
        %1337 = vadd.xlane.f32.xlu0 %v1336
        %v1338 = vpop.xlane.xlu0 %1337
        %v1339 = vsel %vm1153, %v1335, 0.0
        %1340 = vadd.xlane.f32.xlu0 %v1339
        %v1341 = vpop.xlane.xlu0 %1340
        %v1342 = vrcp.pop %v1338
        %v1343 = vrcp.pop %v1341
        %v1344 = vmul.f32 %v1333, %v1342
        %v1345 = vmul.f32 %v1335, %v1343
        %v1346 = vpack.c.bf16 %v1345, %v1344
        %1348 = vrot.lane.b32.xlu0 %v1271, 112
        %v1349 = vpop.permute.xlu0 %1348
        %v1352 = vsel %vm1153, %v1346, 0
        %1354 = vmatprep.subr.bf16.mxu0 0
        %1355 = vmatpush1.bf16.msra.mxu0 %v1349
        %1356 = vmatprep.subr.bf16.mxu0 0
        %1357 = vmatpush1.bf16.msra.mxu0 0
        %1358 = vmatprep.subr.bf16.mxu0 0
        %1359 = vmatpush1.bf16.msra.mxu0 0
        %1360 = vmatprep.subr.bf16.mxu0 0
        %1361 = vmatpush1.bf16.msra.mxu0 0
        %1362 = vmatprep.subr.bf16.mxu0 0
        %1363 = vmatpush1.bf16.msra.mxu0 0
        %1364 = vmatprep.subr.bf16.mxu0 0
        %1365 = vmatpush1.bf16.msra.mxu0 0
        %1366 = vmatprep.subr.bf16.mxu0 0
        %1367 = vmatpush1.bf16.msra.mxu0 0
        %1368 = vmatprep.subr.bf16.mxu0 0
        %1369 = vmatpush1.bf16.msra.mxu0 0
        %1370 = vmatprep.subr.bf16.mxu0 0
        %1371 = vmatpush1.bf16.msra.mxu0 0
        %1372 = vmatprep.subr.bf16.mxu0 0
        %1373 = vmatpush1.bf16.msra.mxu0 0
        %1374 = vmatprep.subr.bf16.mxu0 0
        %1375 = vmatpush1.bf16.msra.mxu0 0
        %1376 = vmatprep.subr.bf16.mxu0 0
        %1377 = vmatpush1.bf16.msra.mxu0 0
        %1378 = vmatprep.subr.bf16.mxu0 0
        %1379 = vmatpush1.bf16.msra.mxu0 0
        %1380 = vmatprep.subr.bf16.mxu0 0
        %1381 = vmatpush1.bf16.msra.mxu0 0
        %1382 = vmatprep.subr.bf16.mxu0 0
        %1383 = vmatpush1.bf16.msra.mxu0 0
        %1384 = vmatprep.subr.bf16.mxu0 0
        %1385 = vmatpush1.bf16.msra.mxu0 0
        %1386 = vmatprep.mubr.bf16.mxu0 0
        %1387 = vmatmul.mubr.bf16.gmra.mrb[0].mxu0 %v1352
        %v1388 = vpop.f32.mrb[0].mxu0
        %v1389 = vadd.f32 0.0, %v1388
        %v1390 = vpop.f32.mrb[0].mxu0
        %v1391 = vpop.f32.mrb[0].mxu0
        %v1392 = vadd.f32 0.0, %v1391
        %v1393 = vpop.f32.mrb[0].mxu0
        %1394 = vdwg.mxu0
        %1397 = vrot.lane.b32.xlu0 %v1389, 16
        %v1398 = vpop.permute.xlu0 %1397
        %1399 = vrot.lane.b32.xlu0 %v1392, 16
        %v1400 = vpop.permute.xlu0 %1399
        %vm1403 = vcmask 261248
        %1404 = vst.msk [vmem:[#allocation4] sm:$0xff] %vm1403, %v1398
        %1405 = vst.msk [vmem:[#allocation4 + $0x8] sm:$0xff] %vm1403, %v1400
        %v1406 = vld [vmem:[#allocation3] sm:$0xff]
        %v1407 = vld [vmem:[#allocation3 + $0x8] sm:$0xff]
        %1409 = vrot.lane.b32.xlu0 %v1406, 96
        %v1410 = vpop.permute.xlu0 %1409
        %1411 = vrot.lane.b32.xlu0 %v1406, 32
        %v1412 = vpop.permute.xlu0 %1411
        %v1414 = vsel %vm1153, %v1410, 0
        %v1417 = vsel %vm1153, %v1412, 0
        %1419 = vmatprep.subr.bf16.mxu0 0
        %1420 = vmatpush1.bf16.xpose.msra.mxu0 %v1417
        %1421 = vmatprep.subr.bf16.mxu0 0
        %1422 = vmatpush1.bf16.xpose.msra.mxu0 0
        %1423 = vmatprep.subr.bf16.mxu0 0
        %1424 = vmatpush1.bf16.xpose.msra.mxu0 0
        %1425 = vmatprep.subr.bf16.mxu0 0
        %1426 = vmatpush1.bf16.xpose.msra.mxu0 0
        %1427 = vmatprep.subr.bf16.mxu0 0
        %1428 = vmatpush1.bf16.xpose.msra.mxu0 0
        %1429 = vmatprep.subr.bf16.mxu0 0
        %1430 = vmatpush1.bf16.xpose.msra.mxu0 0
        %1431 = vmatprep.subr.bf16.mxu0 0
        %1432 = vmatpush1.bf16.xpose.msra.mxu0 0
        %1433 = vmatprep.subr.bf16.mxu0 0
        %1434 = vmatpush1.bf16.xpose.msra.mxu0 0
        %1435 = vmatprep.subr.bf16.mxu0 0
        %1436 = vmatpush1.bf16.xpose.msra.mxu0 0
        %1437 = vmatprep.subr.bf16.mxu0 0
        %1438 = vmatpush1.bf16.xpose.msra.mxu0 0
        %1439 = vmatprep.subr.bf16.mxu0 0
        %1440 = vmatpush1.bf16.xpose.msra.mxu0 0
        %1441 = vmatprep.subr.bf16.mxu0 0
        %1442 = vmatpush1.bf16.xpose.msra.mxu0 0
        %1443 = vmatprep.subr.bf16.mxu0 0
        %1444 = vmatpush1.bf16.xpose.msra.mxu0 0
        %1445 = vmatprep.subr.bf16.mxu0 0
        %1446 = vmatpush1.bf16.xpose.msra.mxu0 0
        %1447 = vmatprep.subr.bf16.mxu0 0
        %1448 = vmatpush1.bf16.xpose.msra.mxu0 0
        %1449 = vmatprep.subr.bf16.mxu0 0
        %1450 = vmatpush1.bf16.xpose.msra.mxu0 0
        %1451 = vmatprep.mubr.bf16.mxu0 0
        %1452 = vmatmul.mubr.bf16.gmra.mrb[0].mxu0 %v1414
        %v1453 = vpop.f32.mrb[0].mxu0
        %v1454 = vadd.f32 %v1148, %v1453
        %v1455 = vpop.f32.mrb[0].mxu0
        %v1456 = vpop.f32.mrb[0].mxu0
        %v1457 = vadd.f32 %v1148, %v1456
        %v1458 = vpop.f32.mrb[0].mxu0
        %1459 = vdwg.mxu0
        %v1460 = vsel %vm1153, %v1454, -inf
        %1461 = vmax.xlane.f32.xlu0 %v1460
        %v1462 = vpop.xlane.xlu0 %1461
        %v1463 = vsel %vm1153, %v1457, -inf
        %1464 = vmax.xlane.f32.xlu0 %v1463
        %v1465 = vpop.xlane.xlu0 %1464
        %v1466 = vsub.f32 %v1454, %v1462
        %v1467 = vsub.f32 %v1457, %v1465
        %v1468 = vmul.f32 %v1466, 1.442695
        %v1469 = vpow.pop %v1468
        %v1470 = vmul.f32 %v1467, 1.442695
        %v1471 = vpow.pop %v1470
        %v1472 = vsel %vm1153, %v1469, 0.0
        %1473 = vadd.xlane.f32.xlu0 %v1472
        %v1474 = vpop.xlane.xlu0 %1473
        %v1475 = vsel %vm1153, %v1471, 0.0
        %1476 = vadd.xlane.f32.xlu0 %v1475
        %v1477 = vpop.xlane.xlu0 %1476
        %v1478 = vrcp.pop %v1474
        %v1479 = vrcp.pop %v1477
        %v1480 = vmul.f32 %v1469, %v1478
        %v1481 = vmul.f32 %v1471, %v1479
        %v1482 = vpack.c.bf16 %v1481, %v1480
        %1484 = vrot.lane.b32.xlu0 %v1407, 96
        %v1485 = vpop.permute.xlu0 %1484
        %v1488 = vsel %vm1153, %v1482, 0
        %1490 = vmatprep.subr.bf16.mxu0 0
        %1491 = vmatpush1.bf16.msra.mxu0 %v1485
        %1492 = vmatprep.subr.bf16.mxu0 0
        %1493 = vmatpush1.bf16.msra.mxu0 0
        %1494 = vmatprep.subr.bf16.mxu0 0
        %1495 = vmatpush1.bf16.msra.mxu0 0
        %1496 = vmatprep.subr.bf16.mxu0 0
        %1497 = vmatpush1.bf16.msra.mxu0 0
        %1498 = vmatprep.subr.bf16.mxu0 0
        %1499 = vmatpush1.bf16.msra.mxu0 0
        %1500 = vmatprep.subr.bf16.mxu0 0
        %1501 = vmatpush1.bf16.msra.mxu0 0
        %1502 = vmatprep.subr.bf16.mxu0 0
        %1503 = vmatpush1.bf16.msra.mxu0 0
        %1504 = vmatprep.subr.bf16.mxu0 0
        %1505 = vmatpush1.bf16.msra.mxu0 0
        %1506 = vmatprep.subr.bf16.mxu0 0
        %1507 = vmatpush1.bf16.msra.mxu0 0
        %1508 = vmatprep.subr.bf16.mxu0 0
        %1509 = vmatpush1.bf16.msra.mxu0 0
        %1510 = vmatprep.subr.bf16.mxu0 0
        %1511 = vmatpush1.bf16.msra.mxu0 0
        %1512 = vmatprep.subr.bf16.mxu0 0
        %1513 = vmatpush1.bf16.msra.mxu0 0
        %1514 = vmatprep.subr.bf16.mxu0 0
        %1515 = vmatpush1.bf16.msra.mxu0 0
        %1516 = vmatprep.subr.bf16.mxu0 0
        %1517 = vmatpush1.bf16.msra.mxu0 0
        %1518 = vmatprep.subr.bf16.mxu0 0
        %1519 = vmatpush1.bf16.msra.mxu0 0
        %1520 = vmatprep.subr.bf16.mxu0 0
        %1521 = vmatpush1.bf16.msra.mxu0 0
        %1522 = vmatprep.mubr.bf16.mxu0 0
        %1523 = vmatmul.mubr.bf16.gmra.mrb[0].mxu0 %v1488
        %v1524 = vpop.f32.mrb[0].mxu0
        %v1525 = vadd.f32 0.0, %v1524
        %v1526 = vpop.f32.mrb[0].mxu0
        %v1527 = vpop.f32.mrb[0].mxu0
        %v1528 = vadd.f32 0.0, %v1527
        %v1529 = vpop.f32.mrb[0].mxu0
        %1530 = vdwg.mxu0
        %1533 = vrot.lane.b32.xlu0 %v1525, 32
        %v1534 = vpop.permute.xlu0 %1533
        %1535 = vrot.lane.b32.xlu0 %v1528, 32
        %v1536 = vpop.permute.xlu0 %1535
        %vm1539 = vcmask 392448
        %1540 = vst.msk [vmem:[#allocation4] sm:$0xff] %vm1539, %v1534
        %1541 = vst.msk [vmem:[#allocation4 + $0x8] sm:$0xff] %vm1539, %v1536
        %v1542 = vld [vmem:[#allocation3] sm:$0xff]
        %v1543 = vld [vmem:[#allocation3 + $0x8] sm:$0xff]
        %1545 = vrot.lane.b32.xlu0 %v1542, 80
        %v1546 = vpop.permute.xlu0 %1545
        %1547 = vrot.lane.b32.xlu0 %v1542, 16
        %v1548 = vpop.permute.xlu0 %1547
        %v1550 = vsel %vm1153, %v1546, 0
        %v1553 = vsel %vm1153, %v1548, 0
        %1555 = vmatprep.subr.bf16.mxu0 0
        %1556 = vmatpush1.bf16.xpose.msra.mxu0 %v1553
        %1557 = vmatprep.subr.bf16.mxu0 0
        %1558 = vmatpush1.bf16.xpose.msra.mxu0 0
        %1559 = vmatprep.subr.bf16.mxu0 0
        %1560 = vmatpush1.bf16.xpose.msra.mxu0 0
        %1561 = vmatprep.subr.bf16.mxu0 0
        %1562 = vmatpush1.bf16.xpose.msra.mxu0 0
        %1563 = vmatprep.subr.bf16.mxu0 0
        %1564 = vmatpush1.bf16.xpose.msra.mxu0 0
        %1565 = vmatprep.subr.bf16.mxu0 0
        %1566 = vmatpush1.bf16.xpose.msra.mxu0 0
        %1567 = vmatprep.subr.bf16.mxu0 0
        %1568 = vmatpush1.bf16.xpose.msra.mxu0 0
        %1569 = vmatprep.subr.bf16.mxu0 0
        %1570 = vmatpush1.bf16.xpose.msra.mxu0 0
        %1571 = vmatprep.subr.bf16.mxu0 0
        %1572 = vmatpush1.bf16.xpose.msra.mxu0 0
        %1573 = vmatprep.subr.bf16.mxu0 0
        %1574 = vmatpush1.bf16.xpose.msra.mxu0 0
        %1575 = vmatprep.subr.bf16.mxu0 0
        %1576 = vmatpush1.bf16.xpose.msra.mxu0 0
        %1577 = vmatprep.subr.bf16.mxu0 0
        %1578 = vmatpush1.bf16.xpose.msra.mxu0 0
        %1579 = vmatprep.subr.bf16.mxu0 0
        %1580 = vmatpush1.bf16.xpose.msra.mxu0 0
        %1581 = vmatprep.subr.bf16.mxu0 0
        %1582 = vmatpush1.bf16.xpose.msra.mxu0 0
        %1583 = vmatprep.subr.bf16.mxu0 0
        %1584 = vmatpush1.bf16.xpose.msra.mxu0 0
        %1585 = vmatprep.subr.bf16.mxu0 0
        %1586 = vmatpush1.bf16.xpose.msra.mxu0 0
        %1587 = vmatprep.mubr.bf16.mxu0 0
        %1588 = vmatmul.mubr.bf16.gmra.mrb[0].mxu0 %v1550
        %v1589 = vpop.f32.mrb[0].mxu0
        %v1590 = vadd.f32 %v1148, %v1589
        %v1591 = vpop.f32.mrb[0].mxu0
        %v1592 = vpop.f32.mrb[0].mxu0
        %v1593 = vadd.f32 %v1148, %v1592
        %v1594 = vpop.f32.mrb[0].mxu0
        %1595 = vdwg.mxu0
        %v1596 = vsel %vm1153, %v1590, -inf
        %1597 = vmax.xlane.f32.xlu0 %v1596
        %v1598 = vpop.xlane.xlu0 %1597
        %v1599 = vsel %vm1153, %v1593, -inf
        %1600 = vmax.xlane.f32.xlu0 %v1599
        %v1601 = vpop.xlane.xlu0 %1600
        %v1602 = vsub.f32 %v1590, %v1598
        %v1603 = vsub.f32 %v1593, %v1601
        %v1604 = vmul.f32 %v1602, 1.442695
        %v1605 = vpow.pop %v1604
        %v1606 = vmul.f32 %v1603, 1.442695
        %v1607 = vpow.pop %v1606
        %v1608 = vsel %vm1153, %v1605, 0.0
        %1609 = vadd.xlane.f32.xlu0 %v1608
        %v1610 = vpop.xlane.xlu0 %1609
        %v1611 = vsel %vm1153, %v1607, 0.0
        %1612 = vadd.xlane.f32.xlu0 %v1611
        %v1613 = vpop.xlane.xlu0 %1612
        %v1614 = vrcp.pop %v1610
        %v1615 = vrcp.pop %v1613
        %v1616 = vmul.f32 %v1605, %v1614
        %v1617 = vmul.f32 %v1607, %v1615
        %v1618 = vpack.c.bf16 %v1617, %v1616
        %1620 = vrot.lane.b32.xlu0 %v1543, 80
        %v1621 = vpop.permute.xlu0 %1620
        %v1624 = vsel %vm1153, %v1618, 0
        %1626 = vmatprep.subr.bf16.mxu0 0
        %1627 = vmatpush1.bf16.msra.mxu0 %v1621
        %1628 = vmatprep.subr.bf16.mxu0 0
        %1629 = vmatpush1.bf16.msra.mxu0 0
        %1630 = vmatprep.subr.bf16.mxu0 0
        %1631 = vmatpush1.bf16.msra.mxu0 0
        %1632 = vmatprep.subr.bf16.mxu0 0
        %1633 = vmatpush1.bf16.msra.mxu0 0
        %1634 = vmatprep.subr.bf16.mxu0 0
        %1635 = vmatpush1.bf16.msra.mxu0 0
        %1636 = vmatprep.subr.bf16.mxu0 0
        %1637 = vmatpush1.bf16.msra.mxu0 0
        %1638 = vmatprep.subr.bf16.mxu0 0
        %1639 = vmatpush1.bf16.msra.mxu0 0
        %1640 = vmatprep.subr.bf16.mxu0 0
        %1641 = vmatpush1.bf16.msra.mxu0 0
        %1642 = vmatprep.subr.bf16.mxu0 0
        %1643 = vmatpush1.bf16.msra.mxu0 0
        %1644 = vmatprep.subr.bf16.mxu0 0
        %1645 = vmatpush1.bf16.msra.mxu0 0
        %1646 = vmatprep.subr.bf16.mxu0 0
        %1647 = vmatpush1.bf16.msra.mxu0 0
        %1648 = vmatprep.subr.bf16.mxu0 0
        %1649 = vmatpush1.bf16.msra.mxu0 0
        %1650 = vmatprep.subr.bf16.mxu0 0
        %1651 = vmatpush1.bf16.msra.mxu0 0
        %1652 = vmatprep.subr.bf16.mxu0 0
        %1653 = vmatpush1.bf16.msra.mxu0 0
        %1654 = vmatprep.subr.bf16.mxu0 0
        %1655 = vmatpush1.bf16.msra.mxu0 0
        %1656 = vmatprep.subr.bf16.mxu0 0
        %1657 = vmatpush1.bf16.msra.mxu0 0
        %1658 = vmatprep.mubr.bf16.mxu0 0
        %1659 = vmatmul.mubr.bf16.gmra.mrb[0].mxu0 %v1624
        %v1660 = vpop.f32.mrb[0].mxu0
        %v1661 = vadd.f32 0.0, %v1660
        %v1662 = vpop.f32.mrb[0].mxu0
        %v1663 = vpop.f32.mrb[0].mxu0
        %v1664 = vadd.f32 0.0, %v1663
        %v1665 = vpop.f32.mrb[0].mxu0
        %1666 = vdwg.mxu0
        %1669 = vrot.lane.b32.xlu0 %v1661, 48
        %v1670 = vpop.permute.xlu0 %1669
        %1671 = vrot.lane.b32.xlu0 %v1664, 48
        %v1672 = vpop.permute.xlu0 %1671
        %vm1675 = vcmask 523648
        %1676 = vst.msk [vmem:[#allocation4] sm:$0xff] %vm1675, %v1670
        %1677 = vst.msk [vmem:[#allocation4 + $0x8] sm:$0xff] %vm1675, %v1672
        %s1678 = scalar_lea.vmem %s888, 1
        %v1679 = vld [vmem:[%s1678] sm:$0x1]
        %v1680 = vld [vmem:[#allocation3 + $0x10] sm:$0xff]
        %v1681 = vld [vmem:[#allocation3 + $0x18] sm:$0xff]
        %v1683 = vlaneseq
        %v1684 = vshrl.u32 %v1683, 7
        %v1685 = vsub.s32 0, %v1684
        %v1686 = vrot.slane %v1679, %v1685
        %1689 = vrot.lane.b32.xlu0 %v1680, 64
        %v1690 = vpop.permute.xlu0 %1689
        %v1692 = vsel %vm1153, %v1680, 0
        %v1695 = vsel %vm1153, %v1690, 0
        %1697 = vmatprep.subr.bf16.mxu0 0
        %1698 = vmatpush1.bf16.xpose.msra.mxu0 %v1695
        %1699 = vmatprep.subr.bf16.mxu0 0
        %1700 = vmatpush1.bf16.xpose.msra.mxu0 0
        %1701 = vmatprep.subr.bf16.mxu0 0
        %1702 = vmatpush1.bf16.xpose.msra.mxu0 0
        %1703 = vmatprep.subr.bf16.mxu0 0
        %1704 = vmatpush1.bf16.xpose.msra.mxu0 0
        %1705 = vmatprep.subr.bf16.mxu0 0
        %1706 = vmatpush1.bf16.xpose.msra.mxu0 0
        %1707 = vmatprep.subr.bf16.mxu0 0
        %1708 = vmatpush1.bf16.xpose.msra.mxu0 0
        %1709 = vmatprep.subr.bf16.mxu0 0
        %1710 = vmatpush1.bf16.xpose.msra.mxu0 0
        %1711 = vmatprep.subr.bf16.mxu0 0
        %1712 = vmatpush1.bf16.xpose.msra.mxu0 0
        %1713 = vmatprep.subr.bf16.mxu0 0
        %1714 = vmatpush1.bf16.xpose.msra.mxu0 0
        %1715 = vmatprep.subr.bf16.mxu0 0
        %1716 = vmatpush1.bf16.xpose.msra.mxu0 0
        %1717 = vmatprep.subr.bf16.mxu0 0
        %1718 = vmatpush1.bf16.xpose.msra.mxu0 0
        %1719 = vmatprep.subr.bf16.mxu0 0
        %1720 = vmatpush1.bf16.xpose.msra.mxu0 0
        %1721 = vmatprep.subr.bf16.mxu0 0
        %1722 = vmatpush1.bf16.xpose.msra.mxu0 0
        %1723 = vmatprep.subr.bf16.mxu0 0
        %1724 = vmatpush1.bf16.xpose.msra.mxu0 0
        %1725 = vmatprep.subr.bf16.mxu0 0
        %1726 = vmatpush1.bf16.xpose.msra.mxu0 0
        %1727 = vmatprep.subr.bf16.mxu0 0
        %1728 = vmatpush1.bf16.xpose.msra.mxu0 0
        %1729 = vmatprep.mubr.bf16.mxu0 0
        %1730 = vmatmul.mubr.bf16.gmra.mrb[0].mxu0 %v1692
        %v1731 = vpop.f32.mrb[0].mxu0
        %v1732 = vadd.f32 %v1686, %v1731
        %v1733 = vpop.f32.mrb[0].mxu0
        %v1734 = vpop.f32.mrb[0].mxu0
        %v1735 = vadd.f32 %v1686, %v1734
        %v1736 = vpop.f32.mrb[0].mxu0
        %1737 = vdwg.mxu0
        %v1738 = vsel %vm1153, %v1732, -inf
        %1739 = vmax.xlane.f32.xlu0 %v1738
        %v1740 = vpop.xlane.xlu0 %1739
        %v1741 = vsel %vm1153, %v1735, -inf
        %1742 = vmax.xlane.f32.xlu0 %v1741
        %v1743 = vpop.xlane.xlu0 %1742
        %v1744 = vsub.f32 %v1732, %v1740
        %v1745 = vsub.f32 %v1735, %v1743
        %v1746 = vmul.f32 %v1744, 1.442695
        %v1747 = vpow.pop %v1746
        %v1748 = vmul.f32 %v1745, 1.442695
        %v1749 = vpow.pop %v1748
        %v1750 = vsel %vm1153, %v1747, 0.0
        %1751 = vadd.xlane.f32.xlu0 %v1750
        %v1752 = vpop.xlane.xlu0 %1751
        %v1753 = vsel %vm1153, %v1749, 0.0
        %1754 = vadd.xlane.f32.xlu0 %v1753
        %v1755 = vpop.xlane.xlu0 %1754
        %v1756 = vrcp.pop %v1752
        %v1757 = vrcp.pop %v1755
        %v1758 = vmul.f32 %v1747, %v1756
        %v1759 = vmul.f32 %v1749, %v1757
        %v1760 = vpack.c.bf16 %v1759, %v1758
        %v1762 = vsel %vm1153, %v1760, 0
        %1764 = vmatprep.subr.bf16.mxu0 0
        %1765 = vmatpush1.bf16.msra.mxu0 %v1681
        %1766 = vmatprep.subr.bf16.mxu0 0
        %1767 = vmatpush1.bf16.msra.mxu0 0
        %1768 = vmatprep.subr.bf16.mxu0 0
        %1769 = vmatpush1.bf16.msra.mxu0 0
        %1770 = vmatprep.subr.bf16.mxu0 0
        %1771 = vmatpush1.bf16.msra.mxu0 0
        %1772 = vmatprep.subr.bf16.mxu0 0
        %1773 = vmatpush1.bf16.msra.mxu0 0
        %1774 = vmatprep.subr.bf16.mxu0 0
        %1775 = vmatpush1.bf16.msra.mxu0 0
        %1776 = vmatprep.subr.bf16.mxu0 0
        %1777 = vmatpush1.bf16.msra.mxu0 0
        %1778 = vmatprep.subr.bf16.mxu0 0
        %1779 = vmatpush1.bf16.msra.mxu0 0
        %1780 = vmatprep.subr.bf16.mxu0 0
        %1781 = vmatpush1.bf16.msra.mxu0 0
        %1782 = vmatprep.subr.bf16.mxu0 0
        %1783 = vmatpush1.bf16.msra.mxu0 0
        %1784 = vmatprep.subr.bf16.mxu0 0
        %1785 = vmatpush1.bf16.msra.mxu0 0
        %1786 = vmatprep.subr.bf16.mxu0 0
        %1787 = vmatpush1.bf16.msra.mxu0 0
        %1788 = vmatprep.subr.bf16.mxu0 0
        %1789 = vmatpush1.bf16.msra.mxu0 0
        %1790 = vmatprep.subr.bf16.mxu0 0
        %1791 = vmatpush1.bf16.msra.mxu0 0
        %1792 = vmatprep.subr.bf16.mxu0 0
        %1793 = vmatpush1.bf16.msra.mxu0 0
        %1794 = vmatprep.subr.bf16.mxu0 0
        %1795 = vmatpush1.bf16.msra.mxu0 0
        %1796 = vmatprep.mubr.bf16.mxu0 0
        %1797 = vmatmul.mubr.bf16.gmra.mrb[0].mxu0 %v1762
        %v1798 = vpop.f32.mrb[0].mxu0
        %v1799 = vadd.f32 0.0, %v1798
        %v1800 = vpop.f32.mrb[0].mxu0
        %v1801 = vpop.f32.mrb[0].mxu0
        %v1802 = vadd.f32 0.0, %v1801
        %v1803 = vpop.f32.mrb[0].mxu0
        %1804 = vdwg.mxu0
        %1805 = vst.msk [vmem:[#allocation4 + $0x10] sm:$0xff] %vm1153, %v1799
        %1806 = vst.msk [vmem:[#allocation4 + $0x18] sm:$0xff] %vm1153, %v1802
        %v1807 = vld [vmem:[#allocation3 + $0x10] sm:$0xff]
        %v1808 = vld [vmem:[#allocation3 + $0x18] sm:$0xff]
        %1810 = vrot.lane.b32.xlu0 %v1807, 112
        %v1811 = vpop.permute.xlu0 %1810
        %1812 = vrot.lane.b32.xlu0 %v1807, 48
        %v1813 = vpop.permute.xlu0 %1812
        %v1815 = vsel %vm1153, %v1811, 0
        %v1818 = vsel %vm1153, %v1813, 0
        %1820 = vmatprep.subr.bf16.mxu0 0
        %1821 = vmatpush1.bf16.xpose.msra.mxu0 %v1818
        %1822 = vmatprep.subr.bf16.mxu0 0
        %1823 = vmatpush1.bf16.xpose.msra.mxu0 0
        %1824 = vmatprep.subr.bf16.mxu0 0
        %1825 = vmatpush1.bf16.xpose.msra.mxu0 0
        %1826 = vmatprep.subr.bf16.mxu0 0
        %1827 = vmatpush1.bf16.xpose.msra.mxu0 0
        %1828 = vmatprep.subr.bf16.mxu0 0
        %1829 = vmatpush1.bf16.xpose.msra.mxu0 0
        %1830 = vmatprep.subr.bf16.mxu0 0
        %1831 = vmatpush1.bf16.xpose.msra.mxu0 0
        %1832 = vmatprep.subr.bf16.mxu0 0
        %1833 = vmatpush1.bf16.xpose.msra.mxu0 0
        %1834 = vmatprep.subr.bf16.mxu0 0
        %1835 = vmatpush1.bf16.xpose.msra.mxu0 0
        %1836 = vmatprep.subr.bf16.mxu0 0
        %1837 = vmatpush1.bf16.xpose.msra.mxu0 0
        %1838 = vmatprep.subr.bf16.mxu0 0
        %1839 = vmatpush1.bf16.xpose.msra.mxu0 0
        %1840 = vmatprep.subr.bf16.mxu0 0
        %1841 = vmatpush1.bf16.xpose.msra.mxu0 0
        %1842 = vmatprep.subr.bf16.mxu0 0
        %1843 = vmatpush1.bf16.xpose.msra.mxu0 0
        %1844 = vmatprep.subr.bf16.mxu0 0
        %1845 = vmatpush1.bf16.xpose.msra.mxu0 0
        %1846 = vmatprep.subr.bf16.mxu0 0
        %1847 = vmatpush1.bf16.xpose.msra.mxu0 0
        %1848 = vmatprep.subr.bf16.mxu0 0
        %1849 = vmatpush1.bf16.xpose.msra.mxu0 0
        %1850 = vmatprep.subr.bf16.mxu0 0
        %1851 = vmatpush1.bf16.xpose.msra.mxu0 0
        %1852 = vmatprep.mubr.bf16.mxu0 0
        %1853 = vmatmul.mubr.bf16.gmra.mrb[0].mxu0 %v1815
        %v1854 = vpop.f32.mrb[0].mxu0
        %v1855 = vadd.f32 %v1686, %v1854
        %v1856 = vpop.f32.mrb[0].mxu0
        %v1857 = vpop.f32.mrb[0].mxu0
        %v1858 = vadd.f32 %v1686, %v1857
        %v1859 = vpop.f32.mrb[0].mxu0
        %1860 = vdwg.mxu0
        %v1861 = vsel %vm1153, %v1855, -inf
        %1862 = vmax.xlane.f32.xlu0 %v1861
        %v1863 = vpop.xlane.xlu0 %1862
        %v1864 = vsel %vm1153, %v1858, -inf
        %1865 = vmax.xlane.f32.xlu0 %v1864
        %v1866 = vpop.xlane.xlu0 %1865
        %v1867 = vsub.f32 %v1855, %v1863
        %v1868 = vsub.f32 %v1858, %v1866
        %v1869 = vmul.f32 %v1867, 1.442695
        %v1870 = vpow.pop %v1869
        %v1871 = vmul.f32 %v1868, 1.442695
        %v1872 = vpow.pop %v1871
        %v1873 = vsel %vm1153, %v1870, 0.0
        %1874 = vadd.xlane.f32.xlu0 %v1873
        %v1875 = vpop.xlane.xlu0 %1874
        %v1876 = vsel %vm1153, %v1872, 0.0
        %1877 = vadd.xlane.f32.xlu0 %v1876
        %v1878 = vpop.xlane.xlu0 %1877
        %v1879 = vrcp.pop %v1875
        %v1880 = vrcp.pop %v1878
        %v1881 = vmul.f32 %v1870, %v1879
        %v1882 = vmul.f32 %v1872, %v1880
        %v1883 = vpack.c.bf16 %v1882, %v1881
        %1885 = vrot.lane.b32.xlu0 %v1808, 112
        %v1886 = vpop.permute.xlu0 %1885
        %v1889 = vsel %vm1153, %v1883, 0
        %1891 = vmatprep.subr.bf16.mxu0 0
        %1892 = vmatpush1.bf16.msra.mxu0 %v1886
        %1893 = vmatprep.subr.bf16.mxu0 0
        %1894 = vmatpush1.bf16.msra.mxu0 0
        %1895 = vmatprep.subr.bf16.mxu0 0
        %1896 = vmatpush1.bf16.msra.mxu0 0
        %1897 = vmatprep.subr.bf16.mxu0 0
        %1898 = vmatpush1.bf16.msra.mxu0 0
        %1899 = vmatprep.subr.bf16.mxu0 0
        %1900 = vmatpush1.bf16.msra.mxu0 0
        %1901 = vmatprep.subr.bf16.mxu0 0
        %1902 = vmatpush1.bf16.msra.mxu0 0
        %1903 = vmatprep.subr.bf16.mxu0 0
        %1904 = vmatpush1.bf16.msra.mxu0 0
        %1905 = vmatprep.subr.bf16.mxu0 0
        %1906 = vmatpush1.bf16.msra.mxu0 0
        %1907 = vmatprep.subr.bf16.mxu0 0
        %1908 = vmatpush1.bf16.msra.mxu0 0
        %1909 = vmatprep.subr.bf16.mxu0 0
        %1910 = vmatpush1.bf16.msra.mxu0 0
        %1911 = vmatprep.subr.bf16.mxu0 0
        %1912 = vmatpush1.bf16.msra.mxu0 0
        %1913 = vmatprep.subr.bf16.mxu0 0
        %1914 = vmatpush1.bf16.msra.mxu0 0
        %1915 = vmatprep.subr.bf16.mxu0 0
        %1916 = vmatpush1.bf16.msra.mxu0 0
        %1917 = vmatprep.subr.bf16.mxu0 0
        %1918 = vmatpush1.bf16.msra.mxu0 0
        %1919 = vmatprep.subr.bf16.mxu0 0
        %1920 = vmatpush1.bf16.msra.mxu0 0
        %1921 = vmatprep.subr.bf16.mxu0 0
        %1922 = vmatpush1.bf16.msra.mxu0 0
        %1923 = vmatprep.mubr.bf16.mxu0 0
        %1924 = vmatmul.mubr.bf16.gmra.mrb[0].mxu0 %v1889
        %v1925 = vpop.f32.mrb[0].mxu0
        %v1926 = vadd.f32 0.0, %v1925
        %v1927 = vpop.f32.mrb[0].mxu0
        %v1928 = vpop.f32.mrb[0].mxu0
        %v1929 = vadd.f32 0.0, %v1928
        %v1930 = vpop.f32.mrb[0].mxu0
        %1931 = vdwg.mxu0
        %1934 = vrot.lane.b32.xlu0 %v1926, 16
        %v1935 = vpop.permute.xlu0 %1934
        %1936 = vrot.lane.b32.xlu0 %v1929, 16
        %v1937 = vpop.permute.xlu0 %1936
        %1940 = vst.msk [vmem:[#allocation4 + $0x10] sm:$0xff] %vm1403, %v1935
        %1941 = vst.msk [vmem:[#allocation4 + $0x18] sm:$0xff] %vm1403, %v1937
        %v1942 = vld [vmem:[#allocation3 + $0x10] sm:$0xff]
        %v1943 = vld [vmem:[#allocation3 + $0x18] sm:$0xff]
        %1945 = vrot.lane.b32.xlu0 %v1942, 96
        %v1946 = vpop.permute.xlu0 %1945
        %1947 = vrot.lane.b32.xlu0 %v1942, 32
        %v1948 = vpop.permute.xlu0 %1947
        %v1950 = vsel %vm1153, %v1946, 0
        %v1953 = vsel %vm1153, %v1948, 0
        %1955 = vmatprep.subr.bf16.mxu0 0
        %1956 = vmatpush1.bf16.xpose.msra.mxu0 %v1953
        %1957 = vmatprep.subr.bf16.mxu0 0
        %1958 = vmatpush1.bf16.xpose.msra.mxu0 0
        %1959 = vmatprep.subr.bf16.mxu0 0
        %1960 = vmatpush1.bf16.xpose.msra.mxu0 0
        %1961 = vmatprep.subr.bf16.mxu0 0
        %1962 = vmatpush1.bf16.xpose.msra.mxu0 0
        %1963 = vmatprep.subr.bf16.mxu0 0
        %1964 = vmatpush1.bf16.xpose.msra.mxu0 0
        %1965 = vmatprep.subr.bf16.mxu0 0
        %1966 = vmatpush1.bf16.xpose.msra.mxu0 0
        %1967 = vmatprep.subr.bf16.mxu0 0
        %1968 = vmatpush1.bf16.xpose.msra.mxu0 0
        %1969 = vmatprep.subr.bf16.mxu0 0
        %1970 = vmatpush1.bf16.xpose.msra.mxu0 0
        %1971 = vmatprep.subr.bf16.mxu0 0
        %1972 = vmatpush1.bf16.xpose.msra.mxu0 0
        %1973 = vmatprep.subr.bf16.mxu0 0
        %1974 = vmatpush1.bf16.xpose.msra.mxu0 0
        %1975 = vmatprep.subr.bf16.mxu0 0
        %1976 = vmatpush1.bf16.xpose.msra.mxu0 0
        %1977 = vmatprep.subr.bf16.mxu0 0
        %1978 = vmatpush1.bf16.xpose.msra.mxu0 0
        %1979 = vmatprep.subr.bf16.mxu0 0
        %1980 = vmatpush1.bf16.xpose.msra.mxu0 0
        %1981 = vmatprep.subr.bf16.mxu0 0
        %1982 = vmatpush1.bf16.xpose.msra.mxu0 0
        %1983 = vmatprep.subr.bf16.mxu0 0
        %1984 = vmatpush1.bf16.xpose.msra.mxu0 0
        %1985 = vmatprep.subr.bf16.mxu0 0
        %1986 = vmatpush1.bf16.xpose.msra.mxu0 0
        %1987 = vmatprep.mubr.bf16.mxu0 0
        %1988 = vmatmul.mubr.bf16.gmra.mrb[0].mxu0 %v1950
        %v1989 = vpop.f32.mrb[0].mxu0
        %v1990 = vadd.f32 %v1686, %v1989
        %v1991 = vpop.f32.mrb[0].mxu0
        %v1992 = vpop.f32.mrb[0].mxu0
        %v1993 = vadd.f32 %v1686, %v1992
        %v1994 = vpop.f32.mrb[0].mxu0
        %1995 = vdwg.mxu0
        %v1996 = vsel %vm1153, %v1990, -inf
        %1997 = vmax.xlane.f32.xlu0 %v1996
        %v1998 = vpop.xlane.xlu0 %1997
        %v1999 = vsel %vm1153, %v1993, -inf
        %2000 = vmax.xlane.f32.xlu0 %v1999
        %v2001 = vpop.xlane.xlu0 %2000
        %v2002 = vsub.f32 %v1990, %v1998
        %v2003 = vsub.f32 %v1993, %v2001
        %v2004 = vmul.f32 %v2002, 1.442695
        %v2005 = vpow.pop %v2004
        %v2006 = vmul.f32 %v2003, 1.442695
        %v2007 = vpow.pop %v2006
        %v2008 = vsel %vm1153, %v2005, 0.0
        %2009 = vadd.xlane.f32.xlu0 %v2008
        %v2010 = vpop.xlane.xlu0 %2009
        %v2011 = vsel %vm1153, %v2007, 0.0
        %2012 = vadd.xlane.f32.xlu0 %v2011
        %v2013 = vpop.xlane.xlu0 %2012
        %v2014 = vrcp.pop %v2010
        %v2015 = vrcp.pop %v2013
        %v2016 = vmul.f32 %v2005, %v2014
        %v2017 = vmul.f32 %v2007, %v2015
        %v2018 = vpack.c.bf16 %v2017, %v2016
        %2020 = vrot.lane.b32.xlu0 %v1943, 96
        %v2021 = vpop.permute.xlu0 %2020
        %v2024 = vsel %vm1153, %v2018, 0
        %2026 = vmatprep.subr.bf16.mxu0 0
        %2027 = vmatpush1.bf16.msra.mxu0 %v2021
        %2028 = vmatprep.subr.bf16.mxu0 0
        %2029 = vmatpush1.bf16.msra.mxu0 0
        %2030 = vmatprep.subr.bf16.mxu0 0
        %2031 = vmatpush1.bf16.msra.mxu0 0
        %2032 = vmatprep.subr.bf16.mxu0 0
        %2033 = vmatpush1.bf16.msra.mxu0 0
        %2034 = vmatprep.subr.bf16.mxu0 0
        %2035 = vmatpush1.bf16.msra.mxu0 0
        %2036 = vmatprep.subr.bf16.mxu0 0
        %2037 = vmatpush1.bf16.msra.mxu0 0
        %2038 = vmatprep.subr.bf16.mxu0 0
        %2039 = vmatpush1.bf16.msra.mxu0 0
        %2040 = vmatprep.subr.bf16.mxu0 0
        %2041 = vmatpush1.bf16.msra.mxu0 0
        %2042 = vmatprep.subr.bf16.mxu0 0
        %2043 = vmatpush1.bf16.msra.mxu0 0
        %2044 = vmatprep.subr.bf16.mxu0 0
        %2045 = vmatpush1.bf16.msra.mxu0 0
        %2046 = vmatprep.subr.bf16.mxu0 0
        %2047 = vmatpush1.bf16.msra.mxu0 0
        %2048 = vmatprep.subr.bf16.mxu0 0
        %2049 = vmatpush1.bf16.msra.mxu0 0
        %2050 = vmatprep.subr.bf16.mxu0 0
        %2051 = vmatpush1.bf16.msra.mxu0 0
        %2052 = vmatprep.subr.bf16.mxu0 0
        %2053 = vmatpush1.bf16.msra.mxu0 0
        %2054 = vmatprep.subr.bf16.mxu0 0
        %2055 = vmatpush1.bf16.msra.mxu0 0
        %2056 = vmatprep.subr.bf16.mxu0 0
        %2057 = vmatpush1.bf16.msra.mxu0 0
        %2058 = vmatprep.mubr.bf16.mxu0 0
        %2059 = vmatmul.mubr.bf16.gmra.mrb[0].mxu0 %v2024
        %v2060 = vpop.f32.mrb[0].mxu0
        %v2061 = vadd.f32 0.0, %v2060
        %v2062 = vpop.f32.mrb[0].mxu0
        %v2063 = vpop.f32.mrb[0].mxu0
        %v2064 = vadd.f32 0.0, %v2063
        %v2065 = vpop.f32.mrb[0].mxu0
        %2066 = vdwg.mxu0
        %2069 = vrot.lane.b32.xlu0 %v2061, 32
        %v2070 = vpop.permute.xlu0 %2069
        %2071 = vrot.lane.b32.xlu0 %v2064, 32
        %v2072 = vpop.permute.xlu0 %2071
        %2075 = vst.msk [vmem:[#allocation4 + $0x10] sm:$0xff] %vm1539, %v2070
        %2076 = vst.msk [vmem:[#allocation4 + $0x18] sm:$0xff] %vm1539, %v2072
        %v2077 = vld [vmem:[#allocation3 + $0x10] sm:$0xff]
        %v2078 = vld [vmem:[#allocation3 + $0x18] sm:$0xff]
        %2080 = vrot.lane.b32.xlu0 %v2077, 80
        %v2081 = vpop.permute.xlu0 %2080
        %2082 = vrot.lane.b32.xlu0 %v2077, 16
        %v2083 = vpop.permute.xlu0 %2082
        %v2085 = vsel %vm1153, %v2081, 0
        %v2088 = vsel %vm1153, %v2083, 0
        %2090 = vmatprep.subr.bf16.mxu0 0
        %2091 = vmatpush1.bf16.xpose.msra.mxu0 %v2088
        %2092 = vmatprep.subr.bf16.mxu0 0
        %2093 = vmatpush1.bf16.xpose.msra.mxu0 0
        %2094 = vmatprep.subr.bf16.mxu0 0
        %2095 = vmatpush1.bf16.xpose.msra.mxu0 0
        %2096 = vmatprep.subr.bf16.mxu0 0
        %2097 = vmatpush1.bf16.xpose.msra.mxu0 0
        %2098 = vmatprep.subr.bf16.mxu0 0
        %2099 = vmatpush1.bf16.xpose.msra.mxu0 0
        %2100 = vmatprep.subr.bf16.mxu0 0
        %2101 = vmatpush1.bf16.xpose.msra.mxu0 0
        %2102 = vmatprep.subr.bf16.mxu0 0
        %2103 = vmatpush1.bf16.xpose.msra.mxu0 0
        %2104 = vmatprep.subr.bf16.mxu0 0
        %2105 = vmatpush1.bf16.xpose.msra.mxu0 0
        %2106 = vmatprep.subr.bf16.mxu0 0
        %2107 = vmatpush1.bf16.xpose.msra.mxu0 0
        %2108 = vmatprep.subr.bf16.mxu0 0
        %2109 = vmatpush1.bf16.xpose.msra.mxu0 0
        %2110 = vmatprep.subr.bf16.mxu0 0
        %2111 = vmatpush1.bf16.xpose.msra.mxu0 0
        %2112 = vmatprep.subr.bf16.mxu0 0
        %2113 = vmatpush1.bf16.xpose.msra.mxu0 0
        %2114 = vmatprep.subr.bf16.mxu0 0
        %2115 = vmatpush1.bf16.xpose.msra.mxu0 0
        %2116 = vmatprep.subr.bf16.mxu0 0
        %2117 = vmatpush1.bf16.xpose.msra.mxu0 0
        %2118 = vmatprep.subr.bf16.mxu0 0
        %2119 = vmatpush1.bf16.xpose.msra.mxu0 0
        %2120 = vmatprep.subr.bf16.mxu0 0
        %2121 = vmatpush1.bf16.xpose.msra.mxu0 0
        %2122 = vmatprep.mubr.bf16.mxu0 0
        %2123 = vmatmul.mubr.bf16.gmra.mrb[0].mxu0 %v2085
        %v2124 = vpop.f32.mrb[0].mxu0
        %v2125 = vadd.f32 %v1686, %v2124
        %v2126 = vpop.f32.mrb[0].mxu0
        %v2127 = vpop.f32.mrb[0].mxu0
        %v2128 = vadd.f32 %v1686, %v2127
        %v2129 = vpop.f32.mrb[0].mxu0
        %2130 = vdwg.mxu0
        %v2131 = vsel %vm1153, %v2125, -inf
        %2132 = vmax.xlane.f32.xlu0 %v2131
        %v2133 = vpop.xlane.xlu0 %2132
        %v2134 = vsel %vm1153, %v2128, -inf
        %2135 = vmax.xlane.f32.xlu0 %v2134
        %v2136 = vpop.xlane.xlu0 %2135
        %v2137 = vsub.f32 %v2125, %v2133
        %v2138 = vsub.f32 %v2128, %v2136
        %v2139 = vmul.f32 %v2137, 1.442695
        %v2140 = vpow.pop %v2139
        %v2141 = vmul.f32 %v2138, 1.442695
        %v2142 = vpow.pop %v2141
        %v2143 = vsel %vm1153, %v2140, 0.0
        %2144 = vadd.xlane.f32.xlu0 %v2143
        %v2145 = vpop.xlane.xlu0 %2144
        %v2146 = vsel %vm1153, %v2142, 0.0
        %2147 = vadd.xlane.f32.xlu0 %v2146
        %v2148 = vpop.xlane.xlu0 %2147
        %v2149 = vrcp.pop %v2145
        %v2150 = vrcp.pop %v2148
        %v2151 = vmul.f32 %v2140, %v2149
        %v2152 = vmul.f32 %v2142, %v2150
        %v2153 = vpack.c.bf16 %v2152, %v2151
        %2155 = vrot.lane.b32.xlu0 %v2078, 80
        %v2156 = vpop.permute.xlu0 %2155
        %v2159 = vsel %vm1153, %v2153, 0
        %2161 = vmatprep.subr.bf16.mxu0 0
        %2162 = vmatpush1.bf16.msra.mxu0 %v2156
        %2163 = vmatprep.subr.bf16.mxu0 0
        %2164 = vmatpush1.bf16.msra.mxu0 0
        %2165 = vmatprep.subr.bf16.mxu0 0
        %2166 = vmatpush1.bf16.msra.mxu0 0
        %2167 = vmatprep.subr.bf16.mxu0 0
        %2168 = vmatpush1.bf16.msra.mxu0 0
        %2169 = vmatprep.subr.bf16.mxu0 0
        %2170 = vmatpush1.bf16.msra.mxu0 0
        %2171 = vmatprep.subr.bf16.mxu0 0
        %2172 = vmatpush1.bf16.msra.mxu0 0
        %2173 = vmatprep.subr.bf16.mxu0 0
        %2174 = vmatpush1.bf16.msra.mxu0 0
        %2175 = vmatprep.subr.bf16.mxu0 0
        %2176 = vmatpush1.bf16.msra.mxu0 0
        %2177 = vmatprep.subr.bf16.mxu0 0
        %2178 = vmatpush1.bf16.msra.mxu0 0
        %2179 = vmatprep.subr.bf16.mxu0 0
        %2180 = vmatpush1.bf16.msra.mxu0 0
        %2181 = vmatprep.subr.bf16.mxu0 0
        %2182 = vmatpush1.bf16.msra.mxu0 0
        %2183 = vmatprep.subr.bf16.mxu0 0
        %2184 = vmatpush1.bf16.msra.mxu0 0
        %2185 = vmatprep.subr.bf16.mxu0 0
        %2186 = vmatpush1.bf16.msra.mxu0 0
        %2187 = vmatprep.subr.bf16.mxu0 0
        %2188 = vmatpush1.bf16.msra.mxu0 0
        %2189 = vmatprep.subr.bf16.mxu0 0
        %2190 = vmatpush1.bf16.msra.mxu0 0
        %2191 = vmatprep.subr.bf16.mxu0 0
        %2192 = vmatpush1.bf16.msra.mxu0 0
        %2193 = vmatprep.mubr.bf16.mxu0 0
        %2194 = vmatmul.mubr.bf16.gmra.mrb[0].mxu0 %v2159
        %v2195 = vpop.f32.mrb[0].mxu0
        %v2196 = vadd.f32 0.0, %v2195
        %v2197 = vpop.f32.mrb[0].mxu0
        %v2198 = vpop.f32.mrb[0].mxu0
        %v2199 = vadd.f32 0.0, %v2198
        %v2200 = vpop.f32.mrb[0].mxu0
        %2201 = vdwg.mxu0
        %2204 = vrot.lane.b32.xlu0 %v2196, 48
        %v2205 = vpop.permute.xlu0 %2204
        %2206 = vrot.lane.b32.xlu0 %v2199, 48
        %v2207 = vpop.permute.xlu0 %2206
        %2210 = vst.msk [vmem:[#allocation4 + $0x10] sm:$0xff] %vm1675, %v2205
        %2211 = vst.msk [vmem:[#allocation4 + $0x18] sm:$0xff] %vm1675, %v2207
        %v2212 = vld [vmem:[#allocation4] sm:$0xff]
        %v2213 = vld [vmem:[#allocation4 + $0x8] sm:$0xff]
        %v2214 = vld [vmem:[#allocation4 + $0x10] sm:$0xff]
        %v2215 = vld [vmem:[#allocation4 + $0x18] sm:$0xff]
        %v2216 = vld [vmem:[%s899] sm:$0xf]
        %v2217 = vld [vmem:[%s899 + $0x4] sm:$0xf]
        %v2218 = vld [vmem:[%s899 + $0x8] sm:$0xf]
        %v2219 = vld [vmem:[%s899 + $0xc] sm:$0xf]
        %v2220 = vld [vmem:[%s899 + $0x10] sm:$0xf]
        %v2221 = vld [vmem:[%s899 + $0x14] sm:$0xf]
        %v2222 = vld [vmem:[%s899 + $0x18] sm:$0xf]
        %v2223 = vld [vmem:[%s899 + $0x1c] sm:$0xf]
        %v2224 = vpack.c.bf16 %v2213, %v2212
        %v2225 = vpack.c.bf16 %v2215, %v2214
        %v2226 = vld [vmem:[%s763] sm:$0x1]
        %v2228 = vlaneseq
        %v2229 = vshrl.u32 %v2228, 7
        %v2230 = vsub.s32 0, %v2229
        %v2231 = vrot.slane %v2226, %v2230
        %v2241 = vunpack.c.l.b16 %v2216
        %v2242 = vunpack.c.l.b16 %v2217
        %v2243 = vunpack.c.l.b16 %v2218
        %v2244 = vunpack.c.l.b16 %v2219
        %v2245 = vunpack.c.l.b16 %v2220
        %v2246 = vunpack.c.l.b16 %v2221
        %v2247 = vunpack.c.l.b16 %v2222
        %v2248 = vunpack.c.l.b16 %v2223
        %v2249 = vpack.c.b16 %v2242, %v2241
        %v2250 = vpack.c.b16 %v2244, %v2243
        %v2251 = vpack.c.b16 %v2246, %v2245
        %v2252 = vpack.c.b16 %v2248, %v2247
        %v2258 = vsel %vm1073, %v2224, 0
        %v2261 = vsel %vm1073, %v2225, 0
        %2263 = vmatprep.subr.bf16.mxu0 0
        %2264 = vmatpush1.bf16.msra.mxu0 %v2249
        %2265 = vmatprep.subr.bf16.mxu0 0
        %2266 = vmatpush1.bf16.msra.mxu0 %v2250
        %2267 = vmatprep.subr.bf16.mxu0 0
        %2268 = vmatpush1.bf16.msra.mxu0 %v2251
        %2269 = vmatprep.subr.bf16.mxu0 0
        %2270 = vmatpush1.bf16.msra.mxu0 %v2252
        %2271 = vmatprep.subr.bf16.mxu0 0
        %2272 = vmatpush1.bf16.msra.mxu0 0
        %2273 = vmatprep.subr.bf16.mxu0 0
        %2274 = vmatpush1.bf16.msra.mxu0 0
        %2275 = vmatprep.subr.bf16.mxu0 0
        %2276 = vmatpush1.bf16.msra.mxu0 0
        %2277 = vmatprep.subr.bf16.mxu0 0
        %2278 = vmatpush1.bf16.msra.mxu0 0
        %2279 = vmatprep.subr.bf16.mxu0 0
        %2280 = vmatpush1.bf16.msra.mxu0 0
        %2281 = vmatprep.subr.bf16.mxu0 0
        %2282 = vmatpush1.bf16.msra.mxu0 0
        %2283 = vmatprep.subr.bf16.mxu0 0
        %2284 = vmatpush1.bf16.msra.mxu0 0
        %2285 = vmatprep.subr.bf16.mxu0 0
        %2286 = vmatpush1.bf16.msra.mxu0 0
        %2287 = vmatprep.subr.bf16.mxu0 0
        %2288 = vmatpush1.bf16.msra.mxu0 0
        %2289 = vmatprep.subr.bf16.mxu0 0
        %2290 = vmatpush1.bf16.msra.mxu0 0
        %2291 = vmatprep.subr.bf16.mxu0 0
        %2292 = vmatpush1.bf16.msra.mxu0 0
        %2293 = vmatprep.subr.bf16.mxu0 0
        %2294 = vmatpush1.bf16.msra.mxu0 0
        %2295 = vmatprep.mubr.bf16.mxu0 0
        %2296 = vmatmul.mubr.bf16.gmra.mrb[0].mxu0 %v2258
        %v2297 = vpop.f32.mrb[0].mxu0
        %v2298 = vadd.f32 %v2231, %v2297
        %v2299 = vpop.f32.mrb[0].mxu0
        %v2300 = vpop.f32.mrb[0].mxu0
        %v2301 = vadd.f32 %v2231, %v2300
        %v2302 = vpop.f32.mrb[0].mxu0
        %2303 = vmatprep.mubr.bf16.mxu0 0
        %2304 = vmatmul.mubr.bf16.gmra.mrb[0].mxu0 %v2261
        %v2305 = vpop.f32.mrb[0].mxu0
        %v2306 = vadd.f32 %v2231, %v2305
        %v2307 = vpop.f32.mrb[0].mxu0
        %v2308 = vpop.f32.mrb[0].mxu0
        %v2309 = vadd.f32 %v2231, %v2308
        %v2310 = vpop.f32.mrb[0].mxu0
        %2311 = vdwg.mxu0
        %v2312 = vadd.f32 %v2298, %v1007
        %v2313 = vadd.f32 %v2301, %v1008
        %v2314 = vadd.f32 %v2306, %v1009
        %v2315 = vadd.f32 %v2309, %v1010
        %v2316 = vld [vmem:[%s771] sm:$0x1]
        %v2317 = vld [vmem:[%s779] sm:$0x1]
        %v2318 = vsel %vm1073, %v2312, 0.0
        %2319 = vadd.xlane.f32.xlu0 %v2318
        %v2320 = vpop.xlane.xlu0 %2319
        %v2321 = vsel %vm1073, %v2313, 0.0
        %2322 = vadd.xlane.f32.xlu0 %v2321
        %v2323 = vpop.xlane.xlu0 %2322
        %v2324 = vsel %vm1073, %v2314, 0.0
        %2325 = vadd.xlane.f32.xlu0 %v2324
        %v2326 = vpop.xlane.xlu0 %2325
        %v2327 = vsel %vm1073, %v2315, 0.0
        %2328 = vadd.xlane.f32.xlu0 %v2327
        %v2329 = vpop.xlane.xlu0 %2328
        %v2330 = vrcp.pop 64.0
        %v2331 = vmul.f32 %v2320, %v2330
        %v2332 = vmul.f32 %v2323, %v2330
        %v2333 = vmul.f32 %v2326, %v2330
        %v2334 = vmul.f32 %v2329, %v2330
        %v2335 = vsub.f32 %v2312, %v2331
        %v2336 = vsub.f32 %v2313, %v2332
        %v2337 = vsub.f32 %v2314, %v2333
        %v2338 = vsub.f32 %v2315, %v2334
        %v2339 = vmul.f32 %v2335, %v2335
        %v2340 = vmul.f32 %v2336, %v2336
        %v2341 = vmul.f32 %v2337, %v2337
        %v2342 = vmul.f32 %v2338, %v2338
        %v2343 = vsel %vm1073, %v2339, 0.0
        %2344 = vadd.xlane.f32.xlu0 %v2343
        %v2345 = vpop.xlane.xlu0 %2344
        %v2346 = vsel %vm1073, %v2340, 0.0
        %2347 = vadd.xlane.f32.xlu0 %v2346
        %v2348 = vpop.xlane.xlu0 %2347
        %v2349 = vsel %vm1073, %v2341, 0.0
        %2350 = vadd.xlane.f32.xlu0 %v2349
        %v2351 = vpop.xlane.xlu0 %2350
        %v2352 = vsel %vm1073, %v2342, 0.0
        %2353 = vadd.xlane.f32.xlu0 %v2352
        %v2354 = vpop.xlane.xlu0 %2353
        %v2355 = vmul.f32 %v2345, %v2330
        %v2356 = vmul.f32 %v2348, %v2330
        %v2357 = vmul.f32 %v2351, %v2330
        %v2358 = vmul.f32 %v2354, %v2330
        %v2359 = vadd.f32 %v2355, 1e-12
        %v2360 = vadd.f32 %v2356, 1e-12
        %v2361 = vadd.f32 %v2357, 1e-12
        %v2362 = vadd.f32 %v2358, 1e-12
        %v2363 = vrsqrt.pop %v2359
        %v2364 = vrsqrt.pop %v2360
        %v2365 = vrsqrt.pop %v2361
        %v2366 = vrsqrt.pop %v2362
        %v2367 = vmul.f32 %v2335, %v2363
        %v2368 = vmul.f32 %v2336, %v2364
        %v2369 = vmul.f32 %v2337, %v2365
        %v2370 = vmul.f32 %v2338, %v2366
        %v2372 = vlaneseq
        %v2373 = vshrl.u32 %v2372, 7
        %v2374 = vsub.s32 0, %v2373
        %v2375 = vrot.slane %v2316, %v2374
        %v2377 = vmul.f32 %v2367, %v2375
        %v2378 = vmul.f32 %v2368, %v2375
        %v2379 = vmul.f32 %v2369, %v2375
        %v2380 = vmul.f32 %v2370, %v2375
        %v2382 = vlaneseq
        %v2383 = vshrl.u32 %v2382, 7
        %v2384 = vsub.s32 0, %v2383
        %v2385 = vrot.slane %v2317, %v2384
        %v2387 = vadd.f32 %v2377, %v2385
        %v2388 = vadd.f32 %v2378, %v2385
        %v2389 = vadd.f32 %v2379, %v2385
        %v2390 = vadd.f32 %v2380, %v2385
        %v2391 = vld [vmem:[%s788] sm:$0xf]
        %v2392 = vld [vmem:[%s788 + $0x4] sm:$0xf]
        %v2393 = vld [vmem:[%s788 + $0x8] sm:$0xf]
        %v2394 = vld [vmem:[%s788 + $0xc] sm:$0xf]
        %v2395 = vld [vmem:[%s788 + $0x10] sm:$0xf]
        %v2396 = vld [vmem:[%s788 + $0x14] sm:$0xf]
        %v2397 = vld [vmem:[%s788 + $0x18] sm:$0xf]
        %v2398 = vld [vmem:[%s788 + $0x1c] sm:$0xf]
        %v2399 = vpack.c.bf16 %v2388, %v2387
        %v2400 = vpack.c.bf16 %v2390, %v2389
        %v2401 = vld [vmem:[%s902] sm:$0x1]
        %v2403 = vlaneseq
        %v2404 = vshrl.u32 %v2403, 7
        %v2405 = vsub.s32 0, %v2404
        %v2406 = vrot.slane %v2401, %v2405
        %v2416 = vunpack.c.l.b16 %v2391
        %v2417 = vunpack.c.l.b16 %v2392
        %v2418 = vunpack.c.l.b16 %v2393
        %v2419 = vunpack.c.l.b16 %v2394
        %v2420 = vunpack.c.l.b16 %v2395
        %v2421 = vunpack.c.l.b16 %v2396
        %v2422 = vunpack.c.l.b16 %v2397
        %v2423 = vunpack.c.l.b16 %v2398
        %v2424 = vpack.c.b16 %v2417, %v2416
        %v2425 = vpack.c.b16 %v2419, %v2418
        %v2426 = vpack.c.b16 %v2421, %v2420
        %v2427 = vpack.c.b16 %v2423, %v2422
        %v2433 = vsel %vm1073, %v2399, 0
        %v2436 = vsel %vm1073, %v2400, 0
        %2438 = vmatprep.subr.bf16.mxu0 0
        %2439 = vmatpush1.bf16.msra.mxu0 %v2424
        %2440 = vmatprep.subr.bf16.mxu0 0
        %2441 = vmatpush1.bf16.msra.mxu0 %v2425
        %2442 = vmatprep.subr.bf16.mxu0 0
        %2443 = vmatpush1.bf16.msra.mxu0 %v2426
        %2444 = vmatprep.subr.bf16.mxu0 0
        %2445 = vmatpush1.bf16.msra.mxu0 %v2427
        %2446 = vmatprep.subr.bf16.mxu0 0
        %2447 = vmatpush1.bf16.msra.mxu0 0
        %2448 = vmatprep.subr.bf16.mxu0 0
        %2449 = vmatpush1.bf16.msra.mxu0 0
        %2450 = vmatprep.subr.bf16.mxu0 0
        %2451 = vmatpush1.bf16.msra.mxu0 0
        %2452 = vmatprep.subr.bf16.mxu0 0
        %2453 = vmatpush1.bf16.msra.mxu0 0
        %2454 = vmatprep.subr.bf16.mxu0 0
        %2455 = vmatpush1.bf16.msra.mxu0 0
        %2456 = vmatprep.subr.bf16.mxu0 0
        %2457 = vmatpush1.bf16.msra.mxu0 0
        %2458 = vmatprep.subr.bf16.mxu0 0
        %2459 = vmatpush1.bf16.msra.mxu0 0
        %2460 = vmatprep.subr.bf16.mxu0 0
        %2461 = vmatpush1.bf16.msra.mxu0 0
        %2462 = vmatprep.subr.bf16.mxu0 0
        %2463 = vmatpush1.bf16.msra.mxu0 0
        %2464 = vmatprep.subr.bf16.mxu0 0
        %2465 = vmatpush1.bf16.msra.mxu0 0
        %2466 = vmatprep.subr.bf16.mxu0 0
        %2467 = vmatpush1.bf16.msra.mxu0 0
        %2468 = vmatprep.subr.bf16.mxu0 0
        %2469 = vmatpush1.bf16.msra.mxu0 0
        %2470 = vmatprep.mubr.bf16.mxu0 0
        %2471 = vmatmul.mubr.bf16.gmra.mrb[0].mxu0 %v2433
        %v2472 = vpop.f32.mrb[0].mxu0
        %v2473 = vadd.f32 %v2406, %v2472
        %v2474 = vpop.f32.mrb[0].mxu0
        %v2475 = vpop.f32.mrb[0].mxu0
        %v2476 = vadd.f32 %v2406, %v2475
        %v2477 = vpop.f32.mrb[0].mxu0
        %2478 = vmatprep.mubr.bf16.mxu0 0
        %2479 = vmatmul.mubr.bf16.gmra.mrb[0].mxu0 %v2436
        %v2480 = vpop.f32.mrb[0].mxu0
        %v2481 = vadd.f32 %v2406, %v2480
        %v2482 = vpop.f32.mrb[0].mxu0
        %v2483 = vpop.f32.mrb[0].mxu0
        %v2484 = vadd.f32 %v2406, %v2483
        %v2485 = vpop.f32.mrb[0].mxu0
        %2486 = vdwg.mxu0
        %v2487 = vmul.f32 %v2473, %v2473
        %v2488 = vmul.f32 %v2476, %v2476
        %v2489 = vmul.f32 %v2481, %v2481
        %v2490 = vmul.f32 %v2484, %v2484
        %v2491 = vmul.f32 %v2473, %v2487
        %v2492 = vmul.f32 %v2476, %v2488
        %v2493 = vmul.f32 %v2481, %v2489
        %v2494 = vmul.f32 %v2484, %v2490
        %v2495 = vmul.f32 %v2491, 0.044715
        %v2496 = vmul.f32 %v2492, 0.044715
        %v2497 = vmul.f32 %v2493, 0.044715
        %v2498 = vmul.f32 %v2494, 0.044715
        %v2499 = vadd.f32 %v2473, %v2495
        %v2500 = vadd.f32 %v2476, %v2496
        %v2501 = vadd.f32 %v2481, %v2497
        %v2502 = vadd.f32 %v2484, %v2498
        %v2503 = vmul.f32 %v2499, 0.7978846
        %v2504 = vmul.f32 %v2500, 0.7978846
        %v2505 = vmul.f32 %v2501, 0.7978846
        %v2506 = vmul.f32 %v2502, 0.7978846
        %v2507 = vtanh.pop %v2503
        %v2508 = vtanh.pop %v2504
        %v2509 = vtanh.pop %v2505
        %v2510 = vtanh.pop %v2506
        %v2511 = vadd.f32 %v2507, 1.0
        %v2512 = vadd.f32 %v2508, 1.0
        %v2513 = vadd.f32 %v2509, 1.0
        %v2514 = vadd.f32 %v2510, 1.0
        %v2515 = vmul.f32 %v2511, 0.5
        %v2516 = vmul.f32 %v2512, 0.5
        %v2517 = vmul.f32 %v2513, 0.5
        %v2518 = vmul.f32 %v2514, 0.5
        %v2519 = vmul.f32 %v2473, %v2515
        %v2520 = vmul.f32 %v2476, %v2516
        %v2521 = vmul.f32 %v2481, %v2517
        %v2522 = vmul.f32 %v2484, %v2518
        %v2523 = vld [vmem:[%s907] sm:$0xf]
        %v2524 = vld [vmem:[%s907 + $0x4] sm:$0xf]
        %v2525 = vld [vmem:[%s907 + $0x8] sm:$0xf]
        %v2526 = vld [vmem:[%s907 + $0xc] sm:$0xf]
        %v2527 = vld [vmem:[%s907 + $0x10] sm:$0xf]
        %v2528 = vld [vmem:[%s907 + $0x14] sm:$0xf]
        %v2529 = vld [vmem:[%s907 + $0x18] sm:$0xf]
        %v2530 = vld [vmem:[%s907 + $0x1c] sm:$0xf]
        %v2531 = vld [vmem:[%s907 + $0x20] sm:$0xf]
        %v2532 = vld [vmem:[%s907 + $0x24] sm:$0xf]
        %v2533 = vld [vmem:[%s907 + $0x28] sm:$0xf]
        %v2534 = vld [vmem:[%s907 + $0x2c] sm:$0xf]
        %v2535 = vld [vmem:[%s907 + $0x30] sm:$0xf]
        %v2536 = vld [vmem:[%s907 + $0x34] sm:$0xf]
        %v2537 = vld [vmem:[%s907 + $0x38] sm:$0xf]
        %v2538 = vld [vmem:[%s907 + $0x3c] sm:$0xf]
        %v2539 = vpack.c.bf16 %v2520, %v2519
        %v2540 = vpack.c.bf16 %v2522, %v2521
        %v2541 = vld [vmem:[%s910] sm:$0x1]
        %v2543 = vlaneseq
        %v2544 = vshrl.u32 %v2543, 7
        %v2545 = vsub.s32 0, %v2544
        %v2546 = vrot.slane %v2541, %v2545
        %v2564 = vunpack.c.l.b16 %v2523
        %v2565 = vunpack.c.l.b16 %v2524
        %v2566 = vunpack.c.l.b16 %v2525
        %v2567 = vunpack.c.l.b16 %v2526
        %v2568 = vunpack.c.l.b16 %v2527
        %v2569 = vunpack.c.l.b16 %v2528
        %v2570 = vunpack.c.l.b16 %v2529
        %v2571 = vunpack.c.l.b16 %v2530
        %v2572 = vunpack.c.l.b16 %v2531
        %v2573 = vunpack.c.l.b16 %v2532
        %v2574 = vunpack.c.l.b16 %v2533
        %v2575 = vunpack.c.l.b16 %v2534
        %v2576 = vunpack.c.l.b16 %v2535
        %v2577 = vunpack.c.l.b16 %v2536
        %v2578 = vunpack.c.l.b16 %v2537
        %v2579 = vunpack.c.l.b16 %v2538
        %v2580 = vpack.c.b16 %v2565, %v2564
        %v2581 = vpack.c.b16 %v2567, %v2566
        %v2582 = vpack.c.b16 %v2569, %v2568
        %v2583 = vpack.c.b16 %v2571, %v2570
        %v2584 = vpack.c.b16 %v2573, %v2572
        %v2585 = vpack.c.b16 %v2575, %v2574
        %v2586 = vpack.c.b16 %v2577, %v2576
        %v2587 = vpack.c.b16 %v2579, %v2578
        %2596 = vmatprep.subr.bf16.mxu0 0
        %2597 = vmatpush1.bf16.msra.mxu0 %v2580
        %2598 = vmatprep.subr.bf16.mxu0 0
        %2599 = vmatpush1.bf16.msra.mxu0 %v2581
        %2600 = vmatprep.subr.bf16.mxu0 0
        %2601 = vmatpush1.bf16.msra.mxu0 %v2582
        %2602 = vmatprep.subr.bf16.mxu0 0
        %2603 = vmatpush1.bf16.msra.mxu0 %v2583
        %2604 = vmatprep.subr.bf16.mxu0 0
        %2605 = vmatpush1.bf16.msra.mxu0 %v2584
        %2606 = vmatprep.subr.bf16.mxu0 0
        %2607 = vmatpush1.bf16.msra.mxu0 %v2585
        %2608 = vmatprep.subr.bf16.mxu0 0
        %2609 = vmatpush1.bf16.msra.mxu0 %v2586
        %2610 = vmatprep.subr.bf16.mxu0 0
        %2611 = vmatpush1.bf16.msra.mxu0 %v2587
        %2612 = vmatprep.subr.bf16.mxu0 0
        %2613 = vmatpush1.bf16.msra.mxu0 0
        %2614 = vmatprep.subr.bf16.mxu0 0
        %2615 = vmatpush1.bf16.msra.mxu0 0
        %2616 = vmatprep.subr.bf16.mxu0 0
        %2617 = vmatpush1.bf16.msra.mxu0 0
        %2618 = vmatprep.subr.bf16.mxu0 0
        %2619 = vmatpush1.bf16.msra.mxu0 0
        %2620 = vmatprep.subr.bf16.mxu0 0
        %2621 = vmatpush1.bf16.msra.mxu0 0
        %2622 = vmatprep.subr.bf16.mxu0 0
        %2623 = vmatpush1.bf16.msra.mxu0 0
        %2624 = vmatprep.subr.bf16.mxu0 0
        %2625 = vmatpush1.bf16.msra.mxu0 0
        %2626 = vmatprep.subr.bf16.mxu0 0
        %2627 = vmatpush1.bf16.msra.mxu0 0
        %2628 = vmatprep.mubr.bf16.mxu0 0
        %2629 = vmatmul.mubr.bf16.gmra.mrb[0].mxu0 %v2539
        %v2630 = vpop.f32.mrb[0].mxu0
        %v2631 = vadd.f32 %v2546, %v2630
        %v2632 = vpop.f32.mrb[0].mxu0
        %v2633 = vpop.f32.mrb[0].mxu0
        %v2634 = vadd.f32 %v2546, %v2633
        %v2635 = vpop.f32.mrb[0].mxu0
        %2636 = vmatprep.mubr.bf16.mxu0 0
        %2637 = vmatmul.mubr.bf16.gmra.mrb[0].mxu0 %v2540
        %v2638 = vpop.f32.mrb[0].mxu0
        %v2639 = vadd.f32 %v2546, %v2638
        %v2640 = vpop.f32.mrb[0].mxu0
        %v2641 = vpop.f32.mrb[0].mxu0
        %v2642 = vadd.f32 %v2546, %v2641
        %v2643 = vpop.f32.mrb[0].mxu0
        %2644 = vdwg.mxu0
        %v2645 = vadd.f32 %v2631, %v2387
        %v2646 = vadd.f32 %v2634, %v2388
        %v2647 = vadd.f32 %v2639, %v2389
        %v2648 = vadd.f32 %v2642, %v2390
        %v2649 = vld [vmem:[%s913] sm:$0x1]
        %v2650 = vld [vmem:[%s916] sm:$0x1]
        %v2651 = vsel %vm1073, %v2645, 0.0
        %2652 = vadd.xlane.f32.xlu0 %v2651
        %v2653 = vpop.xlane.xlu0 %2652
        %v2654 = vsel %vm1073, %v2646, 0.0
        %2655 = vadd.xlane.f32.xlu0 %v2654
        %v2656 = vpop.xlane.xlu0 %2655
        %v2657 = vsel %vm1073, %v2647, 0.0
        %2658 = vadd.xlane.f32.xlu0 %v2657
        %v2659 = vpop.xlane.xlu0 %2658
        %v2660 = vsel %vm1073, %v2648, 0.0
        %2661 = vadd.xlane.f32.xlu0 %v2660
        %v2662 = vpop.xlane.xlu0 %2661
        %v2663 = vmul.f32 %v2653, %v2330
        %v2664 = vmul.f32 %v2656, %v2330
        %v2665 = vmul.f32 %v2659, %v2330
        %v2666 = vmul.f32 %v2662, %v2330
        %v2667 = vsub.f32 %v2645, %v2663
        %v2668 = vsub.f32 %v2646, %v2664
        %v2669 = vsub.f32 %v2647, %v2665
        %v2670 = vsub.f32 %v2648, %v2666
        %v2671 = vmul.f32 %v2667, %v2667
        %v2672 = vmul.f32 %v2668, %v2668
        %v2673 = vmul.f32 %v2669, %v2669
        %v2674 = vmul.f32 %v2670, %v2670
        %v2675 = vsel %vm1073, %v2671, 0.0
        %2676 = vadd.xlane.f32.xlu0 %v2675
        %v2677 = vpop.xlane.xlu0 %2676
        %v2678 = vsel %vm1073, %v2672, 0.0
        %2679 = vadd.xlane.f32.xlu0 %v2678
        %v2680 = vpop.xlane.xlu0 %2679
        %v2681 = vsel %vm1073, %v2673, 0.0
        %2682 = vadd.xlane.f32.xlu0 %v2681
        %v2683 = vpop.xlane.xlu0 %2682
        %v2684 = vsel %vm1073, %v2674, 0.0
        %2685 = vadd.xlane.f32.xlu0 %v2684
        %v2686 = vpop.xlane.xlu0 %2685
        %v2687 = vmul.f32 %v2677, %v2330
        %v2688 = vmul.f32 %v2680, %v2330
        %v2689 = vmul.f32 %v2683, %v2330
        %v2690 = vmul.f32 %v2686, %v2330
        %v2691 = vadd.f32 %v2687, 1e-12
        %v2692 = vadd.f32 %v2688, 1e-12
        %v2693 = vadd.f32 %v2689, 1e-12
        %v2694 = vadd.f32 %v2690, 1e-12
        %v2695 = vrsqrt.pop %v2691
        %v2696 = vrsqrt.pop %v2692
        %v2697 = vrsqrt.pop %v2693
        %v2698 = vrsqrt.pop %v2694
        %v2699 = vmul.f32 %v2667, %v2695
        %v2700 = vmul.f32 %v2668, %v2696
        %v2701 = vmul.f32 %v2669, %v2697
        %v2702 = vmul.f32 %v2670, %v2698
        %v2704 = vlaneseq
        %v2705 = vshrl.u32 %v2704, 7
        %v2706 = vsub.s32 0, %v2705
        %v2707 = vrot.slane %v2649, %v2706
        %v2709 = vmul.f32 %v2699, %v2707
        %v2710 = vmul.f32 %v2700, %v2707
        %v2711 = vmul.f32 %v2701, %v2707
        %v2712 = vmul.f32 %v2702, %v2707
        %v2714 = vlaneseq
        %v2715 = vshrl.u32 %v2714, 7
        %v2716 = vsub.s32 0, %v2715
        %v2717 = vrot.slane %v2650, %v2716
        %v2719 = vadd.f32 %v2709, %v2717
        %v2720 = vadd.f32 %v2710, %v2717
        %v2721 = vadd.f32 %v2711, %v2717
        %v2722 = vadd.f32 %v2712, %v2717
        %2723 = vst.msk [vmem:[#allocation2] sm:$0xff] %vm1073, %v2719
        %2724 = vst.msk [vmem:[#allocation2 + $0x8] sm:$0xff] %vm1073, %v2720
        %2725 = vst.msk [vmem:[#allocation2 + $0x10] sm:$0xff] %vm1073, %v2721
        %2726 = vst.msk [vmem:[#allocation2 + $0x18] sm:$0xff] %vm1073, %v2722
        %p2727 = scmp.eq.s32.totalorder %s46, 1
        // Predicated region
        $region129: #{tpu_custom_call.1} parent=91 // pred_check
          %p2728 = pneg %p2727
        $region130: #{tpu_custom_call.1} parent=91 // pred_check_branch
          %2730 = sbr.rel (%p2728) target = $region132
        $region131: #{tpu_custom_call.1} parent=91 // pred_region
          %v2731 = vld [vmem:[%s16] sm:$0xf]
          %v2732 = vld [vmem:[%s16 + $0x4] sm:$0xf]
          %v2733 = vld [vmem:[%s16 + $0x8] sm:$0xf]
          %v2734 = vld [vmem:[%s16 + $0xc] sm:$0xf]
          %v2735 = vld [vmem:[%s16 + $0x10] sm:$0xf]
          %v2736 = vld [vmem:[%s16 + $0x14] sm:$0xf]
          %v2737 = vld [vmem:[%s16 + $0x18] sm:$0xf]
          %v2738 = vld [vmem:[%s16 + $0x1c] sm:$0xf]
          %v2739 = vpack.c.bf16 %v2720, %v2719
          %v2740 = vpack.c.bf16 %v2722, %v2721
          %v2741 = vld [vmem:[%s17] sm:$0x1]
          %v2743 = vlaneseq
          %v2744 = vshrl.u32 %v2743, 7
          %v2745 = vsub.s32 0, %v2744
          %v2746 = vrot.slane %v2741, %v2745
          %v2756 = vunpack.c.l.b16 %v2731
          %v2757 = vunpack.c.l.b16 %v2732
          %v2758 = vunpack.c.l.b16 %v2733
          %v2759 = vunpack.c.l.b16 %v2734
          %v2760 = vunpack.c.l.b16 %v2735
          %v2761 = vunpack.c.l.b16 %v2736
          %v2762 = vunpack.c.l.b16 %v2737
          %v2763 = vunpack.c.l.b16 %v2738
          %v2764 = vpack.c.b16 %v2757, %v2756
          %v2765 = vpack.c.b16 %v2759, %v2758
          %v2766 = vpack.c.b16 %v2761, %v2760
          %v2767 = vpack.c.b16 %v2763, %v2762
          %v2773 = vsel %vm1073, %v2739, 0
          %v2776 = vsel %vm1073, %v2740, 0
          %2778 = vmatprep.subr.bf16.mxu0 0
          %2779 = vmatpush1.bf16.msra.mxu0 %v2764
          %2780 = vmatprep.subr.bf16.mxu0 0
          %2781 = vmatpush1.bf16.msra.mxu0 %v2765
          %2782 = vmatprep.subr.bf16.mxu0 0
          %2783 = vmatpush1.bf16.msra.mxu0 %v2766
          %2784 = vmatprep.subr.bf16.mxu0 0
          %2785 = vmatpush1.bf16.msra.mxu0 %v2767
          %2786 = vmatprep.subr.bf16.mxu0 0
          %2787 = vmatpush1.bf16.msra.mxu0 0
          %2788 = vmatprep.subr.bf16.mxu0 0
          %2789 = vmatpush1.bf16.msra.mxu0 0
          %2790 = vmatprep.subr.bf16.mxu0 0
          %2791 = vmatpush1.bf16.msra.mxu0 0
          %2792 = vmatprep.subr.bf16.mxu0 0
          %2793 = vmatpush1.bf16.msra.mxu0 0
          %2794 = vmatprep.subr.bf16.mxu0 0
          %2795 = vmatpush1.bf16.msra.mxu0 0
          %2796 = vmatprep.subr.bf16.mxu0 0
          %2797 = vmatpush1.bf16.msra.mxu0 0
          %2798 = vmatprep.subr.bf16.mxu0 0
          %2799 = vmatpush1.bf16.msra.mxu0 0
          %2800 = vmatprep.subr.bf16.mxu0 0
          %2801 = vmatpush1.bf16.msra.mxu0 0
          %2802 = vmatprep.subr.bf16.mxu0 0
          %2803 = vmatpush1.bf16.msra.mxu0 0
          %2804 = vmatprep.subr.bf16.mxu0 0
          %2805 = vmatpush1.bf16.msra.mxu0 0
          %2806 = vmatprep.subr.bf16.mxu0 0
          %2807 = vmatpush1.bf16.msra.mxu0 0
          %2808 = vmatprep.subr.bf16.mxu0 0
          %2809 = vmatpush1.bf16.msra.mxu0 0
          %2810 = vmatprep.mubr.bf16.mxu0 0
          %2811 = vmatmul.mubr.bf16.gmra.mrb[0].mxu0 %v2773
          %v2812 = vpop.f32.mrb[0].mxu0
          %v2813 = vadd.f32 %v2746, %v2812
          %v2814 = vpop.f32.mrb[0].mxu0
          %v2815 = vpop.f32.mrb[0].mxu0
          %v2816 = vadd.f32 %v2746, %v2815
          %v2817 = vpop.f32.mrb[0].mxu0
          %2818 = vmatprep.mubr.bf16.mxu0 0
          %2819 = vmatmul.mubr.bf16.gmra.mrb[0].mxu0 %v2776
          %v2820 = vpop.f32.mrb[0].mxu0
          %v2821 = vadd.f32 %v2746, %v2820
          %v2822 = vpop.f32.mrb[0].mxu0
          %v2823 = vpop.f32.mrb[0].mxu0
          %v2824 = vadd.f32 %v2746, %v2823
          %v2825 = vpop.f32.mrb[0].mxu0
          %2826 = vdwg.mxu0
          %2827 = vst [vmem:[#allocation19] sm:$0xff] %v2813
          %2828 = vst [vmem:[#allocation19 + $0x8] sm:$0xff] %v2816
          %2829 = vst [vmem:[#allocation19 + $0x10] sm:$0xff] %v2821
          %2830 = vst [vmem:[#allocation19 + $0x18] sm:$0xff] %v2824
        $region132: #{tpu_custom_call.1} parent=91 // pred_fallthru
          _
        // Predicated region
        $region133: #{tpu_custom_call.1} parent=91 // pred_check
          %p2831 = pneg %p519
        $region134: #{tpu_custom_call.1} parent=91 // pred_check_branch
          %2833 = sbr.rel (%p2831) target = $region136
        $region135: #{tpu_custom_call.1} parent=91 // pred_region
          %s2834 = smul.u32 4, %s45
          %s2836 = ssub.s32 512, 512
          %2837 = vsyncadd [#allocation7], %s2836
          %s2838 = smul.addr %s2834, 128
          %s2839 = scalar_lea.hbm %s18, %s2838
          %s2840 = sshll.u32 [#allocation19], 4
          %s2841 = int_to_ptr.vmem [resolvable:$true] %s2840
          %2846 = dma.vmem_to_hbm [thread:$0]  %s2841, 512, %s2839, [#allocation7], 128, 128, 8
        $region136: #{tpu_custom_call.1} parent=91 // pred_fallthru
          _
        // Predicated region
        $region137: #{tpu_custom_call.1} parent=91 // pred_check
          %p2847 = pneg %p519
        $region138: #{tpu_custom_call.1} parent=91 // pred_check_branch
          %2849 = sbr.rel (%p2847) target = $region140
        $region139: #{tpu_custom_call.1} parent=91 // pred_region
          %2850 = dma.done [#allocation7], 512
        $region140: #{tpu_custom_call.1} parent=91 // pred_fallthru
          _
      $region92: #{tpu_custom_call.1} parent=5 // pred_fallthru
        _
      %p2851 = scmp.le.s32.totalorder 2, %s36
      // Predicated region
      $region141: #{tpu_custom_call.1} parent=5 // pred_check
        %p2852 = pneg %p2851
      $region142: #{tpu_custom_call.1} parent=5 // pred_check_branch
        %2854 = sbr.rel (%p2852) target = $region144
      $region143: #{tpu_custom_call.1} parent=5 // pred_region
        %s2855 = ssub.s32 %s36, 2
      $region144: #{tpu_custom_call.1} parent=5 // pred_fallthru
        _
    $region6: #{tpu_custom_call.1} parent=1 // loop_footer
      %s40 = sadd.s32 1, %s36
    $region7: #{tpu_custom_call.1} parent=1 // loop_footer_branch
      %35 = sbr.rel target = $region3
    $region8: #{tpu_custom_call.1} parent=1 // loop_exit
      _
    %2856 = vsyncpa [#allocation6], 1
    %s2857 = scalar_lea.sflag [#allocation6], 1
    %2858 = vsyncpa %s2857, 1
    %2859 = vsyncpa [#allocation9], 1
    %2860 = vsyncpa [#allocation12], 1
    %s2861 = scalar_lea.sflag [#allocation12], 1
    %2862 = vsyncpa %s2861, 1
    %2863 = vsyncpa [#allocation15], 1
    %s2864 = scalar_lea.sflag [#allocation15], 1
    %2865 = vsyncpa %s2864, 1
    %2866 = vsyncpa [#allocation18], 1
    %s2867 = scalar_lea.sflag [#allocation18], 1
    %2868 = vsyncpa %s2867, 1
    %2869 = vsyncpa [#allocation7], 1
    %s2870 = scalar_lea.sflag [#allocation7], 1
    %2871 = vsyncpa %s2870, 1

</llo_original>
